<compile_context>
chip_gen: v5e
topology: v5e:2x2
jax: 0.10.0
libtpu: 0.0.40
codegen_flags: <defaults>
</compile_context>

<pallas_src>
import functools
import math

import jax
import jax.numpy as jnp
import numpy as np
from jax.experimental import pallas as pl
from jax.experimental.pallas import tpu as pltpu


_TAPS = [(dy, dx) for dy in (-1, 0, 1) for dx in (-1, 0, 1)]   # t = (dy+1)*3 + (dx+1)


def _leaky_relu(x, slope=0.2):
    return jnp.where(x >= 0, x, slope * x)


def _pfrb_kernel(nc, bf, H, W, L, Hh,
                 x_hbm, colv_ref, rowv_ref, w0_ref, b0_ref, w1_ref, b1_ref,
                 w2b_ref, w2x_ref, b2_ref, out_ref,
                 xb, x1_all, cols_b, cols_o, sem):
    """One (batch, strip) step.  See module docstring for the layout / halo scheme."""
    f32 = jnp.float32
    cdt = xb.dtype
    B = L + 2 * Hh            # strip buffer length (lanes), incl. halo on both sides
    ph = Hh // W              # zero rows added host-side on each vertical frame edge
    b = pl.program_id(0)
    s = pl.program_id(1)

    # ---- kick off the strip DMA (input stays in HBM; halo is part of the contiguous slice) ----
    src = x_hbm.at[b, :, pl.ds(pl.multiple_of(s * L, 128), B)]
    cp = pltpu.make_async_copy(src, xb, sem)
    cp.start()

    # ---- out-of-frame tap masks from tiny coordinate vectors (overlapped with the DMA) --------
    col_b = colv_ref[...]                                     # (1, B)  frame column of each lane
    col_o = colv_ref[:, Hh:Hh + L]                            # (1, L)  aligned output-lane slice
    row_o = rowv_ref[:, Hh:Hh + L] + (s * (L // W) - ph)      # (1, L)  global frame row

    def col_mask(cv, dx):
        return ((cv + dx >= 0) & (cv + dx < W)).astype(cdt)

    def row_mask(rv, dy):
        return ((rv + dy >= 0) & (rv + dy < H)).astype(cdt)

    # stage 1 reads the zero-row-padded x: only the dx (column) wraparound needs masking
    m1 = [None if dx == 0 else col_mask(col_b, dx) for (dy, dx) in _TAPS]
    # stage 2 reads x1/base which are NOT zero outside the frame: mask rows and columns
    m2 = []
    for (dy, dx) in _TAPS:
        m = None
        if dx != 0:
            m = col_mask(col_o, dx)
        if dy != 0:
            rm = row_mask(row_o, dy)
            m = rm if m is None else m * rm
        m2.append(m)

    def fill_cols(dst, src_img, masks, lo, width):
        """dst[t*bf:(t+1)*bf, :] = tap-t shifted (and masked) view of src_img (bf, B)."""
        for t, (dy, dx) in enumerate(_TAPS):
            off = dy * W + dx
            v = src_img if off == 0 else jnp.roll(src_img, -off, axis=1)
            if width != B:
                v = v[:, lo:lo + width]                       # 128-aligned static slice
            if masks[t] is not None:
                v = v * masks[t]
            dst[t * bf:(t + 1) * bf, :] = v

    cp.wait()

    # ---- stage 1: per-branch 3x3 conv as a dense (bf, 9*bf) @ (9*bf, B) matmul -----------------
    for i in range(nc):
        fill_cols(cols_b, xb[i * bf:(i + 1) * bf, :], m1, 0, B)
        a = jnp.dot(w0_ref[i * bf:(i + 1) * bf, :], cols_b[...],
                    preferred_element_type=f32)
        x1_all[i * bf:(i + 1) * bf, :] = _leaky_relu(
            a + b0_ref[i * bf:(i + 1) * bf, :]).astype(cdt)

    # ---- 1x1 fusion conv over the concatenated branches ----------------------------------------
    base = _leaky_relu(
        jnp.dot(w1_ref[...], x1_all[...], preferred_element_type=f32)
        + b1_ref[...]).astype(cdt)                            # (bf, B)

    # ---- stage 2: shared-base matmul fused over branches + per-branch x1 matmul ----------------
    fill_cols(cols_o, base, m2, Hh, L)                        # base im2col built once, width L
    y2b = jnp.dot(w2b_ref[...], cols_o[...], preferred_element_type=f32)   # (nc*bf, L)

    for i in range(nc):
        fill_cols(cols_o, x1_all[i * bf:(i + 1) * bf, :], m2, Hh, L)
        yi = y2b[i * bf:(i + 1) * bf, :] + jnp.dot(
            w2x_ref[i * bf:(i + 1) * bf, :], cols_o[...], preferred_element_type=f32)
        x2i = _leaky_relu(yi + b2_ref[i * bf:(i + 1) * bf, :])
        out_ref[i * bf:(i + 1) * bf, :] = (
            xb[i * bf:(i + 1) * bf, Hh:Hh + L].astype(f32) + x2i).astype(out_ref.dtype)


def _conv3_mat(wi):
    """Torch OIHW (co, ci, 3, 3) -> (co, 9*ci); column = tap*ci + cin, tap = kh*3 + kw."""
    co, ci = wi.shape[0], wi.shape[1]
    return jnp.transpose(wi, (0, 2, 3, 1)).reshape(co, 9 * ci)


def pfrb_forward(x_stack, params, nc, bf, compute_dtype=jnp.bfloat16,
                 strip_len=None, out_dtype=jnp.float32):
    """x_stack: [nc, N, bf, H, W] (the PyTorch list of NCHW tensors, stacked).  Same layout out."""
    _, n, _, H, W = x_stack.shape
    HW = H * W
    cdt = compute_dtype
    C = nc * bf

    # strip/halo geometry: strips are multiples of lcm(W, 128) lanes (lane-dense stores; W-aligned
    # so the per-lane column pattern is strip independent).  Halo Hh (also lcm-aligned so all
    # in-kernel output slices are vreg-aligned) covers the 2-row + 2-col reach of the two stacked
    # 3x3 convs and is realised as `ph` zero rows of host-side padding above and below the frame.
    unit = (W * 128) // math.gcd(W, 128)
    Hh = ((2 * W + 2 + unit - 1) // unit) * unit
    ph = Hh // W
    if strip_len is None:
        L = HW                                                 # single-strip fallback
        cand = (min(HW, 4096) // unit) * unit
        while cand >= unit:
            if HW % cand == 0:
                L = cand
                break
            cand -= unit
    else:
        L = int(strip_len)
        assert L % unit == 0 and HW % L == 0, \
            "strip_len must be a multiple of lcm(W, 128) that divides H*W"
    n_strips = HW // L
    B = L + 2 * Hh

    # glue: [nc,N,bf,H,W] -> (N, C, H, W) -> zero-pad ph rows top/bottom -> flatten pixels
    x_nchw = jnp.transpose(x_stack, (1, 0, 2, 3, 4)).reshape(n, C, H, W)
    x_pad = jnp.pad(x_nchw, ((0, 0), (0, 0), (ph, ph), (0, 0))).reshape(
        n, C, (H + 2 * ph) * W).astype(cdt)

    # tiny per-lane coordinate vectors (strip independent because L % W == 0 and Hh % W == 0)
    lane = np.arange(B, dtype=np.int32)
    colv = jnp.asarray((lane % W).reshape(1, B))
    rowv = jnp.asarray((lane // W).reshape(1, B))

    # weights -> tap-major matmul form (compute-dtype MXU operands, f32 biases); no block-diag
    w0_all = jnp.concatenate([_conv3_mat(wi) for wi in params['w0']], axis=0).astype(cdt)  # (C, 9bf)
    b0 = jnp.concatenate(params['b0']).reshape(C, 1).astype(jnp.float32)
    w1_m = params['w1'][:, :, 0, 0].astype(cdt)                                            # (bf, C)
    b1 = params['b1'].reshape(bf, 1).astype(jnp.float32)
    w2b = jnp.concatenate([_conv3_mat(wi[:, :bf]) for wi in params['w2']], axis=0).astype(cdt)
    w2x = jnp.concatenate([_conv3_mat(wi[:, bf:]) for wi in params['w2']], axis=0).astype(cdt)
    b2 = jnp.concatenate(params['b2']).reshape(C, 1).astype(jnp.float32)

    kernel = functools.partial(_pfrb_kernel, nc, bf, H, W, L, Hh)
    const = lambda b, s: (0, 0)
    out = pl.pallas_call(
        kernel,
        out_shape=jax.ShapeDtypeStruct((n, C, HW), out_dtype),
        grid_spec=pltpu.PrefetchScalarGridSpec(
            num_scalar_prefetch=0,
            grid=(n, n_strips),
            in_specs=[
                pl.BlockSpec(memory_space=pl.ANY),             # padded, flattened x stays in HBM
                pl.BlockSpec((1, B), const),                   # per-lane column index
                pl.BlockSpec((1, B), const),                   # per-lane (strip-local) row index
                pl.BlockSpec((C, 9 * bf), const),              # conv0 weights, branch-stacked
                pl.BlockSpec((C, 1), const),                   # b0
                pl.BlockSpec((bf, C), const),                  # conv1 (1x1 fusion)
                pl.BlockSpec((bf, 1), const),                  # b1
                pl.BlockSpec((C, 9 * bf), const),              # conv2, base half (branch-stacked)
                pl.BlockSpec((C, 9 * bf), const),              # conv2, x1 half (branch-stacked)
                pl.BlockSpec((C, 1), const),                   # b2
            ],
            out_specs=pl.BlockSpec((None, C, L), lambda b, s: (b, 0, s)),
            scratch_shapes=[
                pltpu.VMEM((C, B), cdt),                       # x strip (+halo) DMA buffer
                pltpu.VMEM((C, B), cdt),                       # x1 (all branches)
                pltpu.VMEM((9 * bf, B), cdt),                  # reused stage-1 im2col strip
                pltpu.VMEM((9 * bf, L), cdt),                  # reused stage-2 im2col strip
                pltpu.SemaphoreType.DMA,
            ]),
        compiler_params=pltpu.CompilerParams(
            dimension_semantics=("parallel", "parallel")),     # batch x strips -> both v7x cores
    )(x_pad, colv, rowv, w0_all, b0, w1_m, b1, w2b, w2x, b2)

    # glue: back to the stacked NCHW list layout [nc, N, bf, H, W]
    return jnp.transpose(out.reshape(n, nc, bf, H, W), (1, 0, 2, 3, 4))


def pfrb_reference(x_stack, params, nc):
    """Pure-JAX reference matching the PyTorch forward (NCHW)."""
    def conv(x, w, b, pad):
        y = jax.lax.conv_general_dilated(
            x, w, (1, 1), pad, dimension_numbers=('NCHW', 'OIHW', 'NCHW'))
        return y + b[None, :, None, None]

    act = lambda t: jnp.where(t >= 0, t, 0.2 * t)
    x = [x_stack[i] for i in range(nc)]
    x1 = [act(conv(x[i], params['w0'][i], params['b0'][i], ((1, 1), (1, 1))))
          for i in range(nc)]
    merge = jnp.concatenate(x1, axis=1)
    base = act(conv(merge, params['w1'], params['b1'], ((0, 0), (0, 0))))
    x2 = [jnp.concatenate([base, t], axis=1) for t in x1]
    x2 = [act(conv(x2[i], params['w2'][i], params['b2'][i], ((1, 1), (1, 1))))
          for i in range(nc)]
    return jnp.stack([x[i] + x2[i] for i in range(nc)])


if __name__ == "__main__":
    # small shapes: basic_feature=16, num_channel=3, batch=2, spatial=16x16
    nc, bf = 3, 16
    n, h, w = 2, 16, 16

    key = jax.random.PRNGKey(0)
    keys = jax.random.split(key, 7)
    x_stack = jax.random.normal(keys[0], (nc, n, bf, h, w), jnp.float32)

    params = {
        'w0': [0.1 * jax.random.normal(jax.random.fold_in(keys[1], i), (bf, bf, 3, 3), jnp.float32)
               for i in range(nc)],
        'b0': [0.1 * jax.random.normal(jax.random.fold_in(keys[2], i), (bf,), jnp.float32)
               for i in range(nc)],
        'w1': 0.1 * jax.random.normal(keys[3], (bf, bf * nc, 1, 1), jnp.float32),
        'b1': 0.1 * jax.random.normal(keys[4], (bf,), jnp.float32),
        'w2': [0.1 * jax.random.normal(jax.random.fold_in(keys[5], i), (bf, 2 * bf, 3, 3), jnp.float32)
               for i in range(nc)],
        'b2': [0.1 * jax.random.normal(jax.random.fold_in(keys[6], i), (bf,), jnp.float32)
               for i in range(nc)],
    }

    ref = pfrb_reference(x_stack, params, nc)

    # f32 compute path, 2 strips (strip_len=128): strict check of the strip/halo/mask logic.
    out_f32 = jax.block_until_ready(
        pfrb_forward(x_stack, params, nc, bf, compute_dtype=jnp.float32, strip_len=128))
    np.testing.assert_allclose(np.asarray(out_f32), np.asarray(ref), atol=5e-4, rtol=5e-4)

    # bf16 MXU-operand fast path (f32 accumulation / epilogue); tolerance sized to two bf16 convs.
    out_bf16 = jax.block_until_ready(
        pfrb_forward(x_stack, params, nc, bf, compute_dtype=jnp.bfloat16, strip_len=128))
    np.testing.assert_allclose(np.asarray(out_bf16), np.asarray(ref), atol=6e-2, rtol=6e-2)

    print("KERNEL_OK")
</pallas_src>

<mosaic_0001>
module attributes {stable_mosaic.version = 11 : i64} {
  func.func @_pfrb_kernel(%arg0: i32, %arg1: i32, %arg2: memref<2x48x512xf32, #tpu.memory_space<any>>, %arg3: memref<1x384xi32, #tpu.memory_space<vmem>>, %arg4: memref<1x384xi32, #tpu.memory_space<vmem>>, %arg5: memref<48x144xf32, #tpu.memory_space<vmem>>, %arg6: memref<48x1xf32, #tpu.memory_space<vmem>>, %arg7: memref<16x48xf32, #tpu.memory_space<vmem>>, %arg8: memref<16x1xf32, #tpu.memory_space<vmem>>, %arg9: memref<48x144xf32, #tpu.memory_space<vmem>>, %arg10: memref<48x144xf32, #tpu.memory_space<vmem>>, %arg11: memref<48x1xf32, #tpu.memory_space<vmem>>, %arg12: memref<1x48x128xf32, #tpu.memory_space<vmem>>, %arg13: memref<48x384xf32, #tpu.memory_space<vmem>>, %arg14: memref<48x384xf32, #tpu.memory_space<vmem>>, %arg15: memref<144x384xf32, #tpu.memory_space<vmem>>, %arg16: memref<144x128xf32, #tpu.memory_space<vmem>>, %arg17: memref<!tpu.dma_semaphore, #tpu.memory_space<semaphore_mem>>) attributes {dimension_semantics = [#tpu.dimension_semantics<parallel>, #tpu.dimension_semantics<parallel>], iteration_bounds = array<i64: 2, 2>, scalar_prefetch = 0 : i64, scratch_operands = 5 : i64, tpu.core_type = #tpu.core_type<tc>, window_params = [{}, {pipeline_mode = #tpu.pipeline_mode<synchronous>, transform_indices = @transform_1, window_bounds = array<i64: 1, 384>}, {pipeline_mode = #tpu.pipeline_mode<synchronous>, transform_indices = @transform_2, window_bounds = array<i64: 1, 384>}, {pipeline_mode = #tpu.pipeline_mode<synchronous>, transform_indices = @transform_3, window_bounds = array<i64: 48, 144>}, {pipeline_mode = #tpu.pipeline_mode<synchronous>, transform_indices = @transform_4, window_bounds = array<i64: 48, 1>}, {pipeline_mode = #tpu.pipeline_mode<synchronous>, transform_indices = @transform_5, window_bounds = array<i64: 16, 48>}, {pipeline_mode = #tpu.pipeline_mode<synchronous>, transform_indices = @transform_6, window_bounds = array<i64: 16, 1>}, {pipeline_mode = #tpu.pipeline_mode<synchronous>, transform_indices = @transform_7, window_bounds = array<i64: 48, 144>}, {pipeline_mode = #tpu.pipeline_mode<synchronous>, transform_indices = @transform_8, window_bounds = array<i64: 48, 144>}, {pipeline_mode = #tpu.pipeline_mode<synchronous>, transform_indices = @transform_9, window_bounds = array<i64: 48, 1>}, {transform_indices = @transform_10, window_bounds = array<i64: 1, 48, 128>}]} {
    %c128_i32 = arith.constant 128 : i32
    %0 = arith.muli %arg1, %c128_i32 : i32
    %1 = tpu.assume_multiple %0, 128 : i32
    %c0_i32 = arith.constant 0 : i32
    %2 = tpu.memref_slice %arg2[%arg0, %c0_i32, %1] : memref<2x48x512xf32, #tpu.memory_space<any>> -> memref<1x48x384xf32, #tpu.memory_space<any>>
    %3 = tpu.memref_squeeze %2 : memref<1x48x384xf32, #tpu.memory_space<any>> -> memref<48x384xf32, #tpu.memory_space<any>>
    tpu.enqueue_dma source(%3 : memref<48x384xf32, #tpu.memory_space<any>>) target(%arg13 : memref<48x384xf32, #tpu.memory_space<vmem>>) target_semaphore(%arg17 : memref<!tpu.dma_semaphore, #tpu.memory_space<semaphore_mem>>)
    %c0 = arith.constant 0 : index
    %c0_0 = arith.constant 0 : index
    %4 = vector.load %arg3[%c0, %c0_0] : memref<1x384xi32, #tpu.memory_space<vmem>>, vector<1x384xi32>
    %c0_1 = arith.constant 0 : index
    %c128 = arith.constant 128 : index
    %5 = vector.load %arg3[%c0_1, %c128] : memref<1x384xi32, #tpu.memory_space<vmem>>, vector<1x128xi32>
    %c0_2 = arith.constant 0 : index
    %c128_3 = arith.constant 128 : index
    %6 = vector.load %arg4[%c0_2, %c128_3] : memref<1x384xi32, #tpu.memory_space<vmem>>, vector<1x128xi32>
    %c8_i32 = arith.constant 8 : i32
    %7 = arith.muli %arg1, %c8_i32 : i32
    %c8_i32_4 = arith.constant 8 : i32
    %8 = arith.subi %7, %c8_i32_4 : i32
    %9 = vector.broadcast %8 : i32 to vector<1x128xi32>
    %10 = arith.addi %6, %9 : vector<1x128xi32>
    %c-1_i32 = arith.constant -1 : i32
    %11 = vector.broadcast %c-1_i32 : i32 to vector<1x384xi32>
    %12 = arith.addi %4, %11 : vector<1x384xi32>
    %c0_i32_5 = arith.constant 0 : i32
    %13 = vector.broadcast %c0_i32_5 : i32 to vector<1x384xi32>
    %14 = arith.cmpi sge, %12, %13 : vector<1x384xi32>
    %c-1_i32_6 = arith.constant -1 : i32
    %15 = vector.broadcast %c-1_i32_6 : i32 to vector<1x384xi32>
    %16 = arith.addi %4, %15 : vector<1x384xi32>
    %c16_i32 = arith.constant 16 : i32
    %17 = vector.broadcast %c16_i32 : i32 to vector<1x384xi32>
    %18 = arith.cmpi slt, %16, %17 : vector<1x384xi32>
    %19 = arith.andi %14, %18 : vector<1x384xi1>
    %20 = arith.extui %19 : vector<1x384xi1> to vector<1x384xi32>
    %21 = arith.sitofp %20 : vector<1x384xi32> to vector<1x384xf32>
    %c1_i32 = arith.constant 1 : i32
    %22 = vector.broadcast %c1_i32 : i32 to vector<1x384xi32>
    %23 = arith.addi %4, %22 : vector<1x384xi32>
    %c0_i32_7 = arith.constant 0 : i32
    %24 = vector.broadcast %c0_i32_7 : i32 to vector<1x384xi32>
    %25 = arith.cmpi sge, %23, %24 : vector<1x384xi32>
    %c1_i32_8 = arith.constant 1 : i32
    %26 = vector.broadcast %c1_i32_8 : i32 to vector<1x384xi32>
    %27 = arith.addi %4, %26 : vector<1x384xi32>
    %c16_i32_9 = arith.constant 16 : i32
    %28 = vector.broadcast %c16_i32_9 : i32 to vector<1x384xi32>
    %29 = arith.cmpi slt, %27, %28 : vector<1x384xi32>
    %30 = arith.andi %25, %29 : vector<1x384xi1>
    %31 = arith.extui %30 : vector<1x384xi1> to vector<1x384xi32>
    %32 = arith.sitofp %31 : vector<1x384xi32> to vector<1x384xf32>
    %c-1_i32_10 = arith.constant -1 : i32
    %33 = vector.broadcast %c-1_i32_10 : i32 to vector<1x384xi32>
    %34 = arith.addi %4, %33 : vector<1x384xi32>
    %c0_i32_11 = arith.constant 0 : i32
    %35 = vector.broadcast %c0_i32_11 : i32 to vector<1x384xi32>
    %36 = arith.cmpi sge, %34, %35 : vector<1x384xi32>
    %c-1_i32_12 = arith.constant -1 : i32
    %37 = vector.broadcast %c-1_i32_12 : i32 to vector<1x384xi32>
    %38 = arith.addi %4, %37 : vector<1x384xi32>
    %c16_i32_13 = arith.constant 16 : i32
    %39 = vector.broadcast %c16_i32_13 : i32 to vector<1x384xi32>
    %40 = arith.cmpi slt, %38, %39 : vector<1x384xi32>
    %41 = arith.andi %36, %40 : vector<1x384xi1>
    %42 = arith.extui %41 : vector<1x384xi1> to vector<1x384xi32>
    %43 = arith.sitofp %42 : vector<1x384xi32> to vector<1x384xf32>
    %c1_i32_14 = arith.constant 1 : i32
    %44 = vector.broadcast %c1_i32_14 : i32 to vector<1x384xi32>
    %45 = arith.addi %4, %44 : vector<1x384xi32>
    %c0_i32_15 = arith.constant 0 : i32
    %46 = vector.broadcast %c0_i32_15 : i32 to vector<1x384xi32>
    %47 = arith.cmpi sge, %45, %46 : vector<1x384xi32>
    %c1_i32_16 = arith.constant 1 : i32
    %48 = vector.broadcast %c1_i32_16 : i32 to vector<1x384xi32>
    %49 = arith.addi %4, %48 : vector<1x384xi32>
    %c16_i32_17 = arith.constant 16 : i32
    %50 = vector.broadcast %c16_i32_17 : i32 to vector<1x384xi32>
    %51 = arith.cmpi slt, %49, %50 : vector<1x384xi32>
    %52 = arith.andi %47, %51 : vector<1x384xi1>
    %53 = arith.extui %52 : vector<1x384xi1> to vector<1x384xi32>
    %54 = arith.sitofp %53 : vector<1x384xi32> to vector<1x384xf32>
    %c-1_i32_18 = arith.constant -1 : i32
    %55 = vector.broadcast %c-1_i32_18 : i32 to vector<1x384xi32>
    %56 = arith.addi %4, %55 : vector<1x384xi32>
    %c0_i32_19 = arith.constant 0 : i32
    %57 = vector.broadcast %c0_i32_19 : i32 to vector<1x384xi32>
    %58 = arith.cmpi sge, %56, %57 : vector<1x384xi32>
    %c-1_i32_20 = arith.constant -1 : i32
    %59 = vector.broadcast %c-1_i32_20 : i32 to vector<1x384xi32>
    %60 = arith.addi %4, %59 : vector<1x384xi32>
    %c16_i32_21 = arith.constant 16 : i32
    %61 = vector.broadcast %c16_i32_21 : i32 to vector<1x384xi32>
    %62 = arith.cmpi slt, %60, %61 : vector<1x384xi32>
    %63 = arith.andi %58, %62 : vector<1x384xi1>
    %64 = arith.extui %63 : vector<1x384xi1> to vector<1x384xi32>
    %65 = arith.sitofp %64 : vector<1x384xi32> to vector<1x384xf32>
    %c1_i32_22 = arith.constant 1 : i32
    %66 = vector.broadcast %c1_i32_22 : i32 to vector<1x384xi32>
    %67 = arith.addi %4, %66 : vector<1x384xi32>
    %c0_i32_23 = arith.constant 0 : i32
    %68 = vector.broadcast %c0_i32_23 : i32 to vector<1x384xi32>
    %69 = arith.cmpi sge, %67, %68 : vector<1x384xi32>
    %c1_i32_24 = arith.constant 1 : i32
    %70 = vector.broadcast %c1_i32_24 : i32 to vector<1x384xi32>
    %71 = arith.addi %4, %70 : vector<1x384xi32>
    %c16_i32_25 = arith.constant 16 : i32
    %72 = vector.broadcast %c16_i32_25 : i32 to vector<1x384xi32>
    %73 = arith.cmpi slt, %71, %72 : vector<1x384xi32>
    %74 = arith.andi %69, %73 : vector<1x384xi1>
    %75 = arith.extui %74 : vector<1x384xi1> to vector<1x384xi32>
    %76 = arith.sitofp %75 : vector<1x384xi32> to vector<1x384xf32>
    %c-1_i32_26 = arith.constant -1 : i32
    %77 = vector.broadcast %c-1_i32_26 : i32 to vector<1x128xi32>
    %78 = arith.addi %5, %77 : vector<1x128xi32>
    %c0_i32_27 = arith.constant 0 : i32
    %79 = vector.broadcast %c0_i32_27 : i32 to vector<1x128xi32>
    %80 = arith.cmpi sge, %78, %79 : vector<1x128xi32>
    %c-1_i32_28 = arith.constant -1 : i32
    %81 = vector.broadcast %c-1_i32_28 : i32 to vector<1x128xi32>
    %82 = arith.addi %5, %81 : vector<1x128xi32>
    %c16_i32_29 = arith.constant 16 : i32
    %83 = vector.broadcast %c16_i32_29 : i32 to vector<1x128xi32>
    %84 = arith.cmpi slt, %82, %83 : vector<1x128xi32>
    %85 = arith.andi %80, %84 : vector<1x128xi1>
    %86 = arith.extui %85 : vector<1x128xi1> to vector<1x128xi32>
    %87 = arith.sitofp %86 : vector<1x128xi32> to vector<1x128xf32>
    %c-1_i32_30 = arith.constant -1 : i32
    %88 = vector.broadcast %c-1_i32_30 : i32 to vector<1x128xi32>
    %89 = arith.addi %10, %88 : vector<1x128xi32>
    %c0_i32_31 = arith.constant 0 : i32
    %90 = vector.broadcast %c0_i32_31 : i32 to vector<1x128xi32>
    %91 = arith.cmpi sge, %89, %90 : vector<1x128xi32>
    %c-1_i32_32 = arith.constant -1 : i32
    %92 = vector.broadcast %c-1_i32_32 : i32 to vector<1x128xi32>
    %93 = arith.addi %10, %92 : vector<1x128xi32>
    %c16_i32_33 = arith.constant 16 : i32
    %94 = vector.broadcast %c16_i32_33 : i32 to vector<1x128xi32>
    %95 = arith.cmpi slt, %93, %94 : vector<1x128xi32>
    %96 = arith.andi %91, %95 : vector<1x128xi1>
    %97 = arith.extui %96 : vector<1x128xi1> to vector<1x128xi32>
    %98 = arith.sitofp %97 : vector<1x128xi32> to vector<1x128xf32>
    %99 = arith.mulf %87, %98 : vector<1x128xf32>
    %c-1_i32_34 = arith.constant -1 : i32
    %100 = vector.broadcast %c-1_i32_34 : i32 to vector<1x128xi32>
    %101 = arith.addi %10, %100 : vector<1x128xi32>
    %c0_i32_35 = arith.constant 0 : i32
    %102 = vector.broadcast %c0_i32_35 : i32 to vector<1x128xi32>
    %103 = arith.cmpi sge, %101, %102 : vector<1x128xi32>
    %c-1_i32_36 = arith.constant -1 : i32
    %104 = vector.broadcast %c-1_i32_36 : i32 to vector<1x128xi32>
    %105 = arith.addi %10, %104 : vector<1x128xi32>
    %c16_i32_37 = arith.constant 16 : i32
    %106 = vector.broadcast %c16_i32_37 : i32 to vector<1x128xi32>
    %107 = arith.cmpi slt, %105, %106 : vector<1x128xi32>
    %108 = arith.andi %103, %107 : vector<1x128xi1>
    %109 = arith.extui %108 : vector<1x128xi1> to vector<1x128xi32>
    %110 = arith.sitofp %109 : vector<1x128xi32> to vector<1x128xf32>
    %c1_i32_38 = arith.constant 1 : i32
    %111 = vector.broadcast %c1_i32_38 : i32 to vector<1x128xi32>
    %112 = arith.addi %5, %111 : vector<1x128xi32>
    %c0_i32_39 = arith.constant 0 : i32
    %113 = vector.broadcast %c0_i32_39 : i32 to vector<1x128xi32>
    %114 = arith.cmpi sge, %112, %113 : vector<1x128xi32>
    %c1_i32_40 = arith.constant 1 : i32
    %115 = vector.broadcast %c1_i32_40 : i32 to vector<1x128xi32>
    %116 = arith.addi %5, %115 : vector<1x128xi32>
    %c16_i32_41 = arith.constant 16 : i32
    %117 = vector.broadcast %c16_i32_41 : i32 to vector<1x128xi32>
    %118 = arith.cmpi slt, %116, %117 : vector<1x128xi32>
    %119 = arith.andi %114, %118 : vector<1x128xi1>
    %120 = arith.extui %119 : vector<1x128xi1> to vector<1x128xi32>
    %121 = arith.sitofp %120 : vector<1x128xi32> to vector<1x128xf32>
    %c-1_i32_42 = arith.constant -1 : i32
    %122 = vector.broadcast %c-1_i32_42 : i32 to vector<1x128xi32>
    %123 = arith.addi %10, %122 : vector<1x128xi32>
    %c0_i32_43 = arith.constant 0 : i32
    %124 = vector.broadcast %c0_i32_43 : i32 to vector<1x128xi32>
    %125 = arith.cmpi sge, %123, %124 : vector<1x128xi32>
    %c-1_i32_44 = arith.constant -1 : i32
    %126 = vector.broadcast %c-1_i32_44 : i32 to vector<1x128xi32>
    %127 = arith.addi %10, %126 : vector<1x128xi32>
    %c16_i32_45 = arith.constant 16 : i32
    %128 = vector.broadcast %c16_i32_45 : i32 to vector<1x128xi32>
    %129 = arith.cmpi slt, %127, %128 : vector<1x128xi32>
    %130 = arith.andi %125, %129 : vector<1x128xi1>
    %131 = arith.extui %130 : vector<1x128xi1> to vector<1x128xi32>
    %132 = arith.sitofp %131 : vector<1x128xi32> to vector<1x128xf32>
    %133 = arith.mulf %121, %132 : vector<1x128xf32>
    %c-1_i32_46 = arith.constant -1 : i32
    %134 = vector.broadcast %c-1_i32_46 : i32 to vector<1x128xi32>
    %135 = arith.addi %5, %134 : vector<1x128xi32>
    %c0_i32_47 = arith.constant 0 : i32
    %136 = vector.broadcast %c0_i32_47 : i32 to vector<1x128xi32>
    %137 = arith.cmpi sge, %135, %136 : vector<1x128xi32>
    %c-1_i32_48 = arith.constant -1 : i32
    %138 = vector.broadcast %c-1_i32_48 : i32 to vector<1x128xi32>
    %139 = arith.addi %5, %138 : vector<1x128xi32>
    %c16_i32_49 = arith.constant 16 : i32
    %140 = vector.broadcast %c16_i32_49 : i32 to vector<1x128xi32>
    %141 = arith.cmpi slt, %139, %140 : vector<1x128xi32>
    %142 = arith.andi %137, %141 : vector<1x128xi1>
    %143 = arith.extui %142 : vector<1x128xi1> to vector<1x128xi32>
    %144 = arith.sitofp %143 : vector<1x128xi32> to vector<1x128xf32>
    %c1_i32_50 = arith.constant 1 : i32
    %145 = vector.broadcast %c1_i32_50 : i32 to vector<1x128xi32>
    %146 = arith.addi %5, %145 : vector<1x128xi32>
    %c0_i32_51 = arith.constant 0 : i32
    %147 = vector.broadcast %c0_i32_51 : i32 to vector<1x128xi32>
    %148 = arith.cmpi sge, %146, %147 : vector<1x128xi32>
    %c1_i32_52 = arith.constant 1 : i32
    %149 = vector.broadcast %c1_i32_52 : i32 to vector<1x128xi32>
    %150 = arith.addi %5, %149 : vector<1x128xi32>
    %c16_i32_53 = arith.constant 16 : i32
    %151 = vector.broadcast %c16_i32_53 : i32 to vector<1x128xi32>
    %152 = arith.cmpi slt, %150, %151 : vector<1x128xi32>
    %153 = arith.andi %148, %152 : vector<1x128xi1>
    %154 = arith.extui %153 : vector<1x128xi1> to vector<1x128xi32>
    %155 = arith.sitofp %154 : vector<1x128xi32> to vector<1x128xf32>
    %c-1_i32_54 = arith.constant -1 : i32
    %156 = vector.broadcast %c-1_i32_54 : i32 to vector<1x128xi32>
    %157 = arith.addi %5, %156 : vector<1x128xi32>
    %c0_i32_55 = arith.constant 0 : i32
    %158 = vector.broadcast %c0_i32_55 : i32 to vector<1x128xi32>
    %159 = arith.cmpi sge, %157, %158 : vector<1x128xi32>
    %c-1_i32_56 = arith.constant -1 : i32
    %160 = vector.broadcast %c-1_i32_56 : i32 to vector<1x128xi32>
    %161 = arith.addi %5, %160 : vector<1x128xi32>
    %c16_i32_57 = arith.constant 16 : i32
    %162 = vector.broadcast %c16_i32_57 : i32 to vector<1x128xi32>
    %163 = arith.cmpi slt, %161, %162 : vector<1x128xi32>
    %164 = arith.andi %159, %163 : vector<1x128xi1>
    %165 = arith.extui %164 : vector<1x128xi1> to vector<1x128xi32>
    %166 = arith.sitofp %165 : vector<1x128xi32> to vector<1x128xf32>
    %c1_i32_58 = arith.constant 1 : i32
    %167 = vector.broadcast %c1_i32_58 : i32 to vector<1x128xi32>
    %168 = arith.addi %10, %167 : vector<1x128xi32>
    %c0_i32_59 = arith.constant 0 : i32
    %169 = vector.broadcast %c0_i32_59 : i32 to vector<1x128xi32>
    %170 = arith.cmpi sge, %168, %169 : vector<1x128xi32>
    %c1_i32_60 = arith.constant 1 : i32
    %171 = vector.broadcast %c1_i32_60 : i32 to vector<1x128xi32>
    %172 = arith.addi %10, %171 : vector<1x128xi32>
    %c16_i32_61 = arith.constant 16 : i32
    %173 = vector.broadcast %c16_i32_61 : i32 to vector<1x128xi32>
    %174 = arith.cmpi slt, %172, %173 : vector<1x128xi32>
    %175 = arith.andi %170, %174 : vector<1x128xi1>
    %176 = arith.extui %175 : vector<1x128xi1> to vector<1x128xi32>
    %177 = arith.sitofp %176 : vector<1x128xi32> to vector<1x128xf32>
    %178 = arith.mulf %166, %177 : vector<1x128xf32>
    %c1_i32_62 = arith.constant 1 : i32
    %179 = vector.broadcast %c1_i32_62 : i32 to vector<1x128xi32>
    %180 = arith.addi %10, %179 : vector<1x128xi32>
    %c0_i32_63 = arith.constant 0 : i32
    %181 = vector.broadcast %c0_i32_63 : i32 to vector<1x128xi32>
    %182 = arith.cmpi sge, %180, %181 : vector<1x128xi32>
    %c1_i32_64 = arith.constant 1 : i32
    %183 = vector.broadcast %c1_i32_64 : i32 to vector<1x128xi32>
    %184 = arith.addi %10, %183 : vector<1x128xi32>
    %c16_i32_65 = arith.constant 16 : i32
    %185 = vector.broadcast %c16_i32_65 : i32 to vector<1x128xi32>
    %186 = arith.cmpi slt, %184, %185 : vector<1x128xi32>
    %187 = arith.andi %182, %186 : vector<1x128xi1>
    %188 = arith.extui %187 : vector<1x128xi1> to vector<1x128xi32>
    %189 = arith.sitofp %188 : vector<1x128xi32> to vector<1x128xf32>
    %c1_i32_66 = arith.constant 1 : i32
    %190 = vector.broadcast %c1_i32_66 : i32 to vector<1x128xi32>
    %191 = arith.addi %5, %190 : vector<1x128xi32>
    %c0_i32_67 = arith.constant 0 : i32
    %192 = vector.broadcast %c0_i32_67 : i32 to vector<1x128xi32>
    %193 = arith.cmpi sge, %191, %192 : vector<1x128xi32>
    %c1_i32_68 = arith.constant 1 : i32
    %194 = vector.broadcast %c1_i32_68 : i32 to vector<1x128xi32>
    %195 = arith.addi %5, %194 : vector<1x128xi32>
    %c16_i32_69 = arith.constant 16 : i32
    %196 = vector.broadcast %c16_i32_69 : i32 to vector<1x128xi32>
    %197 = arith.cmpi slt, %195, %196 : vector<1x128xi32>
    %198 = arith.andi %193, %197 : vector<1x128xi1>
    %199 = arith.extui %198 : vector<1x128xi1> to vector<1x128xi32>
    %200 = arith.sitofp %199 : vector<1x128xi32> to vector<1x128xf32>
    %c1_i32_70 = arith.constant 1 : i32
    %201 = vector.broadcast %c1_i32_70 : i32 to vector<1x128xi32>
    %202 = arith.addi %10, %201 : vector<1x128xi32>
    %c0_i32_71 = arith.constant 0 : i32
    %203 = vector.broadcast %c0_i32_71 : i32 to vector<1x128xi32>
    %204 = arith.cmpi sge, %202, %203 : vector<1x128xi32>
    %c1_i32_72 = arith.constant 1 : i32
    %205 = vector.broadcast %c1_i32_72 : i32 to vector<1x128xi32>
    %206 = arith.addi %10, %205 : vector<1x128xi32>
    %c16_i32_73 = arith.constant 16 : i32
    %207 = vector.broadcast %c16_i32_73 : i32 to vector<1x128xi32>
    %208 = arith.cmpi slt, %206, %207 : vector<1x128xi32>
    %209 = arith.andi %204, %208 : vector<1x128xi1>
    %210 = arith.extui %209 : vector<1x128xi1> to vector<1x128xi32>
    %211 = arith.sitofp %210 : vector<1x128xi32> to vector<1x128xf32>
    %212 = arith.mulf %200, %211 : vector<1x128xf32>
    %c0_i32_74 = arith.constant 0 : i32
    %213 = tpu.memref_slice %arg2[%arg0, %c0_i32_74, %1] : memref<2x48x512xf32, #tpu.memory_space<any>> -> memref<1x48x384xf32, #tpu.memory_space<any>>
    %214 = tpu.memref_squeeze %213 : memref<1x48x384xf32, #tpu.memory_space<any>> -> memref<48x384xf32, #tpu.memory_space<any>>
    tpu.wait_dma2 semaphore(%arg17 : memref<!tpu.dma_semaphore, #tpu.memory_space<semaphore_mem>>) src(%214 : memref<48x384xf32, #tpu.memory_space<any>>) dst(%arg13 : memref<48x384xf32, #tpu.memory_space<vmem>>)
    %c0_75 = arith.constant 0 : index
    %c0_76 = arith.constant 0 : index
    %215 = vector.load %arg13[%c0_75, %c0_76] : memref<48x384xf32, #tpu.memory_space<vmem>>, vector<16x384xf32>
    %216 = vector.extract_strided_slice %215 {offsets = [0, 367], sizes = [16, 17], strides = [1, 1]} : vector<16x384xf32> to vector<16x17xf32>
    %217 = vector.extract_strided_slice %215 {offsets = [0, 0], sizes = [16, 367], strides = [1, 1]} : vector<16x384xf32> to vector<16x367xf32>
    %218 = tpu.concatenate %216, %217 in 1 : vector<16x17xf32>, vector<16x367xf32> -> vector<16x384xf32>
    %219 = vector.broadcast %21 : vector<1x384xf32> to vector<16x384xf32>
    %220 = arith.mulf %218, %219 : vector<16x384xf32>
    %c0_77 = arith.constant 0 : index
    %c0_78 = arith.constant 0 : index
    %221 = vector.load %arg15[%c0_77, %c0_78] : memref<144x384xf32, #tpu.memory_space<vmem>>, vector<16x384xf32>
    tpu.vector_store %arg15[%c0_77, %c0_78], %220 {strides = array<i32>} : memref<144x384xf32, #tpu.memory_space<vmem>>, vector<16x384xf32>,
    %222 = vector.extract_strided_slice %215 {offsets = [0, 368], sizes = [16, 16], strides = [1, 1]} : vector<16x384xf32> to vector<16x16xf32>
    %223 = vector.extract_strided_slice %215 {offsets = [0, 0], sizes = [16, 368], strides = [1, 1]} : vector<16x384xf32> to vector<16x368xf32>
    %224 = tpu.concatenate %222, %223 in 1 : vector<16x16xf32>, vector<16x368xf32> -> vector<16x384xf32>
    %c16 = arith.constant 16 : index
    %c0_79 = arith.constant 0 : index
    %225 = vector.load %arg15[%c16, %c0_79] : memref<144x384xf32, #tpu.memory_space<vmem>>, vector<16x384xf32>
    tpu.vector_store %arg15[%c16, %c0_79], %224 {strides = array<i32>} : memref<144x384xf32, #tpu.memory_space<vmem>>, vector<16x384xf32>,
    %226 = vector.extract_strided_slice %215 {offsets = [0, 369], sizes = [16, 15], strides = [1, 1]} : vector<16x384xf32> to vector<16x15xf32>
    %227 = vector.extract_strided_slice %215 {offsets = [0, 0], sizes = [16, 369], strides = [1, 1]} : vector<16x384xf32> to vector<16x369xf32>
    %228 = tpu.concatenate %226, %227 in 1 : vector<16x15xf32>, vector<16x369xf32> -> vector<16x384xf32>
    %229 = vector.broadcast %32 : vector<1x384xf32> to vector<16x384xf32>
    %230 = arith.mulf %228, %229 : vector<16x384xf32>
    %c32 = arith.constant 32 : index
    %c0_80 = arith.constant 0 : index
    %231 = vector.load %arg15[%c32, %c0_80] : memref<144x384xf32, #tpu.memory_space<vmem>>, vector<16x384xf32>
    tpu.vector_store %arg15[%c32, %c0_80], %230 {strides = array<i32>} : memref<144x384xf32, #tpu.memory_space<vmem>>, vector<16x384xf32>,
    %232 = vector.extract_strided_slice %215 {offsets = [0, 383], sizes = [16, 1], strides = [1, 1]} : vector<16x384xf32> to vector<16x1xf32>
    %233 = vector.extract_strided_slice %215 {offsets = [0, 0], sizes = [16, 383], strides = [1, 1]} : vector<16x384xf32> to vector<16x383xf32>
    %234 = tpu.concatenate %232, %233 in 1 : vector<16x1xf32>, vector<16x383xf32> -> vector<16x384xf32>
    %235 = vector.broadcast %43 : vector<1x384xf32> to vector<16x384xf32>
    %236 = arith.mulf %234, %235 : vector<16x384xf32>
    %c48 = arith.constant 48 : index
    %c0_81 = arith.constant 0 : index
    %237 = vector.load %arg15[%c48, %c0_81] : memref<144x384xf32, #tpu.memory_space<vmem>>, vector<16x384xf32>
    tpu.vector_store %arg15[%c48, %c0_81], %236 {strides = array<i32>} : memref<144x384xf32, #tpu.memory_space<vmem>>, vector<16x384xf32>,
    %c64 = arith.constant 64 : index
    %c0_82 = arith.constant 0 : index
    %238 = vector.load %arg15[%c64, %c0_82] : memref<144x384xf32, #tpu.memory_space<vmem>>, vector<16x384xf32>
    tpu.vector_store %arg15[%c64, %c0_82], %215 {strides = array<i32>} : memref<144x384xf32, #tpu.memory_space<vmem>>, vector<16x384xf32>,
    %239 = vector.extract_strided_slice %215 {offsets = [0, 1], sizes = [16, 383], strides = [1, 1]} : vector<16x384xf32> to vector<16x383xf32>
    %240 = vector.extract_strided_slice %215 {offsets = [0, 0], sizes = [16, 1], strides = [1, 1]} : vector<16x384xf32> to vector<16x1xf32>
    %241 = tpu.concatenate %239, %240 in 1 : vector<16x383xf32>, vector<16x1xf32> -> vector<16x384xf32>
    %242 = vector.broadcast %54 : vector<1x384xf32> to vector<16x384xf32>
    %243 = arith.mulf %241, %242 : vector<16x384xf32>
    %c80 = arith.constant 80 : index
    %c0_83 = arith.constant 0 : index
    %244 = vector.load %arg15[%c80, %c0_83] : memref<144x384xf32, #tpu.memory_space<vmem>>, vector<16x384xf32>
    tpu.vector_store %arg15[%c80, %c0_83], %243 {strides = array<i32>} : memref<144x384xf32, #tpu.memory_space<vmem>>, vector<16x384xf32>,
    %245 = vector.extract_strided_slice %215 {offsets = [0, 15], sizes = [16, 369], strides = [1, 1]} : vector<16x384xf32> to vector<16x369xf32>
    %246 = vector.extract_strided_slice %215 {offsets = [0, 0], sizes = [16, 15], strides = [1, 1]} : vector<16x384xf32> to vector<16x15xf32>
    %247 = tpu.concatenate %245, %246 in 1 : vector<16x369xf32>, vector<16x15xf32> -> vector<16x384xf32>
    %248 = vector.broadcast %65 : vector<1x384xf32> to vector<16x384xf32>
    %249 = arith.mulf %247, %248 : vector<16x384xf32>
    %c96 = arith.constant 96 : index
    %c0_84 = arith.constant 0 : index
    %250 = vector.load %arg15[%c96, %c0_84] : memref<144x384xf32, #tpu.memory_space<vmem>>, vector<16x384xf32>
    tpu.vector_store %arg15[%c96, %c0_84], %249 {strides = array<i32>} : memref<144x384xf32, #tpu.memory_space<vmem>>, vector<16x384xf32>,
    %251 = vector.extract_strided_slice %215 {offsets = [0, 16], sizes = [16, 368], strides = [1, 1]} : vector<16x384xf32> to vector<16x368xf32>
    %252 = vector.extract_strided_slice %215 {offsets = [0, 0], sizes = [16, 16], strides = [1, 1]} : vector<16x384xf32> to vector<16x16xf32>
    %253 = tpu.concatenate %251, %252 in 1 : vector<16x368xf32>, vector<16x16xf32> -> vector<16x384xf32>
    %c112 = arith.constant 112 : index
    %c0_85 = arith.constant 0 : index
    %254 = vector.load %arg15[%c112, %c0_85] : memref<144x384xf32, #tpu.memory_space<vmem>>, vector<16x384xf32>
    tpu.vector_store %arg15[%c112, %c0_85], %253 {strides = array<i32>} : memref<144x384xf32, #tpu.memory_space<vmem>>, vector<16x384xf32>,
    %255 = vector.extract_strided_slice %215 {offsets = [0, 17], sizes = [16, 367], strides = [1, 1]} : vector<16x384xf32> to vector<16x367xf32>
    %256 = vector.extract_strided_slice %215 {offsets = [0, 0], sizes = [16, 17], strides = [1, 1]} : vector<16x384xf32> to vector<16x17xf32>
    %257 = tpu.concatenate %255, %256 in 1 : vector<16x367xf32>, vector<16x17xf32> -> vector<16x384xf32>
    %258 = vector.broadcast %76 : vector<1x384xf32> to vector<16x384xf32>
    %259 = arith.mulf %257, %258 : vector<16x384xf32>
    %c128_86 = arith.constant 128 : index
    %c0_87 = arith.constant 0 : index
    %260 = vector.load %arg15[%c128_86, %c0_87] : memref<144x384xf32, #tpu.memory_space<vmem>>, vector<16x384xf32>
    tpu.vector_store %arg15[%c128_86, %c0_87], %259 {strides = array<i32>} : memref<144x384xf32, #tpu.memory_space<vmem>>, vector<16x384xf32>,
    %c0_88 = arith.constant 0 : index
    %c0_89 = arith.constant 0 : index
    %261 = vector.load %arg5[%c0_88, %c0_89] : memref<48x144xf32, #tpu.memory_space<vmem>>, vector<16x144xf32>
    %c0_90 = arith.constant 0 : index
    %c0_91 = arith.constant 0 : index
    %262 = vector.load %arg15[%c0_90, %c0_91] : memref<144x384xf32, #tpu.memory_space<vmem>>, vector<144x384xf32>
    %cst = arith.constant dense<0.000000e+00> : vector<16x384xf32>
    %263 = tpu.matmul %261, %262, %cst {dimension_numbers = #tpu.dot_dimension_numbers<[1], [0], [0], [1], [0, 0, 1, 1], [], []>} : vector<16x144xf32>, vector<144x384xf32>, vector<16x384xf32> -> vector<16x384xf32>
    %c0_92 = arith.constant 0 : index
    %c0_93 = arith.constant 0 : index
    %264 = vector.load %arg6[%c0_92, %c0_93] : memref<48x1xf32, #tpu.memory_space<vmem>>, vector<16x1xf32>
    %265 = vector.broadcast %264 : vector<16x1xf32> to vector<16x384xf32>
    %266 = arith.addf %263, %265 : vector<16x384xf32>
    %cst_94 = arith.constant 0.000000e+00 : f32
    %267 = vector.broadcast %cst_94 : f32 to vector<16x384xf32>
    %268 = arith.cmpf oge, %266, %267 : vector<16x384xf32>
    %cst_95 = arith.constant 2.000000e-01 : f32
    %269 = vector.broadcast %cst_95 : f32 to vector<16x384xf32>
    %270 = arith.mulf %269, %266 : vector<16x384xf32>
    %271 = arith.select %268, %266, %270 : vector<16x384xi1>, vector<16x384xf32>
    %c0_96 = arith.constant 0 : index
    %c0_97 = arith.constant 0 : index
    %272 = vector.load %arg14[%c0_96, %c0_97] : memref<48x384xf32, #tpu.memory_space<vmem>>, vector<16x384xf32>
    tpu.vector_store %arg14[%c0_96, %c0_97], %271 {strides = array<i32>} : memref<48x384xf32, #tpu.memory_space<vmem>>, vector<16x384xf32>,
    %c16_98 = arith.constant 16 : index
    %c0_99 = arith.constant 0 : index
    %273 = vector.load %arg13[%c16_98, %c0_99] : memref<48x384xf32, #tpu.memory_space<vmem>>, vector<16x384xf32>
    %274 = vector.extract_strided_slice %273 {offsets = [0, 367], sizes = [16, 17], strides = [1, 1]} : vector<16x384xf32> to vector<16x17xf32>
    %275 = vector.extract_strided_slice %273 {offsets = [0, 0], sizes = [16, 367], strides = [1, 1]} : vector<16x384xf32> to vector<16x367xf32>
    %276 = tpu.concatenate %274, %275 in 1 : vector<16x17xf32>, vector<16x367xf32> -> vector<16x384xf32>
    %277 = vector.broadcast %21 : vector<1x384xf32> to vector<16x384xf32>
    %278 = arith.mulf %276, %277 : vector<16x384xf32>
    %c0_100 = arith.constant 0 : index
    %c0_101 = arith.constant 0 : index
    %279 = vector.load %arg15[%c0_100, %c0_101] : memref<144x384xf32, #tpu.memory_space<vmem>>, vector<16x384xf32>
    tpu.vector_store %arg15[%c0_100, %c0_101], %278 {strides = array<i32>} : memref<144x384xf32, #tpu.memory_space<vmem>>, vector<16x384xf32>,
    %280 = vector.extract_strided_slice %273 {offsets = [0, 368], sizes = [16, 16], strides = [1, 1]} : vector<16x384xf32> to vector<16x16xf32>
    %281 = vector.extract_strided_slice %273 {offsets = [0, 0], sizes = [16, 368], strides = [1, 1]} : vector<16x384xf32> to vector<16x368xf32>
    %282 = tpu.concatenate %280, %281 in 1 : vector<16x16xf32>, vector<16x368xf32> -> vector<16x384xf32>
    %c16_102 = arith.constant 16 : index
    %c0_103 = arith.constant 0 : index
    %283 = vector.load %arg15[%c16_102, %c0_103] : memref<144x384xf32, #tpu.memory_space<vmem>>, vector<16x384xf32>
    tpu.vector_store %arg15[%c16_102, %c0_103], %282 {strides = array<i32>} : memref<144x384xf32, #tpu.memory_space<vmem>>, vector<16x384xf32>,
    %284 = vector.extract_strided_slice %273 {offsets = [0, 369], sizes = [16, 15], strides = [1, 1]} : vector<16x384xf32> to vector<16x15xf32>
    %285 = vector.extract_strided_slice %273 {offsets = [0, 0], sizes = [16, 369], strides = [1, 1]} : vector<16x384xf32> to vector<16x369xf32>
    %286 = tpu.concatenate %284, %285 in 1 : vector<16x15xf32>, vector<16x369xf32> -> vector<16x384xf32>
    %287 = vector.broadcast %32 : vector<1x384xf32> to vector<16x384xf32>
    %288 = arith.mulf %286, %287 : vector<16x384xf32>
    %c32_104 = arith.constant 32 : index
    %c0_105 = arith.constant 0 : index
    %289 = vector.load %arg15[%c32_104, %c0_105] : memref<144x384xf32, #tpu.memory_space<vmem>>, vector<16x384xf32>
    tpu.vector_store %arg15[%c32_104, %c0_105], %288 {strides = array<i32>} : memref<144x384xf32, #tpu.memory_space<vmem>>, vector<16x384xf32>,
    %290 = vector.extract_strided_slice %273 {offsets = [0, 383], sizes = [16, 1], strides = [1, 1]} : vector<16x384xf32> to vector<16x1xf32>
    %291 = vector.extract_strided_slice %273 {offsets = [0, 0], sizes = [16, 383], strides = [1, 1]} : vector<16x384xf32> to vector<16x383xf32>
    %292 = tpu.concatenate %290, %291 in 1 : vector<16x1xf32>, vector<16x383xf32> -> vector<16x384xf32>
    %293 = vector.broadcast %43 : vector<1x384xf32> to vector<16x384xf32>
    %294 = arith.mulf %292, %293 : vector<16x384xf32>
    %c48_106 = arith.constant 48 : index
    %c0_107 = arith.constant 0 : index
    %295 = vector.load %arg15[%c48_106, %c0_107] : memref<144x384xf32, #tpu.memory_space<vmem>>, vector<16x384xf32>
    tpu.vector_store %arg15[%c48_106, %c0_107], %294 {strides = array<i32>} : memref<144x384xf32, #tpu.memory_space<vmem>>, vector<16x384xf32>,
    %c64_108 = arith.constant 64 : index
    %c0_109 = arith.constant 0 : index
    %296 = vector.load %arg15[%c64_108, %c0_109] : memref<144x384xf32, #tpu.memory_space<vmem>>, vector<16x384xf32>
    tpu.vector_store %arg15[%c64_108, %c0_109], %273 {strides = array<i32>} : memref<144x384xf32, #tpu.memory_space<vmem>>, vector<16x384xf32>,
    %297 = vector.extract_strided_slice %273 {offsets = [0, 1], sizes = [16, 383], strides = [1, 1]} : vector<16x384xf32> to vector<16x383xf32>
    %298 = vector.extract_strided_slice %273 {offsets = [0, 0], sizes = [16, 1], strides = [1, 1]} : vector<16x384xf32> to vector<16x1xf32>
    %299 = tpu.concatenate %297, %298 in 1 : vector<16x383xf32>, vector<16x1xf32> -> vector<16x384xf32>
    %300 = vector.broadcast %54 : vector<1x384xf32> to vector<16x384xf32>
    %301 = arith.mulf %299, %300 : vector<16x384xf32>
    %c80_110 = arith.constant 80 : index
    %c0_111 = arith.constant 0 : index
    %302 = vector.load %arg15[%c80_110, %c0_111] : memref<144x384xf32, #tpu.memory_space<vmem>>, vector<16x384xf32>
    tpu.vector_store %arg15[%c80_110, %c0_111], %301 {strides = array<i32>} : memref<144x384xf32, #tpu.memory_space<vmem>>, vector<16x384xf32>,
    %303 = vector.extract_strided_slice %273 {offsets = [0, 15], sizes = [16, 369], strides = [1, 1]} : vector<16x384xf32> to vector<16x369xf32>
    %304 = vector.extract_strided_slice %273 {offsets = [0, 0], sizes = [16, 15], strides = [1, 1]} : vector<16x384xf32> to vector<16x15xf32>
    %305 = tpu.concatenate %303, %304 in 1 : vector<16x369xf32>, vector<16x15xf32> -> vector<16x384xf32>
    %306 = vector.broadcast %65 : vector<1x384xf32> to vector<16x384xf32>
    %307 = arith.mulf %305, %306 : vector<16x384xf32>
    %c96_112 = arith.constant 96 : index
    %c0_113 = arith.constant 0 : index
    %308 = vector.load %arg15[%c96_112, %c0_113] : memref<144x384xf32, #tpu.memory_space<vmem>>, vector<16x384xf32>
    tpu.vector_store %arg15[%c96_112, %c0_113], %307 {strides = array<i32>} : memref<144x384xf32, #tpu.memory_space<vmem>>, vector<16x384xf32>,
    %309 = vector.extract_strided_slice %273 {offsets = [0, 16], sizes = [16, 368], strides = [1, 1]} : vector<16x384xf32> to vector<16x368xf32>
    %310 = vector.extract_strided_slice %273 {offsets = [0, 0], sizes = [16, 16], strides = [1, 1]} : vector<16x384xf32> to vector<16x16xf32>
    %311 = tpu.concatenate %309, %310 in 1 : vector<16x368xf32>, vector<16x16xf32> -> vector<16x384xf32>
    %c112_114 = arith.constant 112 : index
    %c0_115 = arith.constant 0 : index
    %312 = vector.load %arg15[%c112_114, %c0_115] : memref<144x384xf32, #tpu.memory_space<vmem>>, vector<16x384xf32>
    tpu.vector_store %arg15[%c112_114, %c0_115], %311 {strides = array<i32>} : memref<144x384xf32, #tpu.memory_space<vmem>>, vector<16x384xf32>,
    %313 = vector.extract_strided_slice %273 {offsets = [0, 17], sizes = [16, 367], strides = [1, 1]} : vector<16x384xf32> to vector<16x367xf32>
    %314 = vector.extract_strided_slice %273 {offsets = [0, 0], sizes = [16, 17], strides = [1, 1]} : vector<16x384xf32> to vector<16x17xf32>
    %315 = tpu.concatenate %313, %314 in 1 : vector<16x367xf32>, vector<16x17xf32> -> vector<16x384xf32>
    %316 = vector.broadcast %76 : vector<1x384xf32> to vector<16x384xf32>
    %317 = arith.mulf %315, %316 : vector<16x384xf32>
    %c128_116 = arith.constant 128 : index
    %c0_117 = arith.constant 0 : index
    %318 = vector.load %arg15[%c128_116, %c0_117] : memref<144x384xf32, #tpu.memory_space<vmem>>, vector<16x384xf32>
    tpu.vector_store %arg15[%c128_116, %c0_117], %317 {strides = array<i32>} : memref<144x384xf32, #tpu.memory_space<vmem>>, vector<16x384xf32>,
    %c16_118 = arith.constant 16 : index
    %c0_119 = arith.constant 0 : index
    %319 = vector.load %arg5[%c16_118, %c0_119] : memref<48x144xf32, #tpu.memory_space<vmem>>, vector<16x144xf32>
    %c0_120 = arith.constant 0 : index
    %c0_121 = arith.constant 0 : index
    %320 = vector.load %arg15[%c0_120, %c0_121] : memref<144x384xf32, #tpu.memory_space<vmem>>, vector<144x384xf32>
    %cst_122 = arith.constant dense<0.000000e+00> : vector<16x384xf32>
    %321 = tpu.matmul %319, %320, %cst_122 {dimension_numbers = #tpu.dot_dimension_numbers<[1], [0], [0], [1], [0, 0, 1, 1], [], []>} : vector<16x144xf32>, vector<144x384xf32>, vector<16x384xf32> -> vector<16x384xf32>
    %c16_123 = arith.constant 16 : index
    %c0_124 = arith.constant 0 : index
    %322 = vector.load %arg6[%c16_123, %c0_124] : memref<48x1xf32, #tpu.memory_space<vmem>>, vector<16x1xf32>
    %323 = vector.broadcast %322 : vector<16x1xf32> to vector<16x384xf32>
    %324 = arith.addf %321, %323 : vector<16x384xf32>
    %cst_125 = arith.constant 0.000000e+00 : f32
    %325 = vector.broadcast %cst_125 : f32 to vector<16x384xf32>
    %326 = arith.cmpf oge, %324, %325 : vector<16x384xf32>
    %cst_126 = arith.constant 2.000000e-01 : f32
    %327 = vector.broadcast %cst_126 : f32 to vector<16x384xf32>
    %328 = arith.mulf %327, %324 : vector<16x384xf32>
    %329 = arith.select %326, %324, %328 : vector<16x384xi1>, vector<16x384xf32>
    %c16_127 = arith.constant 16 : index
    %c0_128 = arith.constant 0 : index
    %330 = vector.load %arg14[%c16_127, %c0_128] : memref<48x384xf32, #tpu.memory_space<vmem>>, vector<16x384xf32>
    tpu.vector_store %arg14[%c16_127, %c0_128], %329 {strides = array<i32>} : memref<48x384xf32, #tpu.memory_space<vmem>>, vector<16x384xf32>,
    %c32_129 = arith.constant 32 : index
    %c0_130 = arith.constant 0 : index
    %331 = vector.load %arg13[%c32_129, %c0_130] : memref<48x384xf32, #tpu.memory_space<vmem>>, vector<16x384xf32>
    %332 = vector.extract_strided_slice %331 {offsets = [0, 367], sizes = [16, 17], strides = [1, 1]} : vector<16x384xf32> to vector<16x17xf32>
    %333 = vector.extract_strided_slice %331 {offsets = [0, 0], sizes = [16, 367], strides = [1, 1]} : vector<16x384xf32> to vector<16x367xf32>
    %334 = tpu.concatenate %332, %333 in 1 : vector<16x17xf32>, vector<16x367xf32> -> vector<16x384xf32>
    %335 = vector.broadcast %21 : vector<1x384xf32> to vector<16x384xf32>
    %336 = arith.mulf %334, %335 : vector<16x384xf32>
    %c0_131 = arith.constant 0 : index
    %c0_132 = arith.constant 0 : index
    %337 = vector.load %arg15[%c0_131, %c0_132] : memref<144x384xf32, #tpu.memory_space<vmem>>, vector<16x384xf32>
    tpu.vector_store %arg15[%c0_131, %c0_132], %336 {strides = array<i32>} : memref<144x384xf32, #tpu.memory_space<vmem>>, vector<16x384xf32>,
    %338 = vector.extract_strided_slice %331 {offsets = [0, 368], sizes = [16, 16], strides = [1, 1]} : vector<16x384xf32> to vector<16x16xf32>
    %339 = vector.extract_strided_slice %331 {offsets = [0, 0], sizes = [16, 368], strides = [1, 1]} : vector<16x384xf32> to vector<16x368xf32>
    %340 = tpu.concatenate %338, %339 in 1 : vector<16x16xf32>, vector<16x368xf32> -> vector<16x384xf32>
    %c16_133 = arith.constant 16 : index
    %c0_134 = arith.constant 0 : index
    %341 = vector.load %arg15[%c16_133, %c0_134] : memref<144x384xf32, #tpu.memory_space<vmem>>, vector<16x384xf32>
    tpu.vector_store %arg15[%c16_133, %c0_134], %340 {strides = array<i32>} : memref<144x384xf32, #tpu.memory_space<vmem>>, vector<16x384xf32>,
    %342 = vector.extract_strided_slice %331 {offsets = [0, 369], sizes = [16, 15], strides = [1, 1]} : vector<16x384xf32> to vector<16x15xf32>
    %343 = vector.extract_strided_slice %331 {offsets = [0, 0], sizes = [16, 369], strides = [1, 1]} : vector<16x384xf32> to vector<16x369xf32>
    %344 = tpu.concatenate %342, %343 in 1 : vector<16x15xf32>, vector<16x369xf32> -> vector<16x384xf32>
    %345 = vector.broadcast %32 : vector<1x384xf32> to vector<16x384xf32>
    %346 = arith.mulf %344, %345 : vector<16x384xf32>
    %c32_135 = arith.constant 32 : index
    %c0_136 = arith.constant 0 : index
    %347 = vector.load %arg15[%c32_135, %c0_136] : memref<144x384xf32, #tpu.memory_space<vmem>>, vector<16x384xf32>
    tpu.vector_store %arg15[%c32_135, %c0_136], %346 {strides = array<i32>} : memref<144x384xf32, #tpu.memory_space<vmem>>, vector<16x384xf32>,
    %348 = vector.extract_strided_slice %331 {offsets = [0, 383], sizes = [16, 1], strides = [1, 1]} : vector<16x384xf32> to vector<16x1xf32>
    %349 = vector.extract_strided_slice %331 {offsets = [0, 0], sizes = [16, 383], strides = [1, 1]} : vector<16x384xf32> to vector<16x383xf32>
    %350 = tpu.concatenate %348, %349 in 1 : vector<16x1xf32>, vector<16x383xf32> -> vector<16x384xf32>
    %351 = vector.broadcast %43 : vector<1x384xf32> to vector<16x384xf32>
    %352 = arith.mulf %350, %351 : vector<16x384xf32>
    %c48_137 = arith.constant 48 : index
    %c0_138 = arith.constant 0 : index
    %353 = vector.load %arg15[%c48_137, %c0_138] : memref<144x384xf32, #tpu.memory_space<vmem>>, vector<16x384xf32>
    tpu.vector_store %arg15[%c48_137, %c0_138], %352 {strides = array<i32>} : memref<144x384xf32, #tpu.memory_space<vmem>>, vector<16x384xf32>,
    %c64_139 = arith.constant 64 : index
    %c0_140 = arith.constant 0 : index
    %354 = vector.load %arg15[%c64_139, %c0_140] : memref<144x384xf32, #tpu.memory_space<vmem>>, vector<16x384xf32>
    tpu.vector_store %arg15[%c64_139, %c0_140], %331 {strides = array<i32>} : memref<144x384xf32, #tpu.memory_space<vmem>>, vector<16x384xf32>,
    %355 = vector.extract_strided_slice %331 {offsets = [0, 1], sizes = [16, 383], strides = [1, 1]} : vector<16x384xf32> to vector<16x383xf32>
    %356 = vector.extract_strided_slice %331 {offsets = [0, 0], sizes = [16, 1], strides = [1, 1]} : vector<16x384xf32> to vector<16x1xf32>
    %357 = tpu.concatenate %355, %356 in 1 : vector<16x383xf32>, vector<16x1xf32> -> vector<16x384xf32>
    %358 = vector.broadcast %54 : vector<1x384xf32> to vector<16x384xf32>
    %359 = arith.mulf %357, %358 : vector<16x384xf32>
    %c80_141 = arith.constant 80 : index
    %c0_142 = arith.constant 0 : index
    %360 = vector.load %arg15[%c80_141, %c0_142] : memref<144x384xf32, #tpu.memory_space<vmem>>, vector<16x384xf32>
    tpu.vector_store %arg15[%c80_141, %c0_142], %359 {strides = array<i32>} : memref<144x384xf32, #tpu.memory_space<vmem>>, vector<16x384xf32>,
    %361 = vector.extract_strided_slice %331 {offsets = [0, 15], sizes = [16, 369], strides = [1, 1]} : vector<16x384xf32> to vector<16x369xf32>
    %362 = vector.extract_strided_slice %331 {offsets = [0, 0], sizes = [16, 15], strides = [1, 1]} : vector<16x384xf32> to vector<16x15xf32>
    %363 = tpu.concatenate %361, %362 in 1 : vector<16x369xf32>, vector<16x15xf32> -> vector<16x384xf32>
    %364 = vector.broadcast %65 : vector<1x384xf32> to vector<16x384xf32>
    %365 = arith.mulf %363, %364 : vector<16x384xf32>
    %c96_143 = arith.constant 96 : index
    %c0_144 = arith.constant 0 : index
    %366 = vector.load %arg15[%c96_143, %c0_144] : memref<144x384xf32, #tpu.memory_space<vmem>>, vector<16x384xf32>
    tpu.vector_store %arg15[%c96_143, %c0_144], %365 {strides = array<i32>} : memref<144x384xf32, #tpu.memory_space<vmem>>, vector<16x384xf32>,
    %367 = vector.extract_strided_slice %331 {offsets = [0, 16], sizes = [16, 368], strides = [1, 1]} : vector<16x384xf32> to vector<16x368xf32>
    %368 = vector.extract_strided_slice %331 {offsets = [0, 0], sizes = [16, 16], strides = [1, 1]} : vector<16x384xf32> to vector<16x16xf32>
    %369 = tpu.concatenate %367, %368 in 1 : vector<16x368xf32>, vector<16x16xf32> -> vector<16x384xf32>
    %c112_145 = arith.constant 112 : index
    %c0_146 = arith.constant 0 : index
    %370 = vector.load %arg15[%c112_145, %c0_146] : memref<144x384xf32, #tpu.memory_space<vmem>>, vector<16x384xf32>
    tpu.vector_store %arg15[%c112_145, %c0_146], %369 {strides = array<i32>} : memref<144x384xf32, #tpu.memory_space<vmem>>, vector<16x384xf32>,
    %371 = vector.extract_strided_slice %331 {offsets = [0, 17], sizes = [16, 367], strides = [1, 1]} : vector<16x384xf32> to vector<16x367xf32>
    %372 = vector.extract_strided_slice %331 {offsets = [0, 0], sizes = [16, 17], strides = [1, 1]} : vector<16x384xf32> to vector<16x17xf32>
    %373 = tpu.concatenate %371, %372 in 1 : vector<16x367xf32>, vector<16x17xf32> -> vector<16x384xf32>
    %374 = vector.broadcast %76 : vector<1x384xf32> to vector<16x384xf32>
    %375 = arith.mulf %373, %374 : vector<16x384xf32>
    %c128_147 = arith.constant 128 : index
    %c0_148 = arith.constant 0 : index
    %376 = vector.load %arg15[%c128_147, %c0_148] : memref<144x384xf32, #tpu.memory_space<vmem>>, vector<16x384xf32>
    tpu.vector_store %arg15[%c128_147, %c0_148], %375 {strides = array<i32>} : memref<144x384xf32, #tpu.memory_space<vmem>>, vector<16x384xf32>,
    %c32_149 = arith.constant 32 : index
    %c0_150 = arith.constant 0 : index
    %377 = vector.load %arg5[%c32_149, %c0_150] : memref<48x144xf32, #tpu.memory_space<vmem>>, vector<16x144xf32>
    %c0_151 = arith.constant 0 : index
    %c0_152 = arith.constant 0 : index
    %378 = vector.load %arg15[%c0_151, %c0_152] : memref<144x384xf32, #tpu.memory_space<vmem>>, vector<144x384xf32>
    %cst_153 = arith.constant dense<0.000000e+00> : vector<16x384xf32>
    %379 = tpu.matmul %377, %378, %cst_153 {dimension_numbers = #tpu.dot_dimension_numbers<[1], [0], [0], [1], [0, 0, 1, 1], [], []>} : vector<16x144xf32>, vector<144x384xf32>, vector<16x384xf32> -> vector<16x384xf32>
    %c32_154 = arith.constant 32 : index
    %c0_155 = arith.constant 0 : index
    %380 = vector.load %arg6[%c32_154, %c0_155] : memref<48x1xf32, #tpu.memory_space<vmem>>, vector<16x1xf32>
    %381 = vector.broadcast %380 : vector<16x1xf32> to vector<16x384xf32>
    %382 = arith.addf %379, %381 : vector<16x384xf32>
    %cst_156 = arith.constant 0.000000e+00 : f32
    %383 = vector.broadcast %cst_156 : f32 to vector<16x384xf32>
    %384 = arith.cmpf oge, %382, %383 : vector<16x384xf32>
    %cst_157 = arith.constant 2.000000e-01 : f32
    %385 = vector.broadcast %cst_157 : f32 to vector<16x384xf32>
    %386 = arith.mulf %385, %382 : vector<16x384xf32>
    %387 = arith.select %384, %382, %386 : vector<16x384xi1>, vector<16x384xf32>
    %c32_158 = arith.constant 32 : index
    %c0_159 = arith.constant 0 : index
    %388 = vector.load %arg14[%c32_158, %c0_159] : memref<48x384xf32, #tpu.memory_space<vmem>>, vector<16x384xf32>
    tpu.vector_store %arg14[%c32_158, %c0_159], %387 {strides = array<i32>} : memref<48x384xf32, #tpu.memory_space<vmem>>, vector<16x384xf32>,
    %c0_160 = arith.constant 0 : index
    %c0_161 = arith.constant 0 : index
    %389 = vector.load %arg7[%c0_160, %c0_161] : memref<16x48xf32, #tpu.memory_space<vmem>>, vector<16x48xf32>
    %c0_162 = arith.constant 0 : index
    %c0_163 = arith.constant 0 : index
    %390 = vector.load %arg14[%c0_162, %c0_163] : memref<48x384xf32, #tpu.memory_space<vmem>>, vector<48x384xf32>
    %cst_164 = arith.constant dense<0.000000e+00> : vector<16x384xf32>
    %391 = tpu.matmul %389, %390, %cst_164 {dimension_numbers = #tpu.dot_dimension_numbers<[1], [0], [0], [1], [0, 0, 1, 1], [], []>} : vector<16x48xf32>, vector<48x384xf32>, vector<16x384xf32> -> vector<16x384xf32>
    %c0_165 = arith.constant 0 : index
    %c0_166 = arith.constant 0 : index
    %392 = vector.load %arg8[%c0_165, %c0_166] : memref<16x1xf32, #tpu.memory_space<vmem>>, vector<16x1xf32>
    %393 = vector.broadcast %392 : vector<16x1xf32> to vector<16x384xf32>
    %394 = arith.addf %391, %393 : vector<16x384xf32>
    %cst_167 = arith.constant 0.000000e+00 : f32
    %395 = vector.broadcast %cst_167 : f32 to vector<16x384xf32>
    %396 = arith.cmpf oge, %394, %395 : vector<16x384xf32>
    %cst_168 = arith.constant 2.000000e-01 : f32
    %397 = vector.broadcast %cst_168 : f32 to vector<16x384xf32>
    %398 = arith.mulf %397, %394 : vector<16x384xf32>
    %399 = arith.select %396, %394, %398 : vector<16x384xi1>, vector<16x384xf32>
    %400 = vector.extract_strided_slice %399 {offsets = [0, 367], sizes = [16, 17], strides = [1, 1]} : vector<16x384xf32> to vector<16x17xf32>
    %401 = vector.extract_strided_slice %399 {offsets = [0, 0], sizes = [16, 367], strides = [1, 1]} : vector<16x384xf32> to vector<16x367xf32>
    %402 = tpu.concatenate %400, %401 in 1 : vector<16x17xf32>, vector<16x367xf32> -> vector<16x384xf32>
    %403 = vector.extract_strided_slice %402 {offsets = [0, 128], sizes = [16, 128], strides = [1, 1]} : vector<16x384xf32> to vector<16x128xf32>
    %404 = vector.broadcast %99 : vector<1x128xf32> to vector<16x128xf32>
    %405 = arith.mulf %403, %404 : vector<16x128xf32>
    %c0_169 = arith.constant 0 : index
    %c0_170 = arith.constant 0 : index
    %406 = vector.load %arg16[%c0_169, %c0_170] : memref<144x128xf32, #tpu.memory_space<vmem>>, vector<16x128xf32>
    tpu.vector_store %arg16[%c0_169, %c0_170], %405 {strides = array<i32>} : memref<144x128xf32, #tpu.memory_space<vmem>>, vector<16x128xf32>,
    %407 = vector.extract_strided_slice %399 {offsets = [0, 368], sizes = [16, 16], strides = [1, 1]} : vector<16x384xf32> to vector<16x16xf32>
    %408 = vector.extract_strided_slice %399 {offsets = [0, 0], sizes = [16, 368], strides = [1, 1]} : vector<16x384xf32> to vector<16x368xf32>
    %409 = tpu.concatenate %407, %408 in 1 : vector<16x16xf32>, vector<16x368xf32> -> vector<16x384xf32>
    %410 = vector.extract_strided_slice %409 {offsets = [0, 128], sizes = [16, 128], strides = [1, 1]} : vector<16x384xf32> to vector<16x128xf32>
    %411 = vector.broadcast %110 : vector<1x128xf32> to vector<16x128xf32>
    %412 = arith.mulf %410, %411 : vector<16x128xf32>
    %c16_171 = arith.constant 16 : index
    %c0_172 = arith.constant 0 : index
    %413 = vector.load %arg16[%c16_171, %c0_172] : memref<144x128xf32, #tpu.memory_space<vmem>>, vector<16x128xf32>
    tpu.vector_store %arg16[%c16_171, %c0_172], %412 {strides = array<i32>} : memref<144x128xf32, #tpu.memory_space<vmem>>, vector<16x128xf32>,
    %414 = vector.extract_strided_slice %399 {offsets = [0, 369], sizes = [16, 15], strides = [1, 1]} : vector<16x384xf32> to vector<16x15xf32>
    %415 = vector.extract_strided_slice %399 {offsets = [0, 0], sizes = [16, 369], strides = [1, 1]} : vector<16x384xf32> to vector<16x369xf32>
    %416 = tpu.concatenate %414, %415 in 1 : vector<16x15xf32>, vector<16x369xf32> -> vector<16x384xf32>
    %417 = vector.extract_strided_slice %416 {offsets = [0, 128], sizes = [16, 128], strides = [1, 1]} : vector<16x384xf32> to vector<16x128xf32>
    %418 = vector.broadcast %133 : vector<1x128xf32> to vector<16x128xf32>
    %419 = arith.mulf %417, %418 : vector<16x128xf32>
    %c32_173 = arith.constant 32 : index
    %c0_174 = arith.constant 0 : index
    %420 = vector.load %arg16[%c32_173, %c0_174] : memref<144x128xf32, #tpu.memory_space<vmem>>, vector<16x128xf32>
    tpu.vector_store %arg16[%c32_173, %c0_174], %419 {strides = array<i32>} : memref<144x128xf32, #tpu.memory_space<vmem>>, vector<16x128xf32>,
    %421 = vector.extract_strided_slice %399 {offsets = [0, 383], sizes = [16, 1], strides = [1, 1]} : vector<16x384xf32> to vector<16x1xf32>
    %422 = vector.extract_strided_slice %399 {offsets = [0, 0], sizes = [16, 383], strides = [1, 1]} : vector<16x384xf32> to vector<16x383xf32>
    %423 = tpu.concatenate %421, %422 in 1 : vector<16x1xf32>, vector<16x383xf32> -> vector<16x384xf32>
    %424 = vector.extract_strided_slice %423 {offsets = [0, 128], sizes = [16, 128], strides = [1, 1]} : vector<16x384xf32> to vector<16x128xf32>
    %425 = vector.broadcast %144 : vector<1x128xf32> to vector<16x128xf32>
    %426 = arith.mulf %424, %425 : vector<16x128xf32>
    %c48_175 = arith.constant 48 : index
    %c0_176 = arith.constant 0 : index
    %427 = vector.load %arg16[%c48_175, %c0_176] : memref<144x128xf32, #tpu.memory_space<vmem>>, vector<16x128xf32>
    tpu.vector_store %arg16[%c48_175, %c0_176], %426 {strides = array<i32>} : memref<144x128xf32, #tpu.memory_space<vmem>>, vector<16x128xf32>,
    %428 = vector.extract_strided_slice %399 {offsets = [0, 128], sizes = [16, 128], strides = [1, 1]} : vector<16x384xf32> to vector<16x128xf32>
    %c64_177 = arith.constant 64 : index
    %c0_178 = arith.constant 0 : index
    %429 = vector.load %arg16[%c64_177, %c0_178] : memref<144x128xf32, #tpu.memory_space<vmem>>, vector<16x128xf32>
    tpu.vector_store %arg16[%c64_177, %c0_178], %428 {strides = array<i32>} : memref<144x128xf32, #tpu.memory_space<vmem>>, vector<16x128xf32>,
    %430 = vector.extract_strided_slice %399 {offsets = [0, 1], sizes = [16, 383], strides = [1, 1]} : vector<16x384xf32> to vector<16x383xf32>
    %431 = vector.extract_strided_slice %399 {offsets = [0, 0], sizes = [16, 1], strides = [1, 1]} : vector<16x384xf32> to vector<16x1xf32>
    %432 = tpu.concatenate %430, %431 in 1 : vector<16x383xf32>, vector<16x1xf32> -> vector<16x384xf32>
    %433 = vector.extract_strided_slice %432 {offsets = [0, 128], sizes = [16, 128], strides = [1, 1]} : vector<16x384xf32> to vector<16x128xf32>
    %434 = vector.broadcast %155 : vector<1x128xf32> to vector<16x128xf32>
    %435 = arith.mulf %433, %434 : vector<16x128xf32>
    %c80_179 = arith.constant 80 : index
    %c0_180 = arith.constant 0 : index
    %436 = vector.load %arg16[%c80_179, %c0_180] : memref<144x128xf32, #tpu.memory_space<vmem>>, vector<16x128xf32>
    tpu.vector_store %arg16[%c80_179, %c0_180], %435 {strides = array<i32>} : memref<144x128xf32, #tpu.memory_space<vmem>>, vector<16x128xf32>,
    %437 = vector.extract_strided_slice %399 {offsets = [0, 15], sizes = [16, 369], strides = [1, 1]} : vector<16x384xf32> to vector<16x369xf32>
    %438 = vector.extract_strided_slice %399 {offsets = [0, 0], sizes = [16, 15], strides = [1, 1]} : vector<16x384xf32> to vector<16x15xf32>
    %439 = tpu.concatenate %437, %438 in 1 : vector<16x369xf32>, vector<16x15xf32> -> vector<16x384xf32>
    %440 = vector.extract_strided_slice %439 {offsets = [0, 128], sizes = [16, 128], strides = [1, 1]} : vector<16x384xf32> to vector<16x128xf32>
    %441 = vector.broadcast %178 : vector<1x128xf32> to vector<16x128xf32>
    %442 = arith.mulf %440, %441 : vector<16x128xf32>
    %c96_181 = arith.constant 96 : index
    %c0_182 = arith.constant 0 : index
    %443 = vector.load %arg16[%c96_181, %c0_182] : memref<144x128xf32, #tpu.memory_space<vmem>>, vector<16x128xf32>
    tpu.vector_store %arg16[%c96_181, %c0_182], %442 {strides = array<i32>} : memref<144x128xf32, #tpu.memory_space<vmem>>, vector<16x128xf32>,
    %444 = vector.extract_strided_slice %399 {offsets = [0, 16], sizes = [16, 368], strides = [1, 1]} : vector<16x384xf32> to vector<16x368xf32>
    %445 = vector.extract_strided_slice %399 {offsets = [0, 0], sizes = [16, 16], strides = [1, 1]} : vector<16x384xf32> to vector<16x16xf32>
    %446 = tpu.concatenate %444, %445 in 1 : vector<16x368xf32>, vector<16x16xf32> -> vector<16x384xf32>
    %447 = vector.extract_strided_slice %446 {offsets = [0, 128], sizes = [16, 128], strides = [1, 1]} : vector<16x384xf32> to vector<16x128xf32>
    %448 = vector.broadcast %189 : vector<1x128xf32> to vector<16x128xf32>
    %449 = arith.mulf %447, %448 : vector<16x128xf32>
    %c112_183 = arith.constant 112 : index
    %c0_184 = arith.constant 0 : index
    %450 = vector.load %arg16[%c112_183, %c0_184] : memref<144x128xf32, #tpu.memory_space<vmem>>, vector<16x128xf32>
    tpu.vector_store %arg16[%c112_183, %c0_184], %449 {strides = array<i32>} : memref<144x128xf32, #tpu.memory_space<vmem>>, vector<16x128xf32>,
    %451 = vector.extract_strided_slice %399 {offsets = [0, 17], sizes = [16, 367], strides = [1, 1]} : vector<16x384xf32> to vector<16x367xf32>
    %452 = vector.extract_strided_slice %399 {offsets = [0, 0], sizes = [16, 17], strides = [1, 1]} : vector<16x384xf32> to vector<16x17xf32>
    %453 = tpu.concatenate %451, %452 in 1 : vector<16x367xf32>, vector<16x17xf32> -> vector<16x384xf32>
    %454 = vector.extract_strided_slice %453 {offsets = [0, 128], sizes = [16, 128], strides = [1, 1]} : vector<16x384xf32> to vector<16x128xf32>
    %455 = vector.broadcast %212 : vector<1x128xf32> to vector<16x128xf32>
    %456 = arith.mulf %454, %455 : vector<16x128xf32>
    %c128_185 = arith.constant 128 : index
    %c0_186 = arith.constant 0 : index
    %457 = vector.load %arg16[%c128_185, %c0_186] : memref<144x128xf32, #tpu.memory_space<vmem>>, vector<16x128xf32>
    tpu.vector_store %arg16[%c128_185, %c0_186], %456 {strides = array<i32>} : memref<144x128xf32, #tpu.memory_space<vmem>>, vector<16x128xf32>,
    %c0_187 = arith.constant 0 : index
    %c0_188 = arith.constant 0 : index
    %458 = vector.load %arg9[%c0_187, %c0_188] : memref<48x144xf32, #tpu.memory_space<vmem>>, vector<48x144xf32>
    %c0_189 = arith.constant 0 : index
    %c0_190 = arith.constant 0 : index
    %459 = vector.load %arg16[%c0_189, %c0_190] : memref<144x128xf32, #tpu.memory_space<vmem>>, vector<144x128xf32>
    %cst_191 = arith.constant dense<0.000000e+00> : vector<48x128xf32>
    %460 = tpu.matmul %458, %459, %cst_191 {dimension_numbers = #tpu.dot_dimension_numbers<[1], [0], [0], [1], [0, 0, 1, 1], [], []>} : vector<48x144xf32>, vector<144x128xf32>, vector<48x128xf32> -> vector<48x128xf32>
    %c0_192 = arith.constant 0 : index
    %c0_193 = arith.constant 0 : index
    %461 = vector.load %arg14[%c0_192, %c0_193] : memref<48x384xf32, #tpu.memory_space<vmem>>, vector<16x384xf32>
    %462 = vector.extract_strided_slice %461 {offsets = [0, 367], sizes = [16, 17], strides = [1, 1]} : vector<16x384xf32> to vector<16x17xf32>
    %463 = vector.extract_strided_slice %461 {offsets = [0, 0], sizes = [16, 367], strides = [1, 1]} : vector<16x384xf32> to vector<16x367xf32>
    %464 = tpu.concatenate %462, %463 in 1 : vector<16x17xf32>, vector<16x367xf32> -> vector<16x384xf32>
    %465 = vector.extract_strided_slice %464 {offsets = [0, 128], sizes = [16, 128], strides = [1, 1]} : vector<16x384xf32> to vector<16x128xf32>
    %466 = vector.broadcast %99 : vector<1x128xf32> to vector<16x128xf32>
    %467 = arith.mulf %465, %466 : vector<16x128xf32>
    %c0_194 = arith.constant 0 : index
    %c0_195 = arith.constant 0 : index
    %468 = vector.load %arg16[%c0_194, %c0_195] : memref<144x128xf32, #tpu.memory_space<vmem>>, vector<16x128xf32>
    tpu.vector_store %arg16[%c0_194, %c0_195], %467 {strides = array<i32>} : memref<144x128xf32, #tpu.memory_space<vmem>>, vector<16x128xf32>,
    %469 = vector.extract_strided_slice %461 {offsets = [0, 368], sizes = [16, 16], strides = [1, 1]} : vector<16x384xf32> to vector<16x16xf32>
    %470 = vector.extract_strided_slice %461 {offsets = [0, 0], sizes = [16, 368], strides = [1, 1]} : vector<16x384xf32> to vector<16x368xf32>
    %471 = tpu.concatenate %469, %470 in 1 : vector<16x16xf32>, vector<16x368xf32> -> vector<16x384xf32>
    %472 = vector.extract_strided_slice %471 {offsets = [0, 128], sizes = [16, 128], strides = [1, 1]} : vector<16x384xf32> to vector<16x128xf32>
    %473 = vector.broadcast %110 : vector<1x128xf32> to vector<16x128xf32>
    %474 = arith.mulf %472, %473 : vector<16x128xf32>
    %c16_196 = arith.constant 16 : index
    %c0_197 = arith.constant 0 : index
    %475 = vector.load %arg16[%c16_196, %c0_197] : memref<144x128xf32, #tpu.memory_space<vmem>>, vector<16x128xf32>
    tpu.vector_store %arg16[%c16_196, %c0_197], %474 {strides = array<i32>} : memref<144x128xf32, #tpu.memory_space<vmem>>, vector<16x128xf32>,
    %476 = vector.extract_strided_slice %461 {offsets = [0, 369], sizes = [16, 15], strides = [1, 1]} : vector<16x384xf32> to vector<16x15xf32>
    %477 = vector.extract_strided_slice %461 {offsets = [0, 0], sizes = [16, 369], strides = [1, 1]} : vector<16x384xf32> to vector<16x369xf32>
    %478 = tpu.concatenate %476, %477 in 1 : vector<16x15xf32>, vector<16x369xf32> -> vector<16x384xf32>
    %479 = vector.extract_strided_slice %478 {offsets = [0, 128], sizes = [16, 128], strides = [1, 1]} : vector<16x384xf32> to vector<16x128xf32>
    %480 = vector.broadcast %133 : vector<1x128xf32> to vector<16x128xf32>
    %481 = arith.mulf %479, %480 : vector<16x128xf32>
    %c32_198 = arith.constant 32 : index
    %c0_199 = arith.constant 0 : index
    %482 = vector.load %arg16[%c32_198, %c0_199] : memref<144x128xf32, #tpu.memory_space<vmem>>, vector<16x128xf32>
    tpu.vector_store %arg16[%c32_198, %c0_199], %481 {strides = array<i32>} : memref<144x128xf32, #tpu.memory_space<vmem>>, vector<16x128xf32>,
    %483 = vector.extract_strided_slice %461 {offsets = [0, 383], sizes = [16, 1], strides = [1, 1]} : vector<16x384xf32> to vector<16x1xf32>
    %484 = vector.extract_strided_slice %461 {offsets = [0, 0], sizes = [16, 383], strides = [1, 1]} : vector<16x384xf32> to vector<16x383xf32>
    %485 = tpu.concatenate %483, %484 in 1 : vector<16x1xf32>, vector<16x383xf32> -> vector<16x384xf32>
    %486 = vector.extract_strided_slice %485 {offsets = [0, 128], sizes = [16, 128], strides = [1, 1]} : vector<16x384xf32> to vector<16x128xf32>
    %487 = vector.broadcast %144 : vector<1x128xf32> to vector<16x128xf32>
    %488 = arith.mulf %486, %487 : vector<16x128xf32>
    %c48_200 = arith.constant 48 : index
    %c0_201 = arith.constant 0 : index
    %489 = vector.load %arg16[%c48_200, %c0_201] : memref<144x128xf32, #tpu.memory_space<vmem>>, vector<16x128xf32>
    tpu.vector_store %arg16[%c48_200, %c0_201], %488 {strides = array<i32>} : memref<144x128xf32, #tpu.memory_space<vmem>>, vector<16x128xf32>,
    %490 = vector.extract_strided_slice %461 {offsets = [0, 128], sizes = [16, 128], strides = [1, 1]} : vector<16x384xf32> to vector<16x128xf32>
    %c64_202 = arith.constant 64 : index
    %c0_203 = arith.constant 0 : index
    %491 = vector.load %arg16[%c64_202, %c0_203] : memref<144x128xf32, #tpu.memory_space<vmem>>, vector<16x128xf32>
    tpu.vector_store %arg16[%c64_202, %c0_203], %490 {strides = array<i32>} : memref<144x128xf32, #tpu.memory_space<vmem>>, vector<16x128xf32>,
    %492 = vector.extract_strided_slice %461 {offsets = [0, 1], sizes = [16, 383], strides = [1, 1]} : vector<16x384xf32> to vector<16x383xf32>
    %493 = vector.extract_strided_slice %461 {offsets = [0, 0], sizes = [16, 1], strides = [1, 1]} : vector<16x384xf32> to vector<16x1xf32>
    %494 = tpu.concatenate %492, %493 in 1 : vector<16x383xf32>, vector<16x1xf32> -> vector<16x384xf32>
    %495 = vector.extract_strided_slice %494 {offsets = [0, 128], sizes = [16, 128], strides = [1, 1]} : vector<16x384xf32> to vector<16x128xf32>
    %496 = vector.broadcast %155 : vector<1x128xf32> to vector<16x128xf32>
    %497 = arith.mulf %495, %496 : vector<16x128xf32>
    %c80_204 = arith.constant 80 : index
    %c0_205 = arith.constant 0 : index
    %498 = vector.load %arg16[%c80_204, %c0_205] : memref<144x128xf32, #tpu.memory_space<vmem>>, vector<16x128xf32>
    tpu.vector_store %arg16[%c80_204, %c0_205], %497 {strides = array<i32>} : memref<144x128xf32, #tpu.memory_space<vmem>>, vector<16x128xf32>,
    %499 = vector.extract_strided_slice %461 {offsets = [0, 15], sizes = [16, 369], strides = [1, 1]} : vector<16x384xf32> to vector<16x369xf32>
    %500 = vector.extract_strided_slice %461 {offsets = [0, 0], sizes = [16, 15], strides = [1, 1]} : vector<16x384xf32> to vector<16x15xf32>
    %501 = tpu.concatenate %499, %500 in 1 : vector<16x369xf32>, vector<16x15xf32> -> vector<16x384xf32>
    %502 = vector.extract_strided_slice %501 {offsets = [0, 128], sizes = [16, 128], strides = [1, 1]} : vector<16x384xf32> to vector<16x128xf32>
    %503 = vector.broadcast %178 : vector<1x128xf32> to vector<16x128xf32>
    %504 = arith.mulf %502, %503 : vector<16x128xf32>
    %c96_206 = arith.constant 96 : index
    %c0_207 = arith.constant 0 : index
    %505 = vector.load %arg16[%c96_206, %c0_207] : memref<144x128xf32, #tpu.memory_space<vmem>>, vector<16x128xf32>
    tpu.vector_store %arg16[%c96_206, %c0_207], %504 {strides = array<i32>} : memref<144x128xf32, #tpu.memory_space<vmem>>, vector<16x128xf32>,
    %506 = vector.extract_strided_slice %461 {offsets = [0, 16], sizes = [16, 368], strides = [1, 1]} : vector<16x384xf32> to vector<16x368xf32>
    %507 = vector.extract_strided_slice %461 {offsets = [0, 0], sizes = [16, 16], strides = [1, 1]} : vector<16x384xf32> to vector<16x16xf32>
    %508 = tpu.concatenate %506, %507 in 1 : vector<16x368xf32>, vector<16x16xf32> -> vector<16x384xf32>
    %509 = vector.extract_strided_slice %508 {offsets = [0, 128], sizes = [16, 128], strides = [1, 1]} : vector<16x384xf32> to vector<16x128xf32>
    %510 = vector.broadcast %189 : vector<1x128xf32> to vector<16x128xf32>
    %511 = arith.mulf %509, %510 : vector<16x128xf32>
    %c112_208 = arith.constant 112 : index
    %c0_209 = arith.constant 0 : index
    %512 = vector.load %arg16[%c112_208, %c0_209] : memref<144x128xf32, #tpu.memory_space<vmem>>, vector<16x128xf32>
    tpu.vector_store %arg16[%c112_208, %c0_209], %511 {strides = array<i32>} : memref<144x128xf32, #tpu.memory_space<vmem>>, vector<16x128xf32>,
    %513 = vector.extract_strided_slice %461 {offsets = [0, 17], sizes = [16, 367], strides = [1, 1]} : vector<16x384xf32> to vector<16x367xf32>
    %514 = vector.extract_strided_slice %461 {offsets = [0, 0], sizes = [16, 17], strides = [1, 1]} : vector<16x384xf32> to vector<16x17xf32>
    %515 = tpu.concatenate %513, %514 in 1 : vector<16x367xf32>, vector<16x17xf32> -> vector<16x384xf32>
    %516 = vector.extract_strided_slice %515 {offsets = [0, 128], sizes = [16, 128], strides = [1, 1]} : vector<16x384xf32> to vector<16x128xf32>
    %517 = vector.broadcast %212 : vector<1x128xf32> to vector<16x128xf32>
    %518 = arith.mulf %516, %517 : vector<16x128xf32>
    %c128_210 = arith.constant 128 : index
    %c0_211 = arith.constant 0 : index
    %519 = vector.load %arg16[%c128_210, %c0_211] : memref<144x128xf32, #tpu.memory_space<vmem>>, vector<16x128xf32>
    tpu.vector_store %arg16[%c128_210, %c0_211], %518 {strides = array<i32>} : memref<144x128xf32, #tpu.memory_space<vmem>>, vector<16x128xf32>,
    %520 = vector.extract_strided_slice %460 {offsets = [0, 0], sizes = [16, 128], strides = [1, 1]} : vector<48x128xf32> to vector<16x128xf32>
    %c0_212 = arith.constant 0 : index
    %c0_213 = arith.constant 0 : index
    %521 = vector.load %arg10[%c0_212, %c0_213] : memref<48x144xf32, #tpu.memory_space<vmem>>, vector<16x144xf32>
    %c0_214 = arith.constant 0 : index
    %c0_215 = arith.constant 0 : index
    %522 = vector.load %arg16[%c0_214, %c0_215] : memref<144x128xf32, #tpu.memory_space<vmem>>, vector<144x128xf32>
    %cst_216 = arith.constant dense<0.000000e+00> : vector<16x128xf32>
    %523 = tpu.matmul %521, %522, %cst_216 {dimension_numbers = #tpu.dot_dimension_numbers<[1], [0], [0], [1], [0, 0, 1, 1], [], []>} : vector<16x144xf32>, vector<144x128xf32>, vector<16x128xf32> -> vector<16x128xf32>
    %524 = arith.addf %520, %523 : vector<16x128xf32>
    %c0_217 = arith.constant 0 : index
    %c0_218 = arith.constant 0 : index
    %525 = vector.load %arg11[%c0_217, %c0_218] : memref<48x1xf32, #tpu.memory_space<vmem>>, vector<16x1xf32>
    %526 = vector.broadcast %525 : vector<16x1xf32> to vector<16x128xf32>
    %527 = arith.addf %524, %526 : vector<16x128xf32>
    %cst_219 = arith.constant 0.000000e+00 : f32
    %528 = vector.broadcast %cst_219 : f32 to vector<16x128xf32>
    %529 = arith.cmpf oge, %527, %528 : vector<16x128xf32>
    %cst_220 = arith.constant 2.000000e-01 : f32
    %530 = vector.broadcast %cst_220 : f32 to vector<16x128xf32>
    %531 = arith.mulf %530, %527 : vector<16x128xf32>
    %532 = arith.select %529, %527, %531 : vector<16x128xi1>, vector<16x128xf32>
    %c0_221 = arith.constant 0 : index
    %c128_222 = arith.constant 128 : index
    %533 = vector.load %arg13[%c0_221, %c128_222] : memref<48x384xf32, #tpu.memory_space<vmem>>, vector<16x128xf32>
    %534 = arith.addf %533, %532 : vector<16x128xf32>
    %c0_223 = arith.constant 0 : index
    %c0_224 = arith.constant 0 : index
    %c0_225 = arith.constant 0 : index
    %535 = vector.load %arg12[%c0_223, %c0_224, %c0_225] : memref<1x48x128xf32, #tpu.memory_space<vmem>>, vector<1x16x128xf32>
    %536 = vector.shape_cast %535 : vector<1x16x128xf32> to vector<16x128xf32>
    %537 = vector.shape_cast %534 : vector<16x128xf32> to vector<1x16x128xf32>
    tpu.vector_store %arg12[%c0_223, %c0_224, %c0_225], %537 {strides = array<i32>} : memref<1x48x128xf32, #tpu.memory_space<vmem>>, vector<1x16x128xf32>,
    %c16_226 = arith.constant 16 : index
    %c0_227 = arith.constant 0 : index
    %538 = vector.load %arg14[%c16_226, %c0_227] : memref<48x384xf32, #tpu.memory_space<vmem>>, vector<16x384xf32>
    %539 = vector.extract_strided_slice %538 {offsets = [0, 367], sizes = [16, 17], strides = [1, 1]} : vector<16x384xf32> to vector<16x17xf32>
    %540 = vector.extract_strided_slice %538 {offsets = [0, 0], sizes = [16, 367], strides = [1, 1]} : vector<16x384xf32> to vector<16x367xf32>
    %541 = tpu.concatenate %539, %540 in 1 : vector<16x17xf32>, vector<16x367xf32> -> vector<16x384xf32>
    %542 = vector.extract_strided_slice %541 {offsets = [0, 128], sizes = [16, 128], strides = [1, 1]} : vector<16x384xf32> to vector<16x128xf32>
    %543 = vector.broadcast %99 : vector<1x128xf32> to vector<16x128xf32>
    %544 = arith.mulf %542, %543 : vector<16x128xf32>
    %c0_228 = arith.constant 0 : index
    %c0_229 = arith.constant 0 : index
    %545 = vector.load %arg16[%c0_228, %c0_229] : memref<144x128xf32, #tpu.memory_space<vmem>>, vector<16x128xf32>
    tpu.vector_store %arg16[%c0_228, %c0_229], %544 {strides = array<i32>} : memref<144x128xf32, #tpu.memory_space<vmem>>, vector<16x128xf32>,
    %546 = vector.extract_strided_slice %538 {offsets = [0, 368], sizes = [16, 16], strides = [1, 1]} : vector<16x384xf32> to vector<16x16xf32>
    %547 = vector.extract_strided_slice %538 {offsets = [0, 0], sizes = [16, 368], strides = [1, 1]} : vector<16x384xf32> to vector<16x368xf32>
    %548 = tpu.concatenate %546, %547 in 1 : vector<16x16xf32>, vector<16x368xf32> -> vector<16x384xf32>
    %549 = vector.extract_strided_slice %548 {offsets = [0, 128], sizes = [16, 128], strides = [1, 1]} : vector<16x384xf32> to vector<16x128xf32>
    %550 = vector.broadcast %110 : vector<1x128xf32> to vector<16x128xf32>
    %551 = arith.mulf %549, %550 : vector<16x128xf32>
    %c16_230 = arith.constant 16 : index
    %c0_231 = arith.constant 0 : index
    %552 = vector.load %arg16[%c16_230, %c0_231] : memref<144x128xf32, #tpu.memory_space<vmem>>, vector<16x128xf32>
    tpu.vector_store %arg16[%c16_230, %c0_231], %551 {strides = array<i32>} : memref<144x128xf32, #tpu.memory_space<vmem>>, vector<16x128xf32>,
    %553 = vector.extract_strided_slice %538 {offsets = [0, 369], sizes = [16, 15], strides = [1, 1]} : vector<16x384xf32> to vector<16x15xf32>
    %554 = vector.extract_strided_slice %538 {offsets = [0, 0], sizes = [16, 369], strides = [1, 1]} : vector<16x384xf32> to vector<16x369xf32>
    %555 = tpu.concatenate %553, %554 in 1 : vector<16x15xf32>, vector<16x369xf32> -> vector<16x384xf32>
    %556 = vector.extract_strided_slice %555 {offsets = [0, 128], sizes = [16, 128], strides = [1, 1]} : vector<16x384xf32> to vector<16x128xf32>
    %557 = vector.broadcast %133 : vector<1x128xf32> to vector<16x128xf32>
    %558 = arith.mulf %556, %557 : vector<16x128xf32>
    %c32_232 = arith.constant 32 : index
    %c0_233 = arith.constant 0 : index
    %559 = vector.load %arg16[%c32_232, %c0_233] : memref<144x128xf32, #tpu.memory_space<vmem>>, vector<16x128xf32>
    tpu.vector_store %arg16[%c32_232, %c0_233], %558 {strides = array<i32>} : memref<144x128xf32, #tpu.memory_space<vmem>>, vector<16x128xf32>,
    %560 = vector.extract_strided_slice %538 {offsets = [0, 383], sizes = [16, 1], strides = [1, 1]} : vector<16x384xf32> to vector<16x1xf32>
    %561 = vector.extract_strided_slice %538 {offsets = [0, 0], sizes = [16, 383], strides = [1, 1]} : vector<16x384xf32> to vector<16x383xf32>
    %562 = tpu.concatenate %560, %561 in 1 : vector<16x1xf32>, vector<16x383xf32> -> vector<16x384xf32>
    %563 = vector.extract_strided_slice %562 {offsets = [0, 128], sizes = [16, 128], strides = [1, 1]} : vector<16x384xf32> to vector<16x128xf32>
    %564 = vector.broadcast %144 : vector<1x128xf32> to vector<16x128xf32>
    %565 = arith.mulf %563, %564 : vector<16x128xf32>
    %c48_234 = arith.constant 48 : index
    %c0_235 = arith.constant 0 : index
    %566 = vector.load %arg16[%c48_234, %c0_235] : memref<144x128xf32, #tpu.memory_space<vmem>>, vector<16x128xf32>
    tpu.vector_store %arg16[%c48_234, %c0_235], %565 {strides = array<i32>} : memref<144x128xf32, #tpu.memory_space<vmem>>, vector<16x128xf32>,
    %567 = vector.extract_strided_slice %538 {offsets = [0, 128], sizes = [16, 128], strides = [1, 1]} : vector<16x384xf32> to vector<16x128xf32>
    %c64_236 = arith.constant 64 : index
    %c0_237 = arith.constant 0 : index
    %568 = vector.load %arg16[%c64_236, %c0_237] : memref<144x128xf32, #tpu.memory_space<vmem>>, vector<16x128xf32>
    tpu.vector_store %arg16[%c64_236, %c0_237], %567 {strides = array<i32>} : memref<144x128xf32, #tpu.memory_space<vmem>>, vector<16x128xf32>,
    %569 = vector.extract_strided_slice %538 {offsets = [0, 1], sizes = [16, 383], strides = [1, 1]} : vector<16x384xf32> to vector<16x383xf32>
    %570 = vector.extract_strided_slice %538 {offsets = [0, 0], sizes = [16, 1], strides = [1, 1]} : vector<16x384xf32> to vector<16x1xf32>
    %571 = tpu.concatenate %569, %570 in 1 : vector<16x383xf32>, vector<16x1xf32> -> vector<16x384xf32>
    %572 = vector.extract_strided_slice %571 {offsets = [0, 128], sizes = [16, 128], strides = [1, 1]} : vector<16x384xf32> to vector<16x128xf32>
    %573 = vector.broadcast %155 : vector<1x128xf32> to vector<16x128xf32>
    %574 = arith.mulf %572, %573 : vector<16x128xf32>
    %c80_238 = arith.constant 80 : index
    %c0_239 = arith.constant 0 : index
    %575 = vector.load %arg16[%c80_238, %c0_239] : memref<144x128xf32, #tpu.memory_space<vmem>>, vector<16x128xf32>
    tpu.vector_store %arg16[%c80_238, %c0_239], %574 {strides = array<i32>} : memref<144x128xf32, #tpu.memory_space<vmem>>, vector<16x128xf32>,
    %576 = vector.extract_strided_slice %538 {offsets = [0, 15], sizes = [16, 369], strides = [1, 1]} : vector<16x384xf32> to vector<16x369xf32>
    %577 = vector.extract_strided_slice %538 {offsets = [0, 0], sizes = [16, 15], strides = [1, 1]} : vector<16x384xf32> to vector<16x15xf32>
    %578 = tpu.concatenate %576, %577 in 1 : vector<16x369xf32>, vector<16x15xf32> -> vector<16x384xf32>
    %579 = vector.extract_strided_slice %578 {offsets = [0, 128], sizes = [16, 128], strides = [1, 1]} : vector<16x384xf32> to vector<16x128xf32>
    %580 = vector.broadcast %178 : vector<1x128xf32> to vector<16x128xf32>
    %581 = arith.mulf %579, %580 : vector<16x128xf32>
    %c96_240 = arith.constant 96 : index
    %c0_241 = arith.constant 0 : index
    %582 = vector.load %arg16[%c96_240, %c0_241] : memref<144x128xf32, #tpu.memory_space<vmem>>, vector<16x128xf32>
    tpu.vector_store %arg16[%c96_240, %c0_241], %581 {strides = array<i32>} : memref<144x128xf32, #tpu.memory_space<vmem>>, vector<16x128xf32>,
    %583 = vector.extract_strided_slice %538 {offsets = [0, 16], sizes = [16, 368], strides = [1, 1]} : vector<16x384xf32> to vector<16x368xf32>
    %584 = vector.extract_strided_slice %538 {offsets = [0, 0], sizes = [16, 16], strides = [1, 1]} : vector<16x384xf32> to vector<16x16xf32>
    %585 = tpu.concatenate %583, %584 in 1 : vector<16x368xf32>, vector<16x16xf32> -> vector<16x384xf32>
    %586 = vector.extract_strided_slice %585 {offsets = [0, 128], sizes = [16, 128], strides = [1, 1]} : vector<16x384xf32> to vector<16x128xf32>
    %587 = vector.broadcast %189 : vector<1x128xf32> to vector<16x128xf32>
    %588 = arith.mulf %586, %587 : vector<16x128xf32>
    %c112_242 = arith.constant 112 : index
    %c0_243 = arith.constant 0 : index
    %589 = vector.load %arg16[%c112_242, %c0_243] : memref<144x128xf32, #tpu.memory_space<vmem>>, vector<16x128xf32>
    tpu.vector_store %arg16[%c112_242, %c0_243], %588 {strides = array<i32>} : memref<144x128xf32, #tpu.memory_space<vmem>>, vector<16x128xf32>,
    %590 = vector.extract_strided_slice %538 {offsets = [0, 17], sizes = [16, 367], strides = [1, 1]} : vector<16x384xf32> to vector<16x367xf32>
    %591 = vector.extract_strided_slice %538 {offsets = [0, 0], sizes = [16, 17], strides = [1, 1]} : vector<16x384xf32> to vector<16x17xf32>
    %592 = tpu.concatenate %590, %591 in 1 : vector<16x367xf32>, vector<16x17xf32> -> vector<16x384xf32>
    %593 = vector.extract_strided_slice %592 {offsets = [0, 128], sizes = [16, 128], strides = [1, 1]} : vector<16x384xf32> to vector<16x128xf32>
    %594 = vector.broadcast %212 : vector<1x128xf32> to vector<16x128xf32>
    %595 = arith.mulf %593, %594 : vector<16x128xf32>
    %c128_244 = arith.constant 128 : index
    %c0_245 = arith.constant 0 : index
    %596 = vector.load %arg16[%c128_244, %c0_245] : memref<144x128xf32, #tpu.memory_space<vmem>>, vector<16x128xf32>
    tpu.vector_store %arg16[%c128_244, %c0_245], %595 {strides = array<i32>} : memref<144x128xf32, #tpu.memory_space<vmem>>, vector<16x128xf32>,
    %597 = vector.extract_strided_slice %460 {offsets = [16, 0], sizes = [16, 128], strides = [1, 1]} : vector<48x128xf32> to vector<16x128xf32>
    %c16_246 = arith.constant 16 : index
    %c0_247 = arith.constant 0 : index
    %598 = vector.load %arg10[%c16_246, %c0_247] : memref<48x144xf32, #tpu.memory_space<vmem>>, vector<16x144xf32>
    %c0_248 = arith.constant 0 : index
    %c0_249 = arith.constant 0 : index
    %599 = vector.load %arg16[%c0_248, %c0_249] : memref<144x128xf32, #tpu.memory_space<vmem>>, vector<144x128xf32>
    %cst_250 = arith.constant dense<0.000000e+00> : vector<16x128xf32>
    %600 = tpu.matmul %598, %599, %cst_250 {dimension_numbers = #tpu.dot_dimension_numbers<[1], [0], [0], [1], [0, 0, 1, 1], [], []>} : vector<16x144xf32>, vector<144x128xf32>, vector<16x128xf32> -> vector<16x128xf32>
    %601 = arith.addf %597, %600 : vector<16x128xf32>
    %c16_251 = arith.constant 16 : index
    %c0_252 = arith.constant 0 : index
    %602 = vector.load %arg11[%c16_251, %c0_252] : memref<48x1xf32, #tpu.memory_space<vmem>>, vector<16x1xf32>
    %603 = vector.broadcast %602 : vector<16x1xf32> to vector<16x128xf32>
    %604 = arith.addf %601, %603 : vector<16x128xf32>
    %cst_253 = arith.constant 0.000000e+00 : f32
    %605 = vector.broadcast %cst_253 : f32 to vector<16x128xf32>
    %606 = arith.cmpf oge, %604, %605 : vector<16x128xf32>
    %cst_254 = arith.constant 2.000000e-01 : f32
    %607 = vector.broadcast %cst_254 : f32 to vector<16x128xf32>
    %608 = arith.mulf %607, %604 : vector<16x128xf32>
    %609 = arith.select %606, %604, %608 : vector<16x128xi1>, vector<16x128xf32>
    %c16_255 = arith.constant 16 : index
    %c128_256 = arith.constant 128 : index
    %610 = vector.load %arg13[%c16_255, %c128_256] : memref<48x384xf32, #tpu.memory_space<vmem>>, vector<16x128xf32>
    %611 = arith.addf %610, %609 : vector<16x128xf32>
    %c0_257 = arith.constant 0 : index
    %c16_258 = arith.constant 16 : index
    %c0_259 = arith.constant 0 : index
    %612 = vector.load %arg12[%c0_257, %c16_258, %c0_259] : memref<1x48x128xf32, #tpu.memory_space<vmem>>, vector<1x16x128xf32>
    %613 = vector.shape_cast %612 : vector<1x16x128xf32> to vector<16x128xf32>
    %614 = vector.shape_cast %611 : vector<16x128xf32> to vector<1x16x128xf32>
    tpu.vector_store %arg12[%c0_257, %c16_258, %c0_259], %614 {strides = array<i32>} : memref<1x48x128xf32, #tpu.memory_space<vmem>>, vector<1x16x128xf32>,
    %c32_260 = arith.constant 32 : index
    %c0_261 = arith.constant 0 : index
    %615 = vector.load %arg14[%c32_260, %c0_261] : memref<48x384xf32, #tpu.memory_space<vmem>>, vector<16x384xf32>
    %616 = vector.extract_strided_slice %615 {offsets = [0, 367], sizes = [16, 17], strides = [1, 1]} : vector<16x384xf32> to vector<16x17xf32>
    %617 = vector.extract_strided_slice %615 {offsets = [0, 0], sizes = [16, 367], strides = [1, 1]} : vector<16x384xf32> to vector<16x367xf32>
    %618 = tpu.concatenate %616, %617 in 1 : vector<16x17xf32>, vector<16x367xf32> -> vector<16x384xf32>
    %619 = vector.extract_strided_slice %618 {offsets = [0, 128], sizes = [16, 128], strides = [1, 1]} : vector<16x384xf32> to vector<16x128xf32>
    %620 = vector.broadcast %99 : vector<1x128xf32> to vector<16x128xf32>
    %621 = arith.mulf %619, %620 : vector<16x128xf32>
    %c0_262 = arith.constant 0 : index
    %c0_263 = arith.constant 0 : index
    %622 = vector.load %arg16[%c0_262, %c0_263] : memref<144x128xf32, #tpu.memory_space<vmem>>, vector<16x128xf32>
    tpu.vector_store %arg16[%c0_262, %c0_263], %621 {strides = array<i32>} : memref<144x128xf32, #tpu.memory_space<vmem>>, vector<16x128xf32>,
    %623 = vector.extract_strided_slice %615 {offsets = [0, 368], sizes = [16, 16], strides = [1, 1]} : vector<16x384xf32> to vector<16x16xf32>
    %624 = vector.extract_strided_slice %615 {offsets = [0, 0], sizes = [16, 368], strides = [1, 1]} : vector<16x384xf32> to vector<16x368xf32>
    %625 = tpu.concatenate %623, %624 in 1 : vector<16x16xf32>, vector<16x368xf32> -> vector<16x384xf32>
    %626 = vector.extract_strided_slice %625 {offsets = [0, 128], sizes = [16, 128], strides = [1, 1]} : vector<16x384xf32> to vector<16x128xf32>
    %627 = vector.broadcast %110 : vector<1x128xf32> to vector<16x128xf32>
    %628 = arith.mulf %626, %627 : vector<16x128xf32>
    %c16_264 = arith.constant 16 : index
    %c0_265 = arith.constant 0 : index
    %629 = vector.load %arg16[%c16_264, %c0_265] : memref<144x128xf32, #tpu.memory_space<vmem>>, vector<16x128xf32>
    tpu.vector_store %arg16[%c16_264, %c0_265], %628 {strides = array<i32>} : memref<144x128xf32, #tpu.memory_space<vmem>>, vector<16x128xf32>,
    %630 = vector.extract_strided_slice %615 {offsets = [0, 369], sizes = [16, 15], strides = [1, 1]} : vector<16x384xf32> to vector<16x15xf32>
    %631 = vector.extract_strided_slice %615 {offsets = [0, 0], sizes = [16, 369], strides = [1, 1]} : vector<16x384xf32> to vector<16x369xf32>
    %632 = tpu.concatenate %630, %631 in 1 : vector<16x15xf32>, vector<16x369xf32> -> vector<16x384xf32>
    %633 = vector.extract_strided_slice %632 {offsets = [0, 128], sizes = [16, 128], strides = [1, 1]} : vector<16x384xf32> to vector<16x128xf32>
    %634 = vector.broadcast %133 : vector<1x128xf32> to vector<16x128xf32>
    %635 = arith.mulf %633, %634 : vector<16x128xf32>
    %c32_266 = arith.constant 32 : index
    %c0_267 = arith.constant 0 : index
    %636 = vector.load %arg16[%c32_266, %c0_267] : memref<144x128xf32, #tpu.memory_space<vmem>>, vector<16x128xf32>
    tpu.vector_store %arg16[%c32_266, %c0_267], %635 {strides = array<i32>} : memref<144x128xf32, #tpu.memory_space<vmem>>, vector<16x128xf32>,
    %637 = vector.extract_strided_slice %615 {offsets = [0, 383], sizes = [16, 1], strides = [1, 1]} : vector<16x384xf32> to vector<16x1xf32>
    %638 = vector.extract_strided_slice %615 {offsets = [0, 0], sizes = [16, 383], strides = [1, 1]} : vector<16x384xf32> to vector<16x383xf32>
    %639 = tpu.concatenate %637, %638 in 1 : vector<16x1xf32>, vector<16x383xf32> -> vector<16x384xf32>
    %640 = vector.extract_strided_slice %639 {offsets = [0, 128], sizes = [16, 128], strides = [1, 1]} : vector<16x384xf32> to vector<16x128xf32>
    %641 = vector.broadcast %144 : vector<1x128xf32> to vector<16x128xf32>
    %642 = arith.mulf %640, %641 : vector<16x128xf32>
    %c48_268 = arith.constant 48 : index
    %c0_269 = arith.constant 0 : index
    %643 = vector.load %arg16[%c48_268, %c0_269] : memref<144x128xf32, #tpu.memory_space<vmem>>, vector<16x128xf32>
    tpu.vector_store %arg16[%c48_268, %c0_269], %642 {strides = array<i32>} : memref<144x128xf32, #tpu.memory_space<vmem>>, vector<16x128xf32>,
    %644 = vector.extract_strided_slice %615 {offsets = [0, 128], sizes = [16, 128], strides = [1, 1]} : vector<16x384xf32> to vector<16x128xf32>
    %c64_270 = arith.constant 64 : index
    %c0_271 = arith.constant 0 : index
    %645 = vector.load %arg16[%c64_270, %c0_271] : memref<144x128xf32, #tpu.memory_space<vmem>>, vector<16x128xf32>
    tpu.vector_store %arg16[%c64_270, %c0_271], %644 {strides = array<i32>} : memref<144x128xf32, #tpu.memory_space<vmem>>, vector<16x128xf32>,
    %646 = vector.extract_strided_slice %615 {offsets = [0, 1], sizes = [16, 383], strides = [1, 1]} : vector<16x384xf32> to vector<16x383xf32>
    %647 = vector.extract_strided_slice %615 {offsets = [0, 0], sizes = [16, 1], strides = [1, 1]} : vector<16x384xf32> to vector<16x1xf32>
    %648 = tpu.concatenate %646, %647 in 1 : vector<16x383xf32>, vector<16x1xf32> -> vector<16x384xf32>
    %649 = vector.extract_strided_slice %648 {offsets = [0, 128], sizes = [16, 128], strides = [1, 1]} : vector<16x384xf32> to vector<16x128xf32>
    %650 = vector.broadcast %155 : vector<1x128xf32> to vector<16x128xf32>
    %651 = arith.mulf %649, %650 : vector<16x128xf32>
    %c80_272 = arith.constant 80 : index
    %c0_273 = arith.constant 0 : index
    %652 = vector.load %arg16[%c80_272, %c0_273] : memref<144x128xf32, #tpu.memory_space<vmem>>, vector<16x128xf32>
    tpu.vector_store %arg16[%c80_272, %c0_273], %651 {strides = array<i32>} : memref<144x128xf32, #tpu.memory_space<vmem>>, vector<16x128xf32>,
    %653 = vector.extract_strided_slice %615 {offsets = [0, 15], sizes = [16, 369], strides = [1, 1]} : vector<16x384xf32> to vector<16x369xf32>
    %654 = vector.extract_strided_slice %615 {offsets = [0, 0], sizes = [16, 15], strides = [1, 1]} : vector<16x384xf32> to vector<16x15xf32>
    %655 = tpu.concatenate %653, %654 in 1 : vector<16x369xf32>, vector<16x15xf32> -> vector<16x384xf32>
    %656 = vector.extract_strided_slice %655 {offsets = [0, 128], sizes = [16, 128], strides = [1, 1]} : vector<16x384xf32> to vector<16x128xf32>
    %657 = vector.broadcast %178 : vector<1x128xf32> to vector<16x128xf32>
    %658 = arith.mulf %656, %657 : vector<16x128xf32>
    %c96_274 = arith.constant 96 : index
    %c0_275 = arith.constant 0 : index
    %659 = vector.load %arg16[%c96_274, %c0_275] : memref<144x128xf32, #tpu.memory_space<vmem>>, vector<16x128xf32>
    tpu.vector_store %arg16[%c96_274, %c0_275], %658 {strides = array<i32>} : memref<144x128xf32, #tpu.memory_space<vmem>>, vector<16x128xf32>,
    %660 = vector.extract_strided_slice %615 {offsets = [0, 16], sizes = [16, 368], strides = [1, 1]} : vector<16x384xf32> to vector<16x368xf32>
    %661 = vector.extract_strided_slice %615 {offsets = [0, 0], sizes = [16, 16], strides = [1, 1]} : vector<16x384xf32> to vector<16x16xf32>
    %662 = tpu.concatenate %660, %661 in 1 : vector<16x368xf32>, vector<16x16xf32> -> vector<16x384xf32>
    %663 = vector.extract_strided_slice %662 {offsets = [0, 128], sizes = [16, 128], strides = [1, 1]} : vector<16x384xf32> to vector<16x128xf32>
    %664 = vector.broadcast %189 : vector<1x128xf32> to vector<16x128xf32>
    %665 = arith.mulf %663, %664 : vector<16x128xf32>
    %c112_276 = arith.constant 112 : index
    %c0_277 = arith.constant 0 : index
    %666 = vector.load %arg16[%c112_276, %c0_277] : memref<144x128xf32, #tpu.memory_space<vmem>>, vector<16x128xf32>
    tpu.vector_store %arg16[%c112_276, %c0_277], %665 {strides = array<i32>} : memref<144x128xf32, #tpu.memory_space<vmem>>, vector<16x128xf32>,
    %667 = vector.extract_strided_slice %615 {offsets = [0, 17], sizes = [16, 367], strides = [1, 1]} : vector<16x384xf32> to vector<16x367xf32>
    %668 = vector.extract_strided_slice %615 {offsets = [0, 0], sizes = [16, 17], strides = [1, 1]} : vector<16x384xf32> to vector<16x17xf32>
    %669 = tpu.concatenate %667, %668 in 1 : vector<16x367xf32>, vector<16x17xf32> -> vector<16x384xf32>
    %670 = vector.extract_strided_slice %669 {offsets = [0, 128], sizes = [16, 128], strides = [1, 1]} : vector<16x384xf32> to vector<16x128xf32>
    %671 = vector.broadcast %212 : vector<1x128xf32> to vector<16x128xf32>
    %672 = arith.mulf %670, %671 : vector<16x128xf32>
    %c128_278 = arith.constant 128 : index
    %c0_279 = arith.constant 0 : index
    %673 = vector.load %arg16[%c128_278, %c0_279] : memref<144x128xf32, #tpu.memory_space<vmem>>, vector<16x128xf32>
    tpu.vector_store %arg16[%c128_278, %c0_279], %672 {strides = array<i32>} : memref<144x128xf32, #tpu.memory_space<vmem>>, vector<16x128xf32>,
    %674 = vector.extract_strided_slice %460 {offsets = [32, 0], sizes = [16, 128], strides = [1, 1]} : vector<48x128xf32> to vector<16x128xf32>
    %c32_280 = arith.constant 32 : index
    %c0_281 = arith.constant 0 : index
    %675 = vector.load %arg10[%c32_280, %c0_281] : memref<48x144xf32, #tpu.memory_space<vmem>>, vector<16x144xf32>
    %c0_282 = arith.constant 0 : index
    %c0_283 = arith.constant 0 : index
    %676 = vector.load %arg16[%c0_282, %c0_283] : memref<144x128xf32, #tpu.memory_space<vmem>>, vector<144x128xf32>
    %cst_284 = arith.constant dense<0.000000e+00> : vector<16x128xf32>
    %677 = tpu.matmul %675, %676, %cst_284 {dimension_numbers = #tpu.dot_dimension_numbers<[1], [0], [0], [1], [0, 0, 1, 1], [], []>} : vector<16x144xf32>, vector<144x128xf32>, vector<16x128xf32> -> vector<16x128xf32>
    %678 = arith.addf %674, %677 : vector<16x128xf32>
    %c32_285 = arith.constant 32 : index
    %c0_286 = arith.constant 0 : index
    %679 = vector.load %arg11[%c32_285, %c0_286] : memref<48x1xf32, #tpu.memory_space<vmem>>, vector<16x1xf32>
    %680 = vector.broadcast %679 : vector<16x1xf32> to vector<16x128xf32>
    %681 = arith.addf %678, %680 : vector<16x128xf32>
    %cst_287 = arith.constant 0.000000e+00 : f32
    %682 = vector.broadcast %cst_287 : f32 to vector<16x128xf32>
    %683 = arith.cmpf oge, %681, %682 : vector<16x128xf32>
    %cst_288 = arith.constant 2.000000e-01 : f32
    %684 = vector.broadcast %cst_288 : f32 to vector<16x128xf32>
    %685 = arith.mulf %684, %681 : vector<16x128xf32>
    %686 = arith.select %683, %681, %685 : vector<16x128xi1>, vector<16x128xf32>
    %c32_289 = arith.constant 32 : index
    %c128_290 = arith.constant 128 : index
    %687 = vector.load %arg13[%c32_289, %c128_290] : memref<48x384xf32, #tpu.memory_space<vmem>>, vector<16x128xf32>
    %688 = arith.addf %687, %686 : vector<16x128xf32>
    %c0_291 = arith.constant 0 : index
    %c32_292 = arith.constant 32 : index
    %c0_293 = arith.constant 0 : index
    %689 = vector.load %arg12[%c0_291, %c32_292, %c0_293] : memref<1x48x128xf32, #tpu.memory_space<vmem>>, vector<1x16x128xf32>
    %690 = vector.shape_cast %689 : vector<1x16x128xf32> to vector<16x128xf32>
    %691 = vector.shape_cast %688 : vector<16x128xf32> to vector<1x16x128xf32>
    tpu.vector_store %arg12[%c0_291, %c32_292, %c0_293], %691 {strides = array<i32>} : memref<1x48x128xf32, #tpu.memory_space<vmem>>, vector<1x16x128xf32>,
    return
  }
  func.func @transform_1(%arg0: i32, %arg1: i32) -> (i32, i32) {
    %c0_i32 = arith.constant 0 : i32
    %c0_i32_0 = arith.constant 0 : i32
    %c0_i32_1 = arith.constant 0 : i32
    return %c0_i32, %c0_i32_0 : i32, i32
  }
  func.func @transform_2(%arg0: i32, %arg1: i32) -> (i32, i32) {
    %c0_i32 = arith.constant 0 : i32
    %c0_i32_0 = arith.constant 0 : i32
    %c0_i32_1 = arith.constant 0 : i32
    return %c0_i32, %c0_i32_0 : i32, i32
  }
  func.func @transform_3(%arg0: i32, %arg1: i32) -> (i32, i32) {
    %c0_i32 = arith.constant 0 : i32
    %c0_i32_0 = arith.constant 0 : i32
    %c0_i32_1 = arith.constant 0 : i32
    return %c0_i32, %c0_i32_0 : i32, i32
  }
  func.func @transform_4(%arg0: i32, %arg1: i32) -> (i32, i32) {
    %c0_i32 = arith.constant 0 : i32
    %c0_i32_0 = arith.constant 0 : i32
    %c0_i32_1 = arith.constant 0 : i32
    return %c0_i32, %c0_i32_0 : i32, i32
  }
  func.func @transform_5(%arg0: i32, %arg1: i32) -> (i32, i32) {
    %c0_i32 = arith.constant 0 : i32
    %c0_i32_0 = arith.constant 0 : i32
    %c0_i32_1 = arith.constant 0 : i32
    return %c0_i32, %c0_i32_0 : i32, i32
  }
  func.func @transform_6(%arg0: i32, %arg1: i32) -> (i32, i32) {
    %c0_i32 = arith.constant 0 : i32
    %c0_i32_0 = arith.constant 0 : i32
    %c0_i32_1 = arith.constant 0 : i32
    return %c0_i32, %c0_i32_0 : i32, i32
  }
  func.func @transform_7(%arg0: i32, %arg1: i32) -> (i32, i32) {
    %c0_i32 = arith.constant 0 : i32
    %c0_i32_0 = arith.constant 0 : i32
    %c0_i32_1 = arith.constant 0 : i32
    return %c0_i32, %c0_i32_0 : i32, i32
  }
  func.func @transform_8(%arg0: i32, %arg1: i32) -> (i32, i32) {
    %c0_i32 = arith.constant 0 : i32
    %c0_i32_0 = arith.constant 0 : i32
    %c0_i32_1 = arith.constant 0 : i32
    return %c0_i32, %c0_i32_0 : i32, i32
  }
  func.func @transform_9(%arg0: i32, %arg1: i32) -> (i32, i32) {
    %c0_i32 = arith.constant 0 : i32
    %c0_i32_0 = arith.constant 0 : i32
    %c0_i32_1 = arith.constant 0 : i32
    return %c0_i32, %c0_i32_0 : i32, i32
  }
  func.func @transform_10(%arg0: i32, %arg1: i32) -> (i32, i32, i32) {
    %c0_i32 = arith.constant 0 : i32
    %c0_i32_0 = arith.constant 0 : i32
    return %arg0, %c0_i32, %arg1 : i32, i32, i32
  }
}

</mosaic_0001>

<llo_original>
// kernel: tpu_custom_call.1
$region0: #{tpu_custom_call.1}
  #allocation0 [shape = 'u32[]', space=smem, size = 0x4, offset = 0x4, fixed_abs, tag = 'smem constant byte address 0x4 - core index']
  #allocation1 [shape = 'u32[72,128]{1,0:T(1,128)}', space=vmem, size = 0x9000, scoped, tag = 'internal scratch']
  #allocation2 [shape = 'f32[48,384]{1,0:T(8,128)}', space=vmem, size = 0x12000, scoped, tag = 'scratch operand']
  #allocation3 [shape = 'f32[48,384]{1,0:T(8,128)}', space=vmem, size = 0x12000, scoped, tag = 'scratch operand']
  #allocation4 [shape = 'f32[144,384]{1,0:T(8,128)}', space=vmem, size = 0x36000, scoped, tag = 'scratch operand']
  #allocation5 [shape = 'f32[144,128]{1,0:T(8,128)}', space=vmem, size = 0x12000, scoped, tag = 'scratch operand']
  #allocation6 [shape = 's32[1]{0}', space=sflag, size = 0x4, scoped, tag = 'scratch operand']
  #allocation16 [shape = 's32[]', space=sflag, size = 0x4, offset = 0, fixed_abs, tag = 'sflag constant byte address 0x0 - dummy sync flag']
  %s0 = inlined_call_operand.hbm [shape: f32[2,48,512], index: 0, kind: input, shape index: {}]
  %s1 = inlined_call_operand.hbm [shape: s32[1,384], index: 1, kind: input, shape index: {}]
  %s2 = inlined_call_operand.hbm [shape: s32[1,384], index: 2, kind: input, shape index: {}]
  %s3 = inlined_call_operand.vmem [shape: f32[48,144], index: 3, kind: input, shape index: {}]
  %s4 = inlined_call_operand.vmem [shape: f32[48,1], index: 4, kind: input, shape index: {}]
  %s5 = inlined_call_operand.vmem [shape: f32[16,48], index: 5, kind: input, shape index: {}]
  %s6 = inlined_call_operand.vmem [shape: f32[16,1], index: 6, kind: input, shape index: {}]
  %s7 = inlined_call_operand.hbm [shape: f32[48,144], index: 7, kind: input, shape index: {}]
  %s8 = inlined_call_operand.hbm [shape: f32[48,144], index: 8, kind: input, shape index: {}]
  %s9 = inlined_call_operand.vmem [shape: f32[48,1], index: 9, kind: input, shape index: {}]
  %s10 = inlined_call_operand.hbm [shape: f32[2,48,256], index: 10, kind: output, shape index: {}]
  %s11 = sld [smem:[#allocation0]]
  $region85: #{tpu_custom_call.1} parent=0
    _
  %s13 = ssub.s32 1, %s11
  %s14 = scalar_select 0, %s13, %s11
  $region1: #{tpu_custom_call.1} parent=0
    #allocation7 [shape = 'u8[1536]{0}', space=vmem, size = 0x800, scoped, tag = 'input window, operand 1, single buffered']
    #allocation8 [shape = 's32[2]{0}', space=sflag, size = 0x8, scoped, tag = 'scoped memory for tpu_custom_call.1']
    #allocation9 [shape = 's32[2]{0}', space=sflag, size = 0x8, scoped, tag = 'scoped memory for tpu_custom_call.1']
    #allocation10 [shape = 'u8[1536]{0}', space=vmem, size = 0x800, scoped, tag = 'input window, operand 2, single buffered']
    #allocation11 [shape = 's32[1]{0}', space=sflag, size = 0x4, scoped, tag = 'scoped memory for tpu_custom_call.1']
    #allocation12 [shape = 'u8[49152]{0}', space=vmem, size = 0xc000, scoped, tag = 'input window, operand 7, single buffered']
    #allocation13 [shape = 'u8[49152]{0}', space=vmem, size = 0xc000, scoped, tag = 'input window, operand 8, single buffered']
    #allocation14 [shape = 's32[1]{0}', space=sflag, size = 0x4, scoped, tag = 'scoped memory for tpu_custom_call.1']
    #allocation15 [shape = 'u8[49152]{0}', space=vmem, size = 0xc000, scoped, tag = 'output window, operand 0']
    %15 = vsyncpa [#allocation8], 0
    %16 = vsyncpa [#allocation11], 0
    %17 = vsyncpa [#allocation14], 0
    %18 = vsyncpa [#allocation9], 0
    %s19 = scalar_lea.sflag [#allocation9], 1
    %20 = vsyncpa %s19, 0
    loop: start=0, step=1, limit=6
    $region2: #{tpu_custom_call.1} parent=1 // loop_pre_header
      _
    $region3: #{tpu_custom_call.1} parent=1 // loop_header
      %s22 = sphi 0, %s26
      %p23 = scmp.ge.s32.totalorder %s22, 6
      %s29 = sphi 0, %s41
      %s30 = sphi 0, %s37
      %s31 = sphi 0, %s29
      %s32 = sphi 0, %s30
      %s33 = sphi 0, %s31
      %s34 = sphi 0, %s32
      %s42 = sphi 0, %s42
      %s44 = sphi 0, %s42
      %s45 = sphi 0, %s44
      %s59 = sphi 0, %s45
      %s63 = sphi 0, %s63
      %s65 = sphi 0, %s63
      %s66 = sphi 0, %s65
      %s80 = sphi 0, %s66
      %s84 = sphi 0, %s84
      %s86 = sphi 0, %s84
      %s87 = sphi 0, %s86
      %s101 = sphi 0, %s87
      %s105 = sphi 0, %s105
      %s107 = sphi 0, %s105
      %s108 = sphi 0, %s107
      %s122 = sphi 0, %s108
      %s126 = sphi 0, %s126
      %s128 = sphi 0, %s126
      %s129 = sphi 0, %s128
      %s143 = sphi 0, %s129
      %s147 = sphi 0, %s147
      %s149 = sphi 0, %s147
      %s150 = sphi 0, %s149
      %s164 = sphi 0, %s150
      %s168 = sphi 0, %s168
      %s170 = sphi 0, %s168
      %s171 = sphi 0, %s170
      %s185 = sphi 0, %s171
      %s189 = sphi 0, %s189
      %s191 = sphi 0, %s189
      %s192 = sphi 0, %s191
      %s206 = sphi 0, %s192
      %s210 = sphi 0, %s210
      %s212 = sphi 0, %s210
      %s213 = sphi 0, %s212
      %s227 = sphi 0, %s213
      %s235 = sphi 0, %s237
      %s238 = sphi 0, %s235
      %s239 = sphi 0, %s238
      %s255 = sphi 0, %s239
    $region4: #{tpu_custom_call.1} parent=1 // loop_header_branch
      %25 = sbr.rel (%p23) target = $region8
    $region5: #{tpu_custom_call.1} parent=1 // loop_body
      %s27 = ssub.s32 %s22, 1
      %s28 = ssub.s32 %s22, 2
      %s35 = sadd.s32 1, %s30
      %p36 = scmp.ge.s32.totalorder %s35, 2
      %s37 = scalar_select %p36, 0, %s35
      %s38 = sadd.s32 1, %s29
      %s39 = scalar_select %p36, %s38, %s29
      %p40 = scmp.ge.s32.totalorder %s39, 2
      %s41 = scalar_select %p40, 0, %s39
      %s43 = sadd.s32 %s42, 1
      %p46 = scmp.eq.s32.totalorder %s22, 3
      %p47 = scmp.ne.s32.totalorder %s42, %s44
      %p48 = scmp.eq.s32.totalorder %s22, 0
      %p49 = por %p47, %p48
      %p50 = scmp.ne.s32.totalorder %s42, %s44
      %p51 = scmp.eq.s32.totalorder %s27, 3
      %p52 = por %p50, %p51
      %p53 = scmp.ne.s32.totalorder %s44, %s45
      %p54 = scmp.eq.s32.totalorder %s27, 0
      %p55 = por %p53, %p54
      %p56 = scmp.ne.s32.totalorder %s44, %s45
      %p57 = scmp.eq.s32.totalorder %s28, 3
      %p58 = por %p56, %p57
      %p60 = scmp.ne.s32.totalorder %s45, %s59
      %p61 = scmp.eq.s32.totalorder %s28, 0
      %p62 = por %p60, %p61
      %s64 = sadd.s32 %s63, 1
      %p67 = scmp.eq.s32.totalorder %s22, 3
      %p68 = scmp.ne.s32.totalorder %s63, %s65
      %p69 = scmp.eq.s32.totalorder %s22, 0
      %p70 = por %p68, %p69
      %p71 = scmp.ne.s32.totalorder %s63, %s65
      %p72 = scmp.eq.s32.totalorder %s27, 3
      %p73 = por %p71, %p72
      %p74 = scmp.ne.s32.totalorder %s65, %s66
      %p75 = scmp.eq.s32.totalorder %s27, 0
      %p76 = por %p74, %p75
      %p77 = scmp.ne.s32.totalorder %s65, %s66
      %p78 = scmp.eq.s32.totalorder %s28, 3
      %p79 = por %p77, %p78
      %p81 = scmp.ne.s32.totalorder %s66, %s80
      %p82 = scmp.eq.s32.totalorder %s28, 0
      %p83 = por %p81, %p82
      %s85 = sadd.s32 %s84, 1
      %p88 = scmp.eq.s32.totalorder %s22, 3
      %p89 = scmp.ne.s32.totalorder %s84, %s86
      %p90 = scmp.eq.s32.totalorder %s22, 0
      %p91 = por %p89, %p90
      %p92 = scmp.ne.s32.totalorder %s84, %s86
      %p93 = scmp.eq.s32.totalorder %s27, 3
      %p94 = por %p92, %p93
      %p95 = scmp.ne.s32.totalorder %s86, %s87
      %p96 = scmp.eq.s32.totalorder %s27, 0
      %p97 = por %p95, %p96
      %p98 = scmp.ne.s32.totalorder %s86, %s87
      %p99 = scmp.eq.s32.totalorder %s28, 3
      %p100 = por %p98, %p99
      %p102 = scmp.ne.s32.totalorder %s87, %s101
      %p103 = scmp.eq.s32.totalorder %s28, 0
      %p104 = por %p102, %p103
      %s106 = sadd.s32 %s105, 1
      %p109 = scmp.eq.s32.totalorder %s22, 3
      %p110 = scmp.ne.s32.totalorder %s105, %s107
      %p111 = scmp.eq.s32.totalorder %s22, 0
      %p112 = por %p110, %p111
      %p113 = scmp.ne.s32.totalorder %s105, %s107
      %p114 = scmp.eq.s32.totalorder %s27, 3
      %p115 = por %p113, %p114
      %p116 = scmp.ne.s32.totalorder %s107, %s108
      %p117 = scmp.eq.s32.totalorder %s27, 0
      %p118 = por %p116, %p117
      %p119 = scmp.ne.s32.totalorder %s107, %s108
      %p120 = scmp.eq.s32.totalorder %s28, 3
      %p121 = por %p119, %p120
      %p123 = scmp.ne.s32.totalorder %s108, %s122
      %p124 = scmp.eq.s32.totalorder %s28, 0
      %p125 = por %p123, %p124
      %s127 = sadd.s32 %s126, 1
      %p130 = scmp.eq.s32.totalorder %s22, 3
      %p131 = scmp.ne.s32.totalorder %s126, %s128
      %p132 = scmp.eq.s32.totalorder %s22, 0
      %p133 = por %p131, %p132
      %p134 = scmp.ne.s32.totalorder %s126, %s128
      %p135 = scmp.eq.s32.totalorder %s27, 3
      %p136 = por %p134, %p135
      %p137 = scmp.ne.s32.totalorder %s128, %s129
      %p138 = scmp.eq.s32.totalorder %s27, 0
      %p139 = por %p137, %p138
      %p140 = scmp.ne.s32.totalorder %s128, %s129
      %p141 = scmp.eq.s32.totalorder %s28, 3
      %p142 = por %p140, %p141
      %p144 = scmp.ne.s32.totalorder %s129, %s143
      %p145 = scmp.eq.s32.totalorder %s28, 0
      %p146 = por %p144, %p145
      %s148 = sadd.s32 %s147, 1
      %p151 = scmp.eq.s32.totalorder %s22, 3
      %p152 = scmp.ne.s32.totalorder %s147, %s149
      %p153 = scmp.eq.s32.totalorder %s22, 0
      %p154 = por %p152, %p153
      %p155 = scmp.ne.s32.totalorder %s147, %s149
      %p156 = scmp.eq.s32.totalorder %s27, 3
      %p157 = por %p155, %p156
      %p158 = scmp.ne.s32.totalorder %s149, %s150
      %p159 = scmp.eq.s32.totalorder %s27, 0
      %p160 = por %p158, %p159
      %p161 = scmp.ne.s32.totalorder %s149, %s150
      %p162 = scmp.eq.s32.totalorder %s28, 3
      %p163 = por %p161, %p162
      %p165 = scmp.ne.s32.totalorder %s150, %s164
      %p166 = scmp.eq.s32.totalorder %s28, 0
      %p167 = por %p165, %p166
      %s169 = sadd.s32 %s168, 1
      %p172 = scmp.eq.s32.totalorder %s22, 3
      %p173 = scmp.ne.s32.totalorder %s168, %s170
      %p174 = scmp.eq.s32.totalorder %s22, 0
      %p175 = por %p173, %p174
      %p176 = scmp.ne.s32.totalorder %s168, %s170
      %p177 = scmp.eq.s32.totalorder %s27, 3
      %p178 = por %p176, %p177
      %p179 = scmp.ne.s32.totalorder %s170, %s171
      %p180 = scmp.eq.s32.totalorder %s27, 0
      %p181 = por %p179, %p180
      %p182 = scmp.ne.s32.totalorder %s170, %s171
      %p183 = scmp.eq.s32.totalorder %s28, 3
      %p184 = por %p182, %p183
      %p186 = scmp.ne.s32.totalorder %s171, %s185
      %p187 = scmp.eq.s32.totalorder %s28, 0
      %p188 = por %p186, %p187
      %s190 = sadd.s32 %s189, 1
      %p193 = scmp.eq.s32.totalorder %s22, 3
      %p194 = scmp.ne.s32.totalorder %s189, %s191
      %p195 = scmp.eq.s32.totalorder %s22, 0
      %p196 = por %p194, %p195
      %p197 = scmp.ne.s32.totalorder %s189, %s191
      %p198 = scmp.eq.s32.totalorder %s27, 3
      %p199 = por %p197, %p198
      %p200 = scmp.ne.s32.totalorder %s191, %s192
      %p201 = scmp.eq.s32.totalorder %s27, 0
      %p202 = por %p200, %p201
      %p203 = scmp.ne.s32.totalorder %s191, %s192
      %p204 = scmp.eq.s32.totalorder %s28, 3
      %p205 = por %p203, %p204
      %p207 = scmp.ne.s32.totalorder %s192, %s206
      %p208 = scmp.eq.s32.totalorder %s28, 0
      %p209 = por %p207, %p208
      %s211 = sadd.s32 %s210, 1
      %p214 = scmp.eq.s32.totalorder %s22, 3
      %p215 = scmp.ne.s32.totalorder %s210, %s212
      %p216 = scmp.eq.s32.totalorder %s22, 0
      %p217 = por %p215, %p216
      %p218 = scmp.ne.s32.totalorder %s210, %s212
      %p219 = scmp.eq.s32.totalorder %s27, 3
      %p220 = por %p218, %p219
      %p221 = scmp.ne.s32.totalorder %s212, %s213
      %p222 = scmp.eq.s32.totalorder %s27, 0
      %p223 = por %p221, %p222
      %p224 = scmp.ne.s32.totalorder %s212, %s213
      %p225 = scmp.eq.s32.totalorder %s28, 3
      %p226 = por %p224, %p225
      %p228 = scmp.ne.s32.totalorder %s213, %s227
      %p229 = scmp.eq.s32.totalorder %s28, 0
      %p230 = por %p228, %p229
      %s231 = ssub.s32 %s29, %s41
      %s232 = ssub.s32 %s30, %s37
      %s233 = sor.u32 %s231, %s232
      %p234 = scmp.eq.s32.totalorder %s233, 0
      %s236 = sadd.s32 %s235, 1
      %s237 = scalar_select %p234, %s235, %s236
      %p240 = pneg %p234
      %p241 = scmp.eq.s32.totalorder %s22, 3
      %p242 = por %p240, %p241
      %p243 = scmp.ne.s32.totalorder %s235, %s238
      %p244 = scmp.eq.s32.totalorder %s22, 0
      %p245 = por %p243, %p244
      %p246 = scmp.ne.s32.totalorder %s235, %s238
      %p247 = scmp.eq.s32.totalorder %s27, 3
      %p248 = por %p246, %p247
      %p249 = scmp.ne.s32.totalorder %s238, %s239
      %p250 = scmp.eq.s32.totalorder %s27, 0
      %p251 = por %p249, %p250
      %p252 = scmp.ne.s32.totalorder %s238, %s239
      %p253 = scmp.eq.s32.totalorder %s28, 3
      %p254 = por %p252, %p253
      %p256 = scmp.ne.s32.totalorder %s239, %s255
      %p257 = scmp.eq.s32.totalorder %s28, 0
      %p258 = por %p256, %p257
      %p259 = scmp.le.s32.totalorder 1, %s22
      %p260 = scmp.lt.s32.totalorder %s22, 5
      %p261 = pnand %p259, %p260
      %p262 = pneg %p261
      // Predicated region
      $region9: #{tpu_custom_call.1} parent=5 // pred_check
        _
      $region10: #{tpu_custom_call.1} parent=5 // pred_check_branch
        %264 = sbr.rel (%p261) target = $region12
      $region11: #{tpu_custom_call.1} parent=5 // pred_region
        %s265 = ssub.s32 %s22, 1
        // Predicated region
        $region13: #{tpu_custom_call.1} parent=11 // pred_check
          %p266 = pneg %p55
        $region14: #{tpu_custom_call.1} parent=11 // pred_check_branch
          %268 = sbr.rel (%p266) target = $region16
        $region15: #{tpu_custom_call.1} parent=11 // pred_region
          %270 = vsyncadd [#allocation8], 0
          %s272 = sshll.u32 %s1, 4
          %s273 = int_to_ptr.hbm [resolvable:$true] %s272
          %s274 = sshll.u32 [#allocation7], 4
          %s275 = int_to_ptr.vmem [resolvable:$true] %s274
          %277 = dma.hbm_to_vmem [thread:$0]  %s273, 48, %s275, [#allocation8]
        $region16: #{tpu_custom_call.1} parent=11 // pred_fallthru
          _
        // Predicated region
        $region17: #{tpu_custom_call.1} parent=11 // pred_check
          %p278 = pneg %p76
        $region18: #{tpu_custom_call.1} parent=11 // pred_check_branch
          %280 = sbr.rel (%p278) target = $region20
        $region19: #{tpu_custom_call.1} parent=11 // pred_region
          %282 = vsyncadd [#allocation11], 0
          %s284 = sshll.u32 %s2, 4
          %s285 = int_to_ptr.hbm [resolvable:$true] %s284
          %s286 = sshll.u32 [#allocation10], 4
          %s287 = int_to_ptr.vmem [resolvable:$true] %s286
          %289 = dma.hbm_to_vmem [thread:$0]  %s285, 48, %s287, [#allocation11]
        $region20: #{tpu_custom_call.1} parent=11 // pred_fallthru
          _
        // Predicated region
        $region21: #{tpu_custom_call.1} parent=11 // pred_check
          %p290 = pneg %p97
        $region22: #{tpu_custom_call.1} parent=11 // pred_check_branch
          %292 = sbr.rel (%p290) target = $region24
        $region23: #{tpu_custom_call.1} parent=11 // pred_region
          _
        $region24: #{tpu_custom_call.1} parent=11 // pred_fallthru
          _
        // Predicated region
        $region25: #{tpu_custom_call.1} parent=11 // pred_check
          %p293 = pneg %p118
        $region26: #{tpu_custom_call.1} parent=11 // pred_check_branch
          %295 = sbr.rel (%p293) target = $region28
        $region27: #{tpu_custom_call.1} parent=11 // pred_region
          _
        $region28: #{tpu_custom_call.1} parent=11 // pred_fallthru
          _
        // Predicated region
        $region29: #{tpu_custom_call.1} parent=11 // pred_check
          %p296 = pneg %p139
        $region30: #{tpu_custom_call.1} parent=11 // pred_check_branch
          %298 = sbr.rel (%p296) target = $region32
        $region31: #{tpu_custom_call.1} parent=11 // pred_region
          _
        $region32: #{tpu_custom_call.1} parent=11 // pred_fallthru
          _
        // Predicated region
        $region33: #{tpu_custom_call.1} parent=11 // pred_check
          %p299 = pneg %p160
        $region34: #{tpu_custom_call.1} parent=11 // pred_check_branch
          %301 = sbr.rel (%p299) target = $region36
        $region35: #{tpu_custom_call.1} parent=11 // pred_region
          _
        $region36: #{tpu_custom_call.1} parent=11 // pred_fallthru
          _
        // Predicated region
        $region37: #{tpu_custom_call.1} parent=11 // pred_check
          %p302 = pneg %p181
        $region38: #{tpu_custom_call.1} parent=11 // pred_check_branch
          %304 = sbr.rel (%p302) target = $region40
        $region39: #{tpu_custom_call.1} parent=11 // pred_region
          %306 = vsyncadd [#allocation11], 0
          %s307 = sshll.u32 %s7, 4
          %s308 = int_to_ptr.hbm [resolvable:$true] %s307
          %s309 = sshll.u32 [#allocation12], 4
          %s310 = int_to_ptr.vmem [resolvable:$true] %s309
          %315 = dma.hbm_to_vmem [thread:$0]  %s308, 1536, %s310, [#allocation11], 256, 256, 16
        $region40: #{tpu_custom_call.1} parent=11 // pred_fallthru
          _
        // Predicated region
        $region41: #{tpu_custom_call.1} parent=11 // pred_check
          %p316 = pneg %p202
        $region42: #{tpu_custom_call.1} parent=11 // pred_check_branch
          %318 = sbr.rel (%p316) target = $region44
        $region43: #{tpu_custom_call.1} parent=11 // pred_region
          %320 = vsyncadd [#allocation14], 0
          %s321 = sshll.u32 %s8, 4
          %s322 = int_to_ptr.hbm [resolvable:$true] %s321
          %s323 = sshll.u32 [#allocation13], 4
          %s324 = int_to_ptr.vmem [resolvable:$true] %s323
          %329 = dma.hbm_to_vmem [thread:$0]  %s322, 1536, %s324, [#allocation14], 256, 256, 16
        $region44: #{tpu_custom_call.1} parent=11 // pred_fallthru
          _
        // Predicated region
        $region45: #{tpu_custom_call.1} parent=11 // pred_check
          %p330 = pneg %p223
        $region46: #{tpu_custom_call.1} parent=11 // pred_check_branch
          %332 = sbr.rel (%p330) target = $region48
        $region47: #{tpu_custom_call.1} parent=11 // pred_region
          _
        $region48: #{tpu_custom_call.1} parent=11 // pred_fallthru
          _
      $region12: #{tpu_custom_call.1} parent=5 // pred_fallthru
        _
      %p333 = scmp.lt.s32.totalorder %s22, 4
      // Predicated region
      $region49: #{tpu_custom_call.1} parent=5 // pred_check
        %p334 = pneg %p333
      $region50: #{tpu_custom_call.1} parent=5 // pred_check_branch
        %336 = sbr.rel (%p334) target = $region52
      $region51: #{tpu_custom_call.1} parent=5 // pred_region
        _
      $region52: #{tpu_custom_call.1} parent=5 // pred_fallthru
        _
      %p337 = scmp.le.s32.totalorder 1, %s22
      %p338 = scmp.lt.s32.totalorder %s22, 5
      %p339 = pnand %p337, %p338
      %p340 = pneg %p339
      // Predicated region
      $region53: #{tpu_custom_call.1} parent=5 // pred_check
        _
      $region54: #{tpu_custom_call.1} parent=5 // pred_check_branch
        %342 = sbr.rel (%p339) target = $region56
      $region55: #{tpu_custom_call.1} parent=5 // pred_region
        %s343 = ssub.s32 %s22, 1
        // Predicated region
        $region57: #{tpu_custom_call.1} parent=55 // pred_check
          %p344 = pneg %p55
        $region58: #{tpu_custom_call.1} parent=55 // pred_check_branch
          %346 = sbr.rel (%p344) target = $region60
        $region59: #{tpu_custom_call.1} parent=55 // pred_region
          %348 = dma.done [#allocation8], 48
        $region60: #{tpu_custom_call.1} parent=55 // pred_fallthru
          _
        // Predicated region
        $region61: #{tpu_custom_call.1} parent=55 // pred_check
          %p349 = pneg %p76
        $region62: #{tpu_custom_call.1} parent=55 // pred_check_branch
          %351 = sbr.rel (%p349) target = $region64
        $region63: #{tpu_custom_call.1} parent=55 // pred_region
          %353 = dma.done [#allocation11], 48
        $region64: #{tpu_custom_call.1} parent=55 // pred_fallthru
          _
        // Predicated region
        $region65: #{tpu_custom_call.1} parent=55 // pred_check
          %p354 = pneg %p181
        $region66: #{tpu_custom_call.1} parent=55 // pred_check_branch
          %356 = sbr.rel (%p354) target = $region68
        $region67: #{tpu_custom_call.1} parent=55 // pred_region
          %358 = dma.done [#allocation11], 1536
        $region68: #{tpu_custom_call.1} parent=55 // pred_fallthru
          _
        // Predicated region
        $region69: #{tpu_custom_call.1} parent=55 // pred_check
          %p359 = pneg %p202
        $region70: #{tpu_custom_call.1} parent=55 // pred_check_branch
          %361 = sbr.rel (%p359) target = $region72
        $region71: #{tpu_custom_call.1} parent=55 // pred_region
          %363 = dma.done [#allocation14], 1536
        $region72: #{tpu_custom_call.1} parent=55 // pred_fallthru
          _
        %p364 = pneg %p55
        %p365 = pneg %p52
        %p366 = pneg %p76
        %p367 = pneg %p73
        %p368 = pneg %p97
        %p369 = pneg %p94
        %p370 = pneg %p118
        %p371 = pneg %p115
        %p372 = pneg %p139
        %p373 = pneg %p136
        %p374 = pneg %p160
        %p375 = pneg %p157
        %p376 = pneg %p181
        %p377 = pneg %p178
        %p378 = pneg %p202
        %p379 = pneg %p199
        %p380 = pneg %p223
        %p381 = pneg %p220
        %p382 = pneg %p251
        %p383 = pneg %p248
        %s384 = sand.u32 %s238, 1
        %s385 = scalar_lea.sflag [#allocation9], %s384
        %s386 = sand.u32 %s238, 1
        %s387 = smul.addr %s386, 48
        %s388 = scalar_lea.vmem [#allocation15], %s387
        %s389 = smul.u32 %s32, 128
        %s390 = sshra.s32 %s389, 7
        %s391 = sand.u32 %s389, 127
        %s392 = smul.u32 %s31, 24
        %s393 = sadd.s32 %s390, %s392
        %s394 = smul.addr %s393, 8
        %s395 = scalar_lea.hbm %s0, %s394
        %s396 = sshll.u32 %s395, 4
        %s397 = int_to_ptr.hbm [resolvable:$true] %s396
        %s398 = sshll.u32 [#allocation2], 4
        %s399 = int_to_ptr.vmem [resolvable:$true] %s398
        %403 = dma.hbm_to_vmem [thread:$0]  %s397, 2304, %s399, [#allocation6], 512, 384, 24
        %v404 = vld [vmem:[#allocation7] sm:$0x7]
        %v405 = vld [vmem:[#allocation7 + $0x1] sm:$0x1]
        %v406 = vld [vmem:[#allocation10 + $0x1] sm:$0x1]
        %s407 = smul.u32 %s32, 8
        %s408 = ssub.s32 %s407, 8
        %v409 = vstv %s408
        %v410 = vadd.s32 %v406, %v409
        %v411 = vadd.s32 %v404, 4294967295
        %vm412 = vcmp.ge.s32.totalorder %v411, 0
        %vm413 = vcmp.lt.s32.totalorder %v411, 16
        %vm414 = vmand %vm412, %vm413
        %v415 = vsel %vm414, 1, 0
        %v416 = vcvt.s32.f32 %v415
        %v417 = vadd.s32 %v404, 1
        %vm418 = vcmp.ge.s32.totalorder %v417, 0
        %vm419 = vcmp.lt.s32.totalorder %v417, 16
        %vm420 = vmand %vm418, %vm419
        %v421 = vsel %vm420, 1, 0
        %v422 = vcvt.s32.f32 %v421
        %v423 = vadd.s32 %v405, 4294967295
        %vm424 = vcmp.ge.s32.totalorder %v423, 0
        %vm425 = vcmp.lt.s32.totalorder %v423, 16
        %vm426 = vmand %vm424, %vm425
        %v427 = vsel %vm426, 1, 0
        %v428 = vcvt.s32.f32 %v427
        %v429 = vadd.s32 %v410, 4294967295
        %vm430 = vcmp.ge.s32.totalorder %v429, 0
        %vm431 = vcmp.lt.s32.totalorder %v429, 16
        %vm432 = vmand %vm430, %vm431
        %v433 = vsel %vm432, 1, 0
        %v434 = vcvt.s32.f32 %v433
        %v435 = vmul.f32 %v428, %v434
        %v436 = vadd.s32 %v405, 1
        %vm437 = vcmp.ge.s32.totalorder %v436, 0
        %vm438 = vcmp.lt.s32.totalorder %v436, 16
        %vm439 = vmand %vm437, %vm438
        %v440 = vsel %vm439, 1, 0
        %v441 = vcvt.s32.f32 %v440
        %v442 = vmul.f32 %v441, %v434
        %v443 = vadd.s32 %v410, 1
        %vm444 = vcmp.ge.s32.totalorder %v443, 0
        %vm445 = vcmp.lt.s32.totalorder %v443, 16
        %vm446 = vmand %vm444, %vm445
        %v447 = vsel %vm446, 1, 0
        %v448 = vcvt.s32.f32 %v447
        %v449 = vmul.f32 %v428, %v448
        %v450 = vmul.f32 %v441, %v448
        %s451 = smul.u32 8, 6
        %s452 = smul.u32 %s451, 3
        %s453 = sshll.u32 %s452, 4
        %454 = dma.done [#allocation6], %s453
        %v455 = vld [vmem:[#allocation2] sm:$0xff]
        %v456 = vld [vmem:[#allocation2 + $0x8] sm:$0xff]
        %v457 = vld [vmem:[#allocation2 + $0x10] sm:$0xff]
        %v458 = vld [vmem:[#allocation2 + $0x18] sm:$0xff]
        %v459 = vld [vmem:[#allocation2 + $0x20] sm:$0xff]
        %v460 = vld [vmem:[#allocation2 + $0x28] sm:$0xff]
        %463 = vrot.lane.b32.xlu0 %v457, 17
        %v464 = vpop.permute.xlu0 %463
        %465 = vrot.lane.b32.xlu0 %v460, 17
        %v466 = vpop.permute.xlu0 %465
        %473 = vrot.lane.b32.xlu0 %v455, 17
        %v474 = vpop.permute.xlu0 %473
        %475 = vrot.lane.b32.xlu0 %v456, 17
        %v476 = vpop.permute.xlu0 %475
        %477 = vrot.lane.b32.xlu0 %v458, 17
        %v478 = vpop.permute.xlu0 %477
        %479 = vrot.lane.b32.xlu0 %v459, 17
        %v480 = vpop.permute.xlu0 %479
        %vm481 = vcmask 138240
        %v482 = vsel %vm481, %v474, %v476
        %v483 = vsel %vm481, %v476, %v464
        %v484 = vsel %vm481, %v478, %v480
        %v485 = vsel %vm481, %v480, %v466
        %v492 = vsel %vm481, %v464, %v474
        %v493 = vsel %vm481, %v466, %v478
        %v495 = vperm.slane %v416, 0
        %v496 = vperm.slane %v416, 1
        %v497 = vperm.slane %v416, 2
        %v501 = vmul.f32 %v492, %v495
        %v502 = vmul.f32 %v482, %v496
        %v503 = vmul.f32 %v483, %v497
        %v504 = vmul.f32 %v493, %v495
        %v505 = vmul.f32 %v484, %v496
        %v506 = vmul.f32 %v485, %v497
        %507 = vst [vmem:[#allocation4] sm:$0xff] %v501
        %508 = vst [vmem:[#allocation4 + $0x8] sm:$0xff] %v502
        %509 = vst [vmem:[#allocation4 + $0x10] sm:$0xff] %v503
        %510 = vst [vmem:[#allocation4 + $0x18] sm:$0xff] %v504
        %511 = vst [vmem:[#allocation4 + $0x20] sm:$0xff] %v505
        %512 = vst [vmem:[#allocation4 + $0x28] sm:$0xff] %v506
        %513 = vrot.lane.b32.xlu0 %v457, 16
        %v514 = vpop.permute.xlu0 %513
        %515 = vrot.lane.b32.xlu0 %v460, 16
        %v516 = vpop.permute.xlu0 %515
        %519 = vrot.lane.b32.xlu0 %v455, 16
        %v520 = vpop.permute.xlu0 %519
        %521 = vrot.lane.b32.xlu0 %v456, 16
        %v522 = vpop.permute.xlu0 %521
        %523 = vrot.lane.b32.xlu0 %v458, 16
        %v524 = vpop.permute.xlu0 %523
        %525 = vrot.lane.b32.xlu0 %v459, 16
        %v526 = vpop.permute.xlu0 %525
        %vm527 = vcmask 130048
        %v528 = vsel %vm527, %v520, %v522
        %v529 = vsel %vm527, %v522, %v514
        %v530 = vsel %vm527, %v524, %v526
        %v531 = vsel %vm527, %v526, %v516
        %v538 = vsel %vm527, %v514, %v520
        %v539 = vsel %vm527, %v516, %v524
        %540 = vst [vmem:[#allocation4 + $0x30] sm:$0xff] %v538
        %541 = vst [vmem:[#allocation4 + $0x38] sm:$0xff] %v528
        %542 = vst [vmem:[#allocation4 + $0x40] sm:$0xff] %v529
        %543 = vst [vmem:[#allocation4 + $0x48] sm:$0xff] %v539
        %544 = vst [vmem:[#allocation4 + $0x50] sm:$0xff] %v530
        %545 = vst [vmem:[#allocation4 + $0x58] sm:$0xff] %v531
        %546 = vrot.lane.b32.xlu0 %v457, 15
        %v547 = vpop.permute.xlu0 %546
        %548 = vrot.lane.b32.xlu0 %v460, 15
        %v549 = vpop.permute.xlu0 %548
        %552 = vrot.lane.b32.xlu0 %v455, 15
        %v553 = vpop.permute.xlu0 %552
        %554 = vrot.lane.b32.xlu0 %v456, 15
        %v555 = vpop.permute.xlu0 %554
        %556 = vrot.lane.b32.xlu0 %v458, 15
        %v557 = vpop.permute.xlu0 %556
        %558 = vrot.lane.b32.xlu0 %v459, 15
        %v559 = vpop.permute.xlu0 %558
        %vm560 = vcmask 121856
        %v561 = vsel %vm560, %v553, %v555
        %v562 = vsel %vm560, %v555, %v547
        %v563 = vsel %vm560, %v557, %v559
        %v564 = vsel %vm560, %v559, %v549
        %v571 = vsel %vm560, %v547, %v553
        %v572 = vsel %vm560, %v549, %v557
        %v574 = vperm.slane %v422, 0
        %v575 = vperm.slane %v422, 1
        %v576 = vperm.slane %v422, 2
        %v580 = vmul.f32 %v571, %v574
        %v581 = vmul.f32 %v561, %v575
        %v582 = vmul.f32 %v562, %v576
        %v583 = vmul.f32 %v572, %v574
        %v584 = vmul.f32 %v563, %v575
        %v585 = vmul.f32 %v564, %v576
        %586 = vst [vmem:[#allocation4 + $0x60] sm:$0xff] %v580
        %587 = vst [vmem:[#allocation4 + $0x68] sm:$0xff] %v581
        %588 = vst [vmem:[#allocation4 + $0x70] sm:$0xff] %v582
        %589 = vst [vmem:[#allocation4 + $0x78] sm:$0xff] %v583
        %590 = vst [vmem:[#allocation4 + $0x80] sm:$0xff] %v584
        %591 = vst [vmem:[#allocation4 + $0x88] sm:$0xff] %v585
        %592 = vrot.lane.b32.xlu0 %v457, 1
        %v593 = vpop.permute.xlu0 %592
        %594 = vrot.lane.b32.xlu0 %v460, 1
        %v595 = vpop.permute.xlu0 %594
        %598 = vrot.lane.b32.xlu0 %v455, 1
        %v599 = vpop.permute.xlu0 %598
        %600 = vrot.lane.b32.xlu0 %v456, 1
        %v601 = vpop.permute.xlu0 %600
        %602 = vrot.lane.b32.xlu0 %v458, 1
        %v603 = vpop.permute.xlu0 %602
        %604 = vrot.lane.b32.xlu0 %v459, 1
        %v605 = vpop.permute.xlu0 %604
        %vm606 = vcmask 7168
        %v607 = vsel %vm606, %v599, %v601
        %v608 = vsel %vm606, %v601, %v593
        %v609 = vsel %vm606, %v603, %v605
        %v610 = vsel %vm606, %v605, %v595
        %v617 = vsel %vm606, %v593, %v599
        %v618 = vsel %vm606, %v595, %v603
        %v619 = vmul.f32 %v617, %v495
        %v620 = vmul.f32 %v607, %v496
        %v621 = vmul.f32 %v608, %v497
        %v622 = vmul.f32 %v618, %v495
        %v623 = vmul.f32 %v609, %v496
        %v624 = vmul.f32 %v610, %v497
        %625 = vst [vmem:[#allocation4 + $0x90] sm:$0xff] %v619
        %626 = vst [vmem:[#allocation4 + $0x98] sm:$0xff] %v620
        %627 = vst [vmem:[#allocation4 + $0xa0] sm:$0xff] %v621
        %628 = vst [vmem:[#allocation4 + $0xa8] sm:$0xff] %v622
        %629 = vst [vmem:[#allocation4 + $0xb0] sm:$0xff] %v623
        %630 = vst [vmem:[#allocation4 + $0xb8] sm:$0xff] %v624
        %631 = vst [vmem:[#allocation4 + $0xc0] sm:$0xff] %v455
        %632 = vst [vmem:[#allocation4 + $0xc8] sm:$0xff] %v456
        %633 = vst [vmem:[#allocation4 + $0xd0] sm:$0xff] %v457
        %634 = vst [vmem:[#allocation4 + $0xd8] sm:$0xff] %v458
        %635 = vst [vmem:[#allocation4 + $0xe0] sm:$0xff] %v459
        %636 = vst [vmem:[#allocation4 + $0xe8] sm:$0xff] %v460
        %637 = vrot.lane.b32.xlu0 %v455, 127
        %v638 = vpop.permute.xlu0 %637
        %639 = vrot.lane.b32.xlu0 %v456, 127
        %v640 = vpop.permute.xlu0 %639
        %641 = vrot.lane.b32.xlu0 %v457, 127
        %v642 = vpop.permute.xlu0 %641
        %643 = vrot.lane.b32.xlu0 %v458, 127
        %v644 = vpop.permute.xlu0 %643
        %645 = vrot.lane.b32.xlu0 %v459, 127
        %v646 = vpop.permute.xlu0 %645
        %647 = vrot.lane.b32.xlu0 %v460, 127
        %v648 = vpop.permute.xlu0 %647
        %vm649 = vcmask 1039360
        %v650 = vsel %vm649, %v638, %v640
        %v651 = vsel %vm649, %v640, %v642
        %v652 = vsel %vm649, %v644, %v646
        %v653 = vsel %vm649, %v646, %v648
        %v662 = vsel %vm649, %v642, %v638
        %v663 = vsel %vm649, %v648, %v644
        %v664 = vmul.f32 %v650, %v574
        %v665 = vmul.f32 %v651, %v575
        %v666 = vmul.f32 %v662, %v576
        %v667 = vmul.f32 %v652, %v574
        %v668 = vmul.f32 %v653, %v575
        %v669 = vmul.f32 %v663, %v576
        %670 = vst [vmem:[#allocation4 + $0xf0] sm:$0xff] %v664
        %671 = vst [vmem:[#allocation4 + $0xf8] sm:$0xff] %v665
        %672 = vst [vmem:[#allocation4 + $0x100] sm:$0xff] %v666
        %673 = vst [vmem:[#allocation4 + $0x108] sm:$0xff] %v667
        %674 = vst [vmem:[#allocation4 + $0x110] sm:$0xff] %v668
        %675 = vst [vmem:[#allocation4 + $0x118] sm:$0xff] %v669
        %676 = vrot.lane.b32.xlu0 %v455, 113
        %v677 = vpop.permute.xlu0 %676
        %678 = vrot.lane.b32.xlu0 %v456, 113
        %v679 = vpop.permute.xlu0 %678
        %680 = vrot.lane.b32.xlu0 %v457, 113
        %v681 = vpop.permute.xlu0 %680
        %682 = vrot.lane.b32.xlu0 %v458, 113
        %v683 = vpop.permute.xlu0 %682
        %684 = vrot.lane.b32.xlu0 %v459, 113
        %v685 = vpop.permute.xlu0 %684
        %686 = vrot.lane.b32.xlu0 %v460, 113
        %v687 = vpop.permute.xlu0 %686
        %vm688 = vcmask 924672
        %v689 = vsel %vm688, %v677, %v679
        %v690 = vsel %vm688, %v679, %v681
        %v691 = vsel %vm688, %v683, %v685
        %v692 = vsel %vm688, %v685, %v687
        %v701 = vsel %vm688, %v681, %v677
        %v702 = vsel %vm688, %v687, %v683
        %v703 = vmul.f32 %v689, %v495
        %v704 = vmul.f32 %v690, %v496
        %v705 = vmul.f32 %v701, %v497
        %v706 = vmul.f32 %v691, %v495
        %v707 = vmul.f32 %v692, %v496
        %v708 = vmul.f32 %v702, %v497
        %709 = vst [vmem:[#allocation4 + $0x120] sm:$0xff] %v703
        %710 = vst [vmem:[#allocation4 + $0x128] sm:$0xff] %v704
        %711 = vst [vmem:[#allocation4 + $0x130] sm:$0xff] %v705
        %712 = vst [vmem:[#allocation4 + $0x138] sm:$0xff] %v706
        %713 = vst [vmem:[#allocation4 + $0x140] sm:$0xff] %v707
        %714 = vst [vmem:[#allocation4 + $0x148] sm:$0xff] %v708
        %715 = vrot.lane.b32.xlu0 %v455, 112
        %v716 = vpop.permute.xlu0 %715
        %717 = vrot.lane.b32.xlu0 %v456, 112
        %v718 = vpop.permute.xlu0 %717
        %719 = vrot.lane.b32.xlu0 %v457, 112
        %v720 = vpop.permute.xlu0 %719
        %721 = vrot.lane.b32.xlu0 %v458, 112
        %v722 = vpop.permute.xlu0 %721
        %723 = vrot.lane.b32.xlu0 %v459, 112
        %v724 = vpop.permute.xlu0 %723
        %725 = vrot.lane.b32.xlu0 %v460, 112
        %v726 = vpop.permute.xlu0 %725
        %vm727 = vcmask 916480
        %v728 = vsel %vm727, %v716, %v718
        %v729 = vsel %vm727, %v718, %v720
        %v730 = vsel %vm727, %v722, %v724
        %v731 = vsel %vm727, %v724, %v726
        %v740 = vsel %vm727, %v720, %v716
        %v741 = vsel %vm727, %v726, %v722
        %742 = vst [vmem:[#allocation4 + $0x150] sm:$0xff] %v728
        %743 = vst [vmem:[#allocation4 + $0x158] sm:$0xff] %v729
        %744 = vst [vmem:[#allocation4 + $0x160] sm:$0xff] %v740
        %745 = vst [vmem:[#allocation4 + $0x168] sm:$0xff] %v730
        %746 = vst [vmem:[#allocation4 + $0x170] sm:$0xff] %v731
        %747 = vst [vmem:[#allocation4 + $0x178] sm:$0xff] %v741
        %748 = vrot.lane.b32.xlu0 %v455, 111
        %v749 = vpop.permute.xlu0 %748
        %750 = vrot.lane.b32.xlu0 %v456, 111
        %v751 = vpop.permute.xlu0 %750
        %752 = vrot.lane.b32.xlu0 %v457, 111
        %v753 = vpop.permute.xlu0 %752
        %754 = vrot.lane.b32.xlu0 %v458, 111
        %v755 = vpop.permute.xlu0 %754
        %756 = vrot.lane.b32.xlu0 %v459, 111
        %v757 = vpop.permute.xlu0 %756
        %758 = vrot.lane.b32.xlu0 %v460, 111
        %v759 = vpop.permute.xlu0 %758
        %vm760 = vcmask 908288
        %v761 = vsel %vm760, %v749, %v751
        %v762 = vsel %vm760, %v751, %v753
        %v763 = vsel %vm760, %v755, %v757
        %v764 = vsel %vm760, %v757, %v759
        %v773 = vsel %vm760, %v753, %v749
        %v774 = vsel %vm760, %v759, %v755
        %v775 = vmul.f32 %v761, %v574
        %v776 = vmul.f32 %v762, %v575
        %v777 = vmul.f32 %v773, %v576
        %v778 = vmul.f32 %v763, %v574
        %v779 = vmul.f32 %v764, %v575
        %v780 = vmul.f32 %v774, %v576
        %781 = vst [vmem:[#allocation4 + $0x180] sm:$0xff] %v775
        %782 = vst [vmem:[#allocation4 + $0x188] sm:$0xff] %v776
        %783 = vst [vmem:[#allocation4 + $0x190] sm:$0xff] %v777
        %784 = vst [vmem:[#allocation4 + $0x198] sm:$0xff] %v778
        %785 = vst [vmem:[#allocation4 + $0x1a0] sm:$0xff] %v779
        %786 = vst [vmem:[#allocation4 + $0x1a8] sm:$0xff] %v780
        %v787 = vld [vmem:[%s3] sm:$0xff]
        %v788 = vld [vmem:[%s3 + $0x8] sm:$0xff]
        %v789 = vld [vmem:[%s3 + $0x10] sm:$0xff]
        %v790 = vld [vmem:[%s3 + $0x18] sm:$0xff]
        %v791 = vld [vmem:[#allocation4] sm:$0xff]
        %v792 = vld [vmem:[#allocation4 + $0x8] sm:$0xff]
        %v793 = vld [vmem:[#allocation4 + $0x10] sm:$0xff]
        %v794 = vld [vmem:[#allocation4 + $0x18] sm:$0xff]
        %v795 = vld [vmem:[#allocation4 + $0x20] sm:$0xff]
        %v796 = vld [vmem:[#allocation4 + $0x28] sm:$0xff]
        %v797 = vld [vmem:[#allocation4 + $0x30] sm:$0xff]
        %v798 = vld [vmem:[#allocation4 + $0x38] sm:$0xff]
        %v799 = vld [vmem:[#allocation4 + $0x40] sm:$0xff]
        %v800 = vld [vmem:[#allocation4 + $0x48] sm:$0xff]
        %v801 = vld [vmem:[#allocation4 + $0x50] sm:$0xff]
        %v802 = vld [vmem:[#allocation4 + $0x58] sm:$0xff]
        %v803 = vld [vmem:[#allocation4 + $0x60] sm:$0xff]
        %v804 = vld [vmem:[#allocation4 + $0x68] sm:$0xff]
        %v805 = vld [vmem:[#allocation4 + $0x70] sm:$0xff]
        %v806 = vld [vmem:[#allocation4 + $0x78] sm:$0xff]
        %v807 = vld [vmem:[#allocation4 + $0x80] sm:$0xff]
        %v808 = vld [vmem:[#allocation4 + $0x88] sm:$0xff]
        %v809 = vld [vmem:[#allocation4 + $0x90] sm:$0xff]
        %v810 = vld [vmem:[#allocation4 + $0x98] sm:$0xff]
        %v811 = vld [vmem:[#allocation4 + $0xa0] sm:$0xff]
        %v812 = vld [vmem:[#allocation4 + $0xa8] sm:$0xff]
        %v813 = vld [vmem:[#allocation4 + $0xb0] sm:$0xff]
        %v814 = vld [vmem:[#allocation4 + $0xb8] sm:$0xff]
        %v815 = vld [vmem:[#allocation4 + $0xc0] sm:$0xff]
        %v816 = vld [vmem:[#allocation4 + $0xc8] sm:$0xff]
        %v817 = vld [vmem:[#allocation4 + $0xd0] sm:$0xff]
        %v818 = vld [vmem:[#allocation4 + $0xd8] sm:$0xff]
        %v819 = vld [vmem:[#allocation4 + $0xe0] sm:$0xff]
        %v820 = vld [vmem:[#allocation4 + $0xe8] sm:$0xff]
        %v821 = vld [vmem:[#allocation4 + $0xf0] sm:$0xff]
        %v822 = vld [vmem:[#allocation4 + $0xf8] sm:$0xff]
        %v823 = vld [vmem:[#allocation4 + $0x100] sm:$0xff]
        %v824 = vld [vmem:[#allocation4 + $0x108] sm:$0xff]
        %v825 = vld [vmem:[#allocation4 + $0x110] sm:$0xff]
        %v826 = vld [vmem:[#allocation4 + $0x118] sm:$0xff]
        %v827 = vld [vmem:[#allocation4 + $0x120] sm:$0xff]
        %v828 = vld [vmem:[#allocation4 + $0x128] sm:$0xff]
        %v829 = vld [vmem:[#allocation4 + $0x130] sm:$0xff]
        %v830 = vld [vmem:[#allocation4 + $0x138] sm:$0xff]
        %v831 = vld [vmem:[#allocation4 + $0x140] sm:$0xff]
        %v832 = vld [vmem:[#allocation4 + $0x148] sm:$0xff]
        %v833 = vld [vmem:[#allocation4 + $0x150] sm:$0xff]
        %v834 = vld [vmem:[#allocation4 + $0x158] sm:$0xff]
        %v835 = vld [vmem:[#allocation4 + $0x160] sm:$0xff]
        %v836 = vld [vmem:[#allocation4 + $0x168] sm:$0xff]
        %v837 = vld [vmem:[#allocation4 + $0x170] sm:$0xff]
        %v838 = vld [vmem:[#allocation4 + $0x178] sm:$0xff]
        %v839 = vld [vmem:[#allocation4 + $0x180] sm:$0xff]
        %v840 = vld [vmem:[#allocation4 + $0x188] sm:$0xff]
        %v841 = vld [vmem:[#allocation4 + $0x190] sm:$0xff]
        %v842 = vld [vmem:[#allocation4 + $0x198] sm:$0xff]
        %v843 = vld [vmem:[#allocation4 + $0x1a0] sm:$0xff]
        %v844 = vld [vmem:[#allocation4 + $0x1a8] sm:$0xff]
        %v845 = vld [vmem:[%s4] sm:$0xff]
        %v846 = vld [vmem:[%s4 + $0x8] sm:$0xff]
        %848 = vset.pattern.permute.xlu0 0
        %849 = vperm.xlu0 %848, %v845
        %v850 = vpop.permute.xlu0 %849
        %853 = vset.pattern.permute.xlu0 0
        %854 = vperm.xlu0 %853, %v846
        %v855 = vpop.permute.xlu0 %854
        %v858 = vsel %vm527, %v788, 0
        %v861 = vsel %vm527, %v790, 0
        %863 = vmatpush.msra.mxu0 %v836
        %864 = vmatpush.msra.mxu0 %v833
        %865 = vmatpush.msra.mxu0 %v830
        %866 = vmatpush.msra.mxu0 %v827
        %867 = vmatpush.msra.mxu0 %v824
        %868 = vmatpush.msra.mxu0 %v821
        %869 = vmatpush.msra.mxu0 %v818
        %870 = vmatpush.msra.mxu0 %v815
        %871 = vmatpush.msra.mxu0 %v812
        %872 = vmatpush.msra.mxu0 %v809
        %873 = vmatpush.msra.mxu0 %v806
        %874 = vmatpush.msra.mxu0 %v803
        %875 = vmatpush.msra.mxu0 %v800
        %876 = vmatpush.msra.mxu0 %v797
        %877 = vmatpush.msra.mxu0 %v794
        %878 = vmatpush.msra.mxu0 %v791
        %879 = vmatmul.f32.gmra.mxu0 %v787
        %v880 = vpop.f32.mrf.mxu0
        %v881 = vadd.f32 %v850, %v880
        %882 = vmatmul.f32.gmra.mxu0 %v789
        %v883 = vpop.f32.mrf.mxu0
        %v884 = vadd.f32 %v855, %v883
        %885 = vdwg.mxu0
        %886 = vmatpush.msra.mxu0 0.0
        %887 = vmatpush.msra.mxu0 0.0
        %888 = vmatpush.msra.mxu0 0.0
        %889 = vmatpush.msra.mxu0 0.0
        %890 = vmatpush.msra.mxu0 0.0
        %891 = vmatpush.msra.mxu0 0.0
        %892 = vmatpush.msra.mxu0 0.0
        %893 = vmatpush.msra.mxu0 0.0
        %894 = vmatpush.msra.mxu0 0.0
        %895 = vmatpush.msra.mxu0 0.0
        %896 = vmatpush.msra.mxu0 0.0
        %897 = vmatpush.msra.mxu0 0.0
        %898 = vmatpush.msra.mxu0 0.0
        %899 = vmatpush.msra.mxu0 0.0
        %900 = vmatpush.msra.mxu0 %v842
        %901 = vmatpush.msra.mxu0 %v839
        %902 = vmatmul.f32.gmra.mxu0 %v858
        %v903 = vpop.f32.mrf.mxu0
        %v904 = vadd.f32 %v881, %v903
        %905 = vmatmul.f32.gmra.mxu0 %v861
        %v906 = vpop.f32.mrf.mxu0
        %v907 = vadd.f32 %v884, %v906
        %908 = vdwg.mxu0
        %909 = vmatpush.msra.mxu0 %v837
        %910 = vmatpush.msra.mxu0 %v834
        %911 = vmatpush.msra.mxu0 %v831
        %912 = vmatpush.msra.mxu0 %v828
        %913 = vmatpush.msra.mxu0 %v825
        %914 = vmatpush.msra.mxu0 %v822
        %915 = vmatpush.msra.mxu0 %v819
        %916 = vmatpush.msra.mxu0 %v816
        %917 = vmatpush.msra.mxu0 %v813
        %918 = vmatpush.msra.mxu0 %v810
        %919 = vmatpush.msra.mxu0 %v807
        %920 = vmatpush.msra.mxu0 %v804
        %921 = vmatpush.msra.mxu0 %v801
        %922 = vmatpush.msra.mxu0 %v798
        %923 = vmatpush.msra.mxu0 %v795
        %924 = vmatpush.msra.mxu0 %v792
        %925 = vmatmul.f32.gmra.mxu0 %v787
        %v926 = vpop.f32.mrf.mxu0
        %v927 = vadd.f32 %v850, %v926
        %928 = vmatmul.f32.gmra.mxu0 %v789
        %v929 = vpop.f32.mrf.mxu0
        %v930 = vadd.f32 %v855, %v929
        %931 = vdwg.mxu0
        %932 = vmatpush.msra.mxu0 0.0
        %933 = vmatpush.msra.mxu0 0.0
        %934 = vmatpush.msra.mxu0 0.0
        %935 = vmatpush.msra.mxu0 0.0
        %936 = vmatpush.msra.mxu0 0.0
        %937 = vmatpush.msra.mxu0 0.0
        %938 = vmatpush.msra.mxu0 0.0
        %939 = vmatpush.msra.mxu0 0.0
        %940 = vmatpush.msra.mxu0 0.0
        %941 = vmatpush.msra.mxu0 0.0
        %942 = vmatpush.msra.mxu0 0.0
        %943 = vmatpush.msra.mxu0 0.0
        %944 = vmatpush.msra.mxu0 0.0
        %945 = vmatpush.msra.mxu0 0.0
        %946 = vmatpush.msra.mxu0 %v843
        %947 = vmatpush.msra.mxu0 %v840
        %948 = vmatmul.f32.gmra.mxu0 %v858
        %v949 = vpop.f32.mrf.mxu0
        %v950 = vadd.f32 %v927, %v949
        %951 = vmatmul.f32.gmra.mxu0 %v861
        %v952 = vpop.f32.mrf.mxu0
        %v953 = vadd.f32 %v930, %v952
        %954 = vdwg.mxu0
        %955 = vmatpush.msra.mxu0 %v838
        %956 = vmatpush.msra.mxu0 %v835
        %957 = vmatpush.msra.mxu0 %v832
        %958 = vmatpush.msra.mxu0 %v829
        %959 = vmatpush.msra.mxu0 %v826
        %960 = vmatpush.msra.mxu0 %v823
        %961 = vmatpush.msra.mxu0 %v820
        %962 = vmatpush.msra.mxu0 %v817
        %963 = vmatpush.msra.mxu0 %v814
        %964 = vmatpush.msra.mxu0 %v811
        %965 = vmatpush.msra.mxu0 %v808
        %966 = vmatpush.msra.mxu0 %v805
        %967 = vmatpush.msra.mxu0 %v802
        %968 = vmatpush.msra.mxu0 %v799
        %969 = vmatpush.msra.mxu0 %v796
        %970 = vmatpush.msra.mxu0 %v793
        %971 = vmatmul.f32.gmra.mxu0 %v787
        %v972 = vpop.f32.mrf.mxu0
        %v973 = vadd.f32 %v850, %v972
        %974 = vmatmul.f32.gmra.mxu0 %v789
        %v975 = vpop.f32.mrf.mxu0
        %v976 = vadd.f32 %v855, %v975
        %977 = vdwg.mxu0
        %978 = vmatpush.msra.mxu0 0.0
        %979 = vmatpush.msra.mxu0 0.0
        %980 = vmatpush.msra.mxu0 0.0
        %981 = vmatpush.msra.mxu0 0.0
        %982 = vmatpush.msra.mxu0 0.0
        %983 = vmatpush.msra.mxu0 0.0
        %984 = vmatpush.msra.mxu0 0.0
        %985 = vmatpush.msra.mxu0 0.0
        %986 = vmatpush.msra.mxu0 0.0
        %987 = vmatpush.msra.mxu0 0.0
        %988 = vmatpush.msra.mxu0 0.0
        %989 = vmatpush.msra.mxu0 0.0
        %990 = vmatpush.msra.mxu0 0.0
        %991 = vmatpush.msra.mxu0 0.0
        %992 = vmatpush.msra.mxu0 %v844
        %993 = vmatpush.msra.mxu0 %v841
        %994 = vmatmul.f32.gmra.mxu0 %v858
        %v995 = vpop.f32.mrf.mxu0
        %v996 = vadd.f32 %v973, %v995
        %997 = vmatmul.f32.gmra.mxu0 %v861
        %v998 = vpop.f32.mrf.mxu0
        %v999 = vadd.f32 %v976, %v998
        %1000 = vdwg.mxu0
        %vm1001 = vcmp.ge.f32.partialorder %v904, 0.0
        %vm1002 = vcmp.ge.f32.partialorder %v950, 0.0
        %vm1003 = vcmp.ge.f32.partialorder %v996, 0.0
        %vm1004 = vcmp.ge.f32.partialorder %v907, 0.0
        %vm1005 = vcmp.ge.f32.partialorder %v953, 0.0
        %vm1006 = vcmp.ge.f32.partialorder %v999, 0.0
        %v1007 = vmul.f32 %v904, 0.2
        %v1008 = vmul.f32 %v950, 0.2
        %v1009 = vmul.f32 %v996, 0.2
        %v1010 = vmul.f32 %v907, 0.2
        %v1011 = vmul.f32 %v953, 0.2
        %v1012 = vmul.f32 %v999, 0.2
        %v1013 = vsel %vm1001, %v904, %v1007
        %v1014 = vsel %vm1002, %v950, %v1008
        %v1015 = vsel %vm1003, %v996, %v1009
        %v1016 = vsel %vm1004, %v907, %v1010
        %v1017 = vsel %vm1005, %v953, %v1011
        %v1018 = vsel %vm1006, %v999, %v1012
        %1019 = vst [vmem:[#allocation3] sm:$0xff] %v1013
        %1020 = vst [vmem:[#allocation3 + $0x8] sm:$0xff] %v1014
        %1021 = vst [vmem:[#allocation3 + $0x10] sm:$0xff] %v1015
        %1022 = vst [vmem:[#allocation3 + $0x18] sm:$0xff] %v1016
        %1023 = vst [vmem:[#allocation3 + $0x20] sm:$0xff] %v1017
        %1024 = vst [vmem:[#allocation3 + $0x28] sm:$0xff] %v1018
        %v1025 = vld [vmem:[#allocation2 + $0x30] sm:$0xff]
        %v1026 = vld [vmem:[#allocation2 + $0x38] sm:$0xff]
        %v1027 = vld [vmem:[#allocation2 + $0x40] sm:$0xff]
        %v1028 = vld [vmem:[#allocation2 + $0x48] sm:$0xff]
        %v1029 = vld [vmem:[#allocation2 + $0x50] sm:$0xff]
        %v1030 = vld [vmem:[#allocation2 + $0x58] sm:$0xff]
        %1033 = vrot.lane.b32.xlu0 %v1027, 17
        %v1034 = vpop.permute.xlu0 %1033
        %1035 = vrot.lane.b32.xlu0 %v1030, 17
        %v1036 = vpop.permute.xlu0 %1035
        %1043 = vrot.lane.b32.xlu0 %v1025, 17
        %v1044 = vpop.permute.xlu0 %1043
        %1045 = vrot.lane.b32.xlu0 %v1026, 17
        %v1046 = vpop.permute.xlu0 %1045
        %1047 = vrot.lane.b32.xlu0 %v1028, 17
        %v1048 = vpop.permute.xlu0 %1047
        %1049 = vrot.lane.b32.xlu0 %v1029, 17
        %v1050 = vpop.permute.xlu0 %1049
        %v1051 = vsel %vm481, %v1044, %v1046
        %v1052 = vsel %vm481, %v1046, %v1034
        %v1053 = vsel %vm481, %v1048, %v1050
        %v1054 = vsel %vm481, %v1050, %v1036
        %v1061 = vsel %vm481, %v1034, %v1044
        %v1062 = vsel %vm481, %v1036, %v1048
        %v1063 = vmul.f32 %v1061, %v495
        %v1064 = vmul.f32 %v1051, %v496
        %v1065 = vmul.f32 %v1052, %v497
        %v1066 = vmul.f32 %v1062, %v495
        %v1067 = vmul.f32 %v1053, %v496
        %v1068 = vmul.f32 %v1054, %v497
        %1069 = vst [vmem:[#allocation4] sm:$0xff] %v1063
        %1070 = vst [vmem:[#allocation4 + $0x8] sm:$0xff] %v1064
        %1071 = vst [vmem:[#allocation4 + $0x10] sm:$0xff] %v1065
        %1072 = vst [vmem:[#allocation4 + $0x18] sm:$0xff] %v1066
        %1073 = vst [vmem:[#allocation4 + $0x20] sm:$0xff] %v1067
        %1074 = vst [vmem:[#allocation4 + $0x28] sm:$0xff] %v1068
        %1075 = vrot.lane.b32.xlu0 %v1027, 16
        %v1076 = vpop.permute.xlu0 %1075
        %1077 = vrot.lane.b32.xlu0 %v1030, 16
        %v1078 = vpop.permute.xlu0 %1077
        %1081 = vrot.lane.b32.xlu0 %v1025, 16
        %v1082 = vpop.permute.xlu0 %1081
        %1083 = vrot.lane.b32.xlu0 %v1026, 16
        %v1084 = vpop.permute.xlu0 %1083
        %1085 = vrot.lane.b32.xlu0 %v1028, 16
        %v1086 = vpop.permute.xlu0 %1085
        %1087 = vrot.lane.b32.xlu0 %v1029, 16
        %v1088 = vpop.permute.xlu0 %1087
        %v1089 = vsel %vm527, %v1082, %v1084
        %v1090 = vsel %vm527, %v1084, %v1076
        %v1091 = vsel %vm527, %v1086, %v1088
        %v1092 = vsel %vm527, %v1088, %v1078
        %v1099 = vsel %vm527, %v1076, %v1082
        %v1100 = vsel %vm527, %v1078, %v1086
        %1101 = vst [vmem:[#allocation4 + $0x30] sm:$0xff] %v1099
        %1102 = vst [vmem:[#allocation4 + $0x38] sm:$0xff] %v1089
        %1103 = vst [vmem:[#allocation4 + $0x40] sm:$0xff] %v1090
        %1104 = vst [vmem:[#allocation4 + $0x48] sm:$0xff] %v1100
        %1105 = vst [vmem:[#allocation4 + $0x50] sm:$0xff] %v1091
        %1106 = vst [vmem:[#allocation4 + $0x58] sm:$0xff] %v1092
        %1107 = vrot.lane.b32.xlu0 %v1027, 15
        %v1108 = vpop.permute.xlu0 %1107
        %1109 = vrot.lane.b32.xlu0 %v1030, 15
        %v1110 = vpop.permute.xlu0 %1109
        %1113 = vrot.lane.b32.xlu0 %v1025, 15
        %v1114 = vpop.permute.xlu0 %1113
        %1115 = vrot.lane.b32.xlu0 %v1026, 15
        %v1116 = vpop.permute.xlu0 %1115
        %1117 = vrot.lane.b32.xlu0 %v1028, 15
        %v1118 = vpop.permute.xlu0 %1117
        %1119 = vrot.lane.b32.xlu0 %v1029, 15
        %v1120 = vpop.permute.xlu0 %1119
        %v1121 = vsel %vm560, %v1114, %v1116
        %v1122 = vsel %vm560, %v1116, %v1108
        %v1123 = vsel %vm560, %v1118, %v1120
        %v1124 = vsel %vm560, %v1120, %v1110
        %v1131 = vsel %vm560, %v1108, %v1114
        %v1132 = vsel %vm560, %v1110, %v1118
        %v1133 = vmul.f32 %v1131, %v574
        %v1134 = vmul.f32 %v1121, %v575
        %v1135 = vmul.f32 %v1122, %v576
        %v1136 = vmul.f32 %v1132, %v574
        %v1137 = vmul.f32 %v1123, %v575
        %v1138 = vmul.f32 %v1124, %v576
        %1139 = vst [vmem:[#allocation4 + $0x60] sm:$0xff] %v1133
        %1140 = vst [vmem:[#allocation4 + $0x68] sm:$0xff] %v1134
        %1141 = vst [vmem:[#allocation4 + $0x70] sm:$0xff] %v1135
        %1142 = vst [vmem:[#allocation4 + $0x78] sm:$0xff] %v1136
        %1143 = vst [vmem:[#allocation4 + $0x80] sm:$0xff] %v1137
        %1144 = vst [vmem:[#allocation4 + $0x88] sm:$0xff] %v1138
        %1145 = vrot.lane.b32.xlu0 %v1027, 1
        %v1146 = vpop.permute.xlu0 %1145
        %1147 = vrot.lane.b32.xlu0 %v1030, 1
        %v1148 = vpop.permute.xlu0 %1147
        %1151 = vrot.lane.b32.xlu0 %v1025, 1
        %v1152 = vpop.permute.xlu0 %1151
        %1153 = vrot.lane.b32.xlu0 %v1026, 1
        %v1154 = vpop.permute.xlu0 %1153
        %1155 = vrot.lane.b32.xlu0 %v1028, 1
        %v1156 = vpop.permute.xlu0 %1155
        %1157 = vrot.lane.b32.xlu0 %v1029, 1
        %v1158 = vpop.permute.xlu0 %1157
        %v1159 = vsel %vm606, %v1152, %v1154
        %v1160 = vsel %vm606, %v1154, %v1146
        %v1161 = vsel %vm606, %v1156, %v1158
        %v1162 = vsel %vm606, %v1158, %v1148
        %v1169 = vsel %vm606, %v1146, %v1152
        %v1170 = vsel %vm606, %v1148, %v1156
        %v1171 = vmul.f32 %v1169, %v495
        %v1172 = vmul.f32 %v1159, %v496
        %v1173 = vmul.f32 %v1160, %v497
        %v1174 = vmul.f32 %v1170, %v495
        %v1175 = vmul.f32 %v1161, %v496
        %v1176 = vmul.f32 %v1162, %v497
        %1177 = vst [vmem:[#allocation4 + $0x90] sm:$0xff] %v1171
        %1178 = vst [vmem:[#allocation4 + $0x98] sm:$0xff] %v1172
        %1179 = vst [vmem:[#allocation4 + $0xa0] sm:$0xff] %v1173
        %1180 = vst [vmem:[#allocation4 + $0xa8] sm:$0xff] %v1174
        %1181 = vst [vmem:[#allocation4 + $0xb0] sm:$0xff] %v1175
        %1182 = vst [vmem:[#allocation4 + $0xb8] sm:$0xff] %v1176
        %1183 = vst [vmem:[#allocation4 + $0xc0] sm:$0xff] %v1025
        %1184 = vst [vmem:[#allocation4 + $0xc8] sm:$0xff] %v1026
        %1185 = vst [vmem:[#allocation4 + $0xd0] sm:$0xff] %v1027
        %1186 = vst [vmem:[#allocation4 + $0xd8] sm:$0xff] %v1028
        %1187 = vst [vmem:[#allocation4 + $0xe0] sm:$0xff] %v1029
        %1188 = vst [vmem:[#allocation4 + $0xe8] sm:$0xff] %v1030
        %1189 = vrot.lane.b32.xlu0 %v1025, 127
        %v1190 = vpop.permute.xlu0 %1189
        %1191 = vrot.lane.b32.xlu0 %v1026, 127
        %v1192 = vpop.permute.xlu0 %1191
        %1193 = vrot.lane.b32.xlu0 %v1027, 127
        %v1194 = vpop.permute.xlu0 %1193
        %1195 = vrot.lane.b32.xlu0 %v1028, 127
        %v1196 = vpop.permute.xlu0 %1195
        %1197 = vrot.lane.b32.xlu0 %v1029, 127
        %v1198 = vpop.permute.xlu0 %1197
        %1199 = vrot.lane.b32.xlu0 %v1030, 127
        %v1200 = vpop.permute.xlu0 %1199
        %v1201 = vsel %vm649, %v1190, %v1192
        %v1202 = vsel %vm649, %v1192, %v1194
        %v1203 = vsel %vm649, %v1196, %v1198
        %v1204 = vsel %vm649, %v1198, %v1200
        %v1213 = vsel %vm649, %v1194, %v1190
        %v1214 = vsel %vm649, %v1200, %v1196
        %v1215 = vmul.f32 %v1201, %v574
        %v1216 = vmul.f32 %v1202, %v575
        %v1217 = vmul.f32 %v1213, %v576
        %v1218 = vmul.f32 %v1203, %v574
        %v1219 = vmul.f32 %v1204, %v575
        %v1220 = vmul.f32 %v1214, %v576
        %1221 = vst [vmem:[#allocation4 + $0xf0] sm:$0xff] %v1215
        %1222 = vst [vmem:[#allocation4 + $0xf8] sm:$0xff] %v1216
        %1223 = vst [vmem:[#allocation4 + $0x100] sm:$0xff] %v1217
        %1224 = vst [vmem:[#allocation4 + $0x108] sm:$0xff] %v1218
        %1225 = vst [vmem:[#allocation4 + $0x110] sm:$0xff] %v1219
        %1226 = vst [vmem:[#allocation4 + $0x118] sm:$0xff] %v1220
        %1227 = vrot.lane.b32.xlu0 %v1025, 113
        %v1228 = vpop.permute.xlu0 %1227
        %1229 = vrot.lane.b32.xlu0 %v1026, 113
        %v1230 = vpop.permute.xlu0 %1229
        %1231 = vrot.lane.b32.xlu0 %v1027, 113
        %v1232 = vpop.permute.xlu0 %1231
        %1233 = vrot.lane.b32.xlu0 %v1028, 113
        %v1234 = vpop.permute.xlu0 %1233
        %1235 = vrot.lane.b32.xlu0 %v1029, 113
        %v1236 = vpop.permute.xlu0 %1235
        %1237 = vrot.lane.b32.xlu0 %v1030, 113
        %v1238 = vpop.permute.xlu0 %1237
        %v1239 = vsel %vm688, %v1228, %v1230
        %v1240 = vsel %vm688, %v1230, %v1232
        %v1241 = vsel %vm688, %v1234, %v1236
        %v1242 = vsel %vm688, %v1236, %v1238
        %v1251 = vsel %vm688, %v1232, %v1228
        %v1252 = vsel %vm688, %v1238, %v1234
        %v1253 = vmul.f32 %v1239, %v495
        %v1254 = vmul.f32 %v1240, %v496
        %v1255 = vmul.f32 %v1251, %v497
        %v1256 = vmul.f32 %v1241, %v495
        %v1257 = vmul.f32 %v1242, %v496
        %v1258 = vmul.f32 %v1252, %v497
        %1259 = vst [vmem:[#allocation4 + $0x120] sm:$0xff] %v1253
        %1260 = vst [vmem:[#allocation4 + $0x128] sm:$0xff] %v1254
        %1261 = vst [vmem:[#allocation4 + $0x130] sm:$0xff] %v1255
        %1262 = vst [vmem:[#allocation4 + $0x138] sm:$0xff] %v1256
        %1263 = vst [vmem:[#allocation4 + $0x140] sm:$0xff] %v1257
        %1264 = vst [vmem:[#allocation4 + $0x148] sm:$0xff] %v1258
        %1265 = vrot.lane.b32.xlu0 %v1025, 112
        %v1266 = vpop.permute.xlu0 %1265
        %1267 = vrot.lane.b32.xlu0 %v1026, 112
        %v1268 = vpop.permute.xlu0 %1267
        %1269 = vrot.lane.b32.xlu0 %v1027, 112
        %v1270 = vpop.permute.xlu0 %1269
        %1271 = vrot.lane.b32.xlu0 %v1028, 112
        %v1272 = vpop.permute.xlu0 %1271
        %1273 = vrot.lane.b32.xlu0 %v1029, 112
        %v1274 = vpop.permute.xlu0 %1273
        %1275 = vrot.lane.b32.xlu0 %v1030, 112
        %v1276 = vpop.permute.xlu0 %1275
        %v1277 = vsel %vm727, %v1266, %v1268
        %v1278 = vsel %vm727, %v1268, %v1270
        %v1279 = vsel %vm727, %v1272, %v1274
        %v1280 = vsel %vm727, %v1274, %v1276
        %v1289 = vsel %vm727, %v1270, %v1266
        %v1290 = vsel %vm727, %v1276, %v1272
        %1291 = vst [vmem:[#allocation4 + $0x150] sm:$0xff] %v1277
        %1292 = vst [vmem:[#allocation4 + $0x158] sm:$0xff] %v1278
        %1293 = vst [vmem:[#allocation4 + $0x160] sm:$0xff] %v1289
        %1294 = vst [vmem:[#allocation4 + $0x168] sm:$0xff] %v1279
        %1295 = vst [vmem:[#allocation4 + $0x170] sm:$0xff] %v1280
        %1296 = vst [vmem:[#allocation4 + $0x178] sm:$0xff] %v1290
        %1297 = vrot.lane.b32.xlu0 %v1025, 111
        %v1298 = vpop.permute.xlu0 %1297
        %1299 = vrot.lane.b32.xlu0 %v1026, 111
        %v1300 = vpop.permute.xlu0 %1299
        %1301 = vrot.lane.b32.xlu0 %v1027, 111
        %v1302 = vpop.permute.xlu0 %1301
        %1303 = vrot.lane.b32.xlu0 %v1028, 111
        %v1304 = vpop.permute.xlu0 %1303
        %1305 = vrot.lane.b32.xlu0 %v1029, 111
        %v1306 = vpop.permute.xlu0 %1305
        %1307 = vrot.lane.b32.xlu0 %v1030, 111
        %v1308 = vpop.permute.xlu0 %1307
        %v1309 = vsel %vm760, %v1298, %v1300
        %v1310 = vsel %vm760, %v1300, %v1302
        %v1311 = vsel %vm760, %v1304, %v1306
        %v1312 = vsel %vm760, %v1306, %v1308
        %v1321 = vsel %vm760, %v1302, %v1298
        %v1322 = vsel %vm760, %v1308, %v1304
        %v1323 = vmul.f32 %v1309, %v574
        %v1324 = vmul.f32 %v1310, %v575
        %v1325 = vmul.f32 %v1321, %v576
        %v1326 = vmul.f32 %v1311, %v574
        %v1327 = vmul.f32 %v1312, %v575
        %v1328 = vmul.f32 %v1322, %v576
        %1329 = vst [vmem:[#allocation4 + $0x180] sm:$0xff] %v1323
        %1330 = vst [vmem:[#allocation4 + $0x188] sm:$0xff] %v1324
        %1331 = vst [vmem:[#allocation4 + $0x190] sm:$0xff] %v1325
        %1332 = vst [vmem:[#allocation4 + $0x198] sm:$0xff] %v1326
        %1333 = vst [vmem:[#allocation4 + $0x1a0] sm:$0xff] %v1327
        %1334 = vst [vmem:[#allocation4 + $0x1a8] sm:$0xff] %v1328
        %v1335 = vld [vmem:[%s3 + $0x20] sm:$0xff]
        %v1336 = vld [vmem:[%s3 + $0x28] sm:$0xff]
        %v1337 = vld [vmem:[%s3 + $0x30] sm:$0xff]
        %v1338 = vld [vmem:[%s3 + $0x38] sm:$0xff]
        %v1339 = vld [vmem:[#allocation4] sm:$0xff]
        %v1340 = vld [vmem:[#allocation4 + $0x8] sm:$0xff]
        %v1341 = vld [vmem:[#allocation4 + $0x10] sm:$0xff]
        %v1342 = vld [vmem:[#allocation4 + $0x18] sm:$0xff]
        %v1343 = vld [vmem:[#allocation4 + $0x20] sm:$0xff]
        %v1344 = vld [vmem:[#allocation4 + $0x28] sm:$0xff]
        %v1345 = vld [vmem:[#allocation4 + $0x30] sm:$0xff]
        %v1346 = vld [vmem:[#allocation4 + $0x38] sm:$0xff]
        %v1347 = vld [vmem:[#allocation4 + $0x40] sm:$0xff]
        %v1348 = vld [vmem:[#allocation4 + $0x48] sm:$0xff]
        %v1349 = vld [vmem:[#allocation4 + $0x50] sm:$0xff]
        %v1350 = vld [vmem:[#allocation4 + $0x58] sm:$0xff]
        %v1351 = vld [vmem:[#allocation4 + $0x60] sm:$0xff]
        %v1352 = vld [vmem:[#allocation4 + $0x68] sm:$0xff]
        %v1353 = vld [vmem:[#allocation4 + $0x70] sm:$0xff]
        %v1354 = vld [vmem:[#allocation4 + $0x78] sm:$0xff]
        %v1355 = vld [vmem:[#allocation4 + $0x80] sm:$0xff]
        %v1356 = vld [vmem:[#allocation4 + $0x88] sm:$0xff]
        %v1357 = vld [vmem:[#allocation4 + $0x90] sm:$0xff]
        %v1358 = vld [vmem:[#allocation4 + $0x98] sm:$0xff]
        %v1359 = vld [vmem:[#allocation4 + $0xa0] sm:$0xff]
        %v1360 = vld [vmem:[#allocation4 + $0xa8] sm:$0xff]
        %v1361 = vld [vmem:[#allocation4 + $0xb0] sm:$0xff]
        %v1362 = vld [vmem:[#allocation4 + $0xb8] sm:$0xff]
        %v1363 = vld [vmem:[#allocation4 + $0xc0] sm:$0xff]
        %v1364 = vld [vmem:[#allocation4 + $0xc8] sm:$0xff]
        %v1365 = vld [vmem:[#allocation4 + $0xd0] sm:$0xff]
        %v1366 = vld [vmem:[#allocation4 + $0xd8] sm:$0xff]
        %v1367 = vld [vmem:[#allocation4 + $0xe0] sm:$0xff]
        %v1368 = vld [vmem:[#allocation4 + $0xe8] sm:$0xff]
        %v1369 = vld [vmem:[#allocation4 + $0xf0] sm:$0xff]
        %v1370 = vld [vmem:[#allocation4 + $0xf8] sm:$0xff]
        %v1371 = vld [vmem:[#allocation4 + $0x100] sm:$0xff]
        %v1372 = vld [vmem:[#allocation4 + $0x108] sm:$0xff]
        %v1373 = vld [vmem:[#allocation4 + $0x110] sm:$0xff]
        %v1374 = vld [vmem:[#allocation4 + $0x118] sm:$0xff]
        %v1375 = vld [vmem:[#allocation4 + $0x120] sm:$0xff]
        %v1376 = vld [vmem:[#allocation4 + $0x128] sm:$0xff]
        %v1377 = vld [vmem:[#allocation4 + $0x130] sm:$0xff]
        %v1378 = vld [vmem:[#allocation4 + $0x138] sm:$0xff]
        %v1379 = vld [vmem:[#allocation4 + $0x140] sm:$0xff]
        %v1380 = vld [vmem:[#allocation4 + $0x148] sm:$0xff]
        %v1381 = vld [vmem:[#allocation4 + $0x150] sm:$0xff]
        %v1382 = vld [vmem:[#allocation4 + $0x158] sm:$0xff]
        %v1383 = vld [vmem:[#allocation4 + $0x160] sm:$0xff]
        %v1384 = vld [vmem:[#allocation4 + $0x168] sm:$0xff]
        %v1385 = vld [vmem:[#allocation4 + $0x170] sm:$0xff]
        %v1386 = vld [vmem:[#allocation4 + $0x178] sm:$0xff]
        %v1387 = vld [vmem:[#allocation4 + $0x180] sm:$0xff]
        %v1388 = vld [vmem:[#allocation4 + $0x188] sm:$0xff]
        %v1389 = vld [vmem:[#allocation4 + $0x190] sm:$0xff]
        %v1390 = vld [vmem:[#allocation4 + $0x198] sm:$0xff]
        %v1391 = vld [vmem:[#allocation4 + $0x1a0] sm:$0xff]
        %v1392 = vld [vmem:[#allocation4 + $0x1a8] sm:$0xff]
        %v1393 = vld [vmem:[%s4 + $0x10] sm:$0xff]
        %v1394 = vld [vmem:[%s4 + $0x18] sm:$0xff]
        %1396 = vset.pattern.permute.xlu0 0
        %1397 = vperm.xlu0 %1396, %v1393
        %v1398 = vpop.permute.xlu0 %1397
        %1401 = vset.pattern.permute.xlu0 0
        %1402 = vperm.xlu0 %1401, %v1394
        %v1403 = vpop.permute.xlu0 %1402
        %v1406 = vsel %vm527, %v1336, 0
        %v1409 = vsel %vm527, %v1338, 0
        %1411 = vmatpush.msra.mxu0 %v1384
        %1412 = vmatpush.msra.mxu0 %v1381
        %1413 = vmatpush.msra.mxu0 %v1378
        %1414 = vmatpush.msra.mxu0 %v1375
        %1415 = vmatpush.msra.mxu0 %v1372
        %1416 = vmatpush.msra.mxu0 %v1369
        %1417 = vmatpush.msra.mxu0 %v1366
        %1418 = vmatpush.msra.mxu0 %v1363
        %1419 = vmatpush.msra.mxu0 %v1360
        %1420 = vmatpush.msra.mxu0 %v1357
        %1421 = vmatpush.msra.mxu0 %v1354
        %1422 = vmatpush.msra.mxu0 %v1351
        %1423 = vmatpush.msra.mxu0 %v1348
        %1424 = vmatpush.msra.mxu0 %v1345
        %1425 = vmatpush.msra.mxu0 %v1342
        %1426 = vmatpush.msra.mxu0 %v1339
        %1427 = vmatmul.f32.gmra.mxu0 %v1335
        %v1428 = vpop.f32.mrf.mxu0
        %v1429 = vadd.f32 %v1398, %v1428
        %1430 = vmatmul.f32.gmra.mxu0 %v1337
        %v1431 = vpop.f32.mrf.mxu0
        %v1432 = vadd.f32 %v1403, %v1431
        %1433 = vdwg.mxu0
        %1434 = vmatpush.msra.mxu0 0.0
        %1435 = vmatpush.msra.mxu0 0.0
        %1436 = vmatpush.msra.mxu0 0.0
        %1437 = vmatpush.msra.mxu0 0.0
        %1438 = vmatpush.msra.mxu0 0.0
        %1439 = vmatpush.msra.mxu0 0.0
        %1440 = vmatpush.msra.mxu0 0.0
        %1441 = vmatpush.msra.mxu0 0.0
        %1442 = vmatpush.msra.mxu0 0.0
        %1443 = vmatpush.msra.mxu0 0.0
        %1444 = vmatpush.msra.mxu0 0.0
        %1445 = vmatpush.msra.mxu0 0.0
        %1446 = vmatpush.msra.mxu0 0.0
        %1447 = vmatpush.msra.mxu0 0.0
        %1448 = vmatpush.msra.mxu0 %v1390
        %1449 = vmatpush.msra.mxu0 %v1387
        %1450 = vmatmul.f32.gmra.mxu0 %v1406
        %v1451 = vpop.f32.mrf.mxu0
        %v1452 = vadd.f32 %v1429, %v1451
        %1453 = vmatmul.f32.gmra.mxu0 %v1409
        %v1454 = vpop.f32.mrf.mxu0
        %v1455 = vadd.f32 %v1432, %v1454
        %1456 = vdwg.mxu0
        %1457 = vmatpush.msra.mxu0 %v1385
        %1458 = vmatpush.msra.mxu0 %v1382
        %1459 = vmatpush.msra.mxu0 %v1379
        %1460 = vmatpush.msra.mxu0 %v1376
        %1461 = vmatpush.msra.mxu0 %v1373
        %1462 = vmatpush.msra.mxu0 %v1370
        %1463 = vmatpush.msra.mxu0 %v1367
        %1464 = vmatpush.msra.mxu0 %v1364
        %1465 = vmatpush.msra.mxu0 %v1361
        %1466 = vmatpush.msra.mxu0 %v1358
        %1467 = vmatpush.msra.mxu0 %v1355
        %1468 = vmatpush.msra.mxu0 %v1352
        %1469 = vmatpush.msra.mxu0 %v1349
        %1470 = vmatpush.msra.mxu0 %v1346
        %1471 = vmatpush.msra.mxu0 %v1343
        %1472 = vmatpush.msra.mxu0 %v1340
        %1473 = vmatmul.f32.gmra.mxu0 %v1335
        %v1474 = vpop.f32.mrf.mxu0
        %v1475 = vadd.f32 %v1398, %v1474
        %1476 = vmatmul.f32.gmra.mxu0 %v1337
        %v1477 = vpop.f32.mrf.mxu0
        %v1478 = vadd.f32 %v1403, %v1477
        %1479 = vdwg.mxu0
        %1480 = vmatpush.msra.mxu0 0.0
        %1481 = vmatpush.msra.mxu0 0.0
        %1482 = vmatpush.msra.mxu0 0.0
        %1483 = vmatpush.msra.mxu0 0.0
        %1484 = vmatpush.msra.mxu0 0.0
        %1485 = vmatpush.msra.mxu0 0.0
        %1486 = vmatpush.msra.mxu0 0.0
        %1487 = vmatpush.msra.mxu0 0.0
        %1488 = vmatpush.msra.mxu0 0.0
        %1489 = vmatpush.msra.mxu0 0.0
        %1490 = vmatpush.msra.mxu0 0.0
        %1491 = vmatpush.msra.mxu0 0.0
        %1492 = vmatpush.msra.mxu0 0.0
        %1493 = vmatpush.msra.mxu0 0.0
        %1494 = vmatpush.msra.mxu0 %v1391
        %1495 = vmatpush.msra.mxu0 %v1388
        %1496 = vmatmul.f32.gmra.mxu0 %v1406
        %v1497 = vpop.f32.mrf.mxu0
        %v1498 = vadd.f32 %v1475, %v1497
        %1499 = vmatmul.f32.gmra.mxu0 %v1409
        %v1500 = vpop.f32.mrf.mxu0
        %v1501 = vadd.f32 %v1478, %v1500
        %1502 = vdwg.mxu0
        %1503 = vmatpush.msra.mxu0 %v1386
        %1504 = vmatpush.msra.mxu0 %v1383
        %1505 = vmatpush.msra.mxu0 %v1380
        %1506 = vmatpush.msra.mxu0 %v1377
        %1507 = vmatpush.msra.mxu0 %v1374
        %1508 = vmatpush.msra.mxu0 %v1371
        %1509 = vmatpush.msra.mxu0 %v1368
        %1510 = vmatpush.msra.mxu0 %v1365
        %1511 = vmatpush.msra.mxu0 %v1362
        %1512 = vmatpush.msra.mxu0 %v1359
        %1513 = vmatpush.msra.mxu0 %v1356
        %1514 = vmatpush.msra.mxu0 %v1353
        %1515 = vmatpush.msra.mxu0 %v1350
        %1516 = vmatpush.msra.mxu0 %v1347
        %1517 = vmatpush.msra.mxu0 %v1344
        %1518 = vmatpush.msra.mxu0 %v1341
        %1519 = vmatmul.f32.gmra.mxu0 %v1335
        %v1520 = vpop.f32.mrf.mxu0
        %v1521 = vadd.f32 %v1398, %v1520
        %1522 = vmatmul.f32.gmra.mxu0 %v1337
        %v1523 = vpop.f32.mrf.mxu0
        %v1524 = vadd.f32 %v1403, %v1523
        %1525 = vdwg.mxu0
        %1526 = vmatpush.msra.mxu0 0.0
        %1527 = vmatpush.msra.mxu0 0.0
        %1528 = vmatpush.msra.mxu0 0.0
        %1529 = vmatpush.msra.mxu0 0.0
        %1530 = vmatpush.msra.mxu0 0.0
        %1531 = vmatpush.msra.mxu0 0.0
        %1532 = vmatpush.msra.mxu0 0.0
        %1533 = vmatpush.msra.mxu0 0.0
        %1534 = vmatpush.msra.mxu0 0.0
        %1535 = vmatpush.msra.mxu0 0.0
        %1536 = vmatpush.msra.mxu0 0.0
        %1537 = vmatpush.msra.mxu0 0.0
        %1538 = vmatpush.msra.mxu0 0.0
        %1539 = vmatpush.msra.mxu0 0.0
        %1540 = vmatpush.msra.mxu0 %v1392
        %1541 = vmatpush.msra.mxu0 %v1389
        %1542 = vmatmul.f32.gmra.mxu0 %v1406
        %v1543 = vpop.f32.mrf.mxu0
        %v1544 = vadd.f32 %v1521, %v1543
        %1545 = vmatmul.f32.gmra.mxu0 %v1409
        %v1546 = vpop.f32.mrf.mxu0
        %v1547 = vadd.f32 %v1524, %v1546
        %1548 = vdwg.mxu0
        %vm1549 = vcmp.ge.f32.partialorder %v1452, 0.0
        %vm1550 = vcmp.ge.f32.partialorder %v1498, 0.0
        %vm1551 = vcmp.ge.f32.partialorder %v1544, 0.0
        %vm1552 = vcmp.ge.f32.partialorder %v1455, 0.0
        %vm1553 = vcmp.ge.f32.partialorder %v1501, 0.0
        %vm1554 = vcmp.ge.f32.partialorder %v1547, 0.0
        %v1555 = vmul.f32 %v1452, 0.2
        %v1556 = vmul.f32 %v1498, 0.2
        %v1557 = vmul.f32 %v1544, 0.2
        %v1558 = vmul.f32 %v1455, 0.2
        %v1559 = vmul.f32 %v1501, 0.2
        %v1560 = vmul.f32 %v1547, 0.2
        %v1561 = vsel %vm1549, %v1452, %v1555
        %v1562 = vsel %vm1550, %v1498, %v1556
        %v1563 = vsel %vm1551, %v1544, %v1557
        %v1564 = vsel %vm1552, %v1455, %v1558
        %v1565 = vsel %vm1553, %v1501, %v1559
        %v1566 = vsel %vm1554, %v1547, %v1560
        %1567 = vst [vmem:[#allocation3 + $0x30] sm:$0xff] %v1561
        %1568 = vst [vmem:[#allocation3 + $0x38] sm:$0xff] %v1562
        %1569 = vst [vmem:[#allocation3 + $0x40] sm:$0xff] %v1563
        %1570 = vst [vmem:[#allocation3 + $0x48] sm:$0xff] %v1564
        %1571 = vst [vmem:[#allocation3 + $0x50] sm:$0xff] %v1565
        %1572 = vst [vmem:[#allocation3 + $0x58] sm:$0xff] %v1566
        %v1573 = vld [vmem:[#allocation2 + $0x60] sm:$0xff]
        %v1574 = vld [vmem:[#allocation2 + $0x68] sm:$0xff]
        %v1575 = vld [vmem:[#allocation2 + $0x70] sm:$0xff]
        %v1576 = vld [vmem:[#allocation2 + $0x78] sm:$0xff]
        %v1577 = vld [vmem:[#allocation2 + $0x80] sm:$0xff]
        %v1578 = vld [vmem:[#allocation2 + $0x88] sm:$0xff]
        %1581 = vrot.lane.b32.xlu0 %v1575, 17
        %v1582 = vpop.permute.xlu0 %1581
        %1583 = vrot.lane.b32.xlu0 %v1578, 17
        %v1584 = vpop.permute.xlu0 %1583
        %1591 = vrot.lane.b32.xlu0 %v1573, 17
        %v1592 = vpop.permute.xlu0 %1591
        %1593 = vrot.lane.b32.xlu0 %v1574, 17
        %v1594 = vpop.permute.xlu0 %1593
        %1595 = vrot.lane.b32.xlu0 %v1576, 17
        %v1596 = vpop.permute.xlu0 %1595
        %1597 = vrot.lane.b32.xlu0 %v1577, 17
        %v1598 = vpop.permute.xlu0 %1597
        %v1599 = vsel %vm481, %v1592, %v1594
        %v1600 = vsel %vm481, %v1594, %v1582
        %v1601 = vsel %vm481, %v1596, %v1598
        %v1602 = vsel %vm481, %v1598, %v1584
        %v1609 = vsel %vm481, %v1582, %v1592
        %v1610 = vsel %vm481, %v1584, %v1596
        %v1611 = vmul.f32 %v1609, %v495
        %v1612 = vmul.f32 %v1599, %v496
        %v1613 = vmul.f32 %v1600, %v497
        %v1614 = vmul.f32 %v1610, %v495
        %v1615 = vmul.f32 %v1601, %v496
        %v1616 = vmul.f32 %v1602, %v497
        %1617 = vst [vmem:[#allocation4] sm:$0xff] %v1611
        %1618 = vst [vmem:[#allocation4 + $0x8] sm:$0xff] %v1612
        %1619 = vst [vmem:[#allocation4 + $0x10] sm:$0xff] %v1613
        %1620 = vst [vmem:[#allocation4 + $0x18] sm:$0xff] %v1614
        %1621 = vst [vmem:[#allocation4 + $0x20] sm:$0xff] %v1615
        %1622 = vst [vmem:[#allocation4 + $0x28] sm:$0xff] %v1616
        %1623 = vrot.lane.b32.xlu0 %v1575, 16
        %v1624 = vpop.permute.xlu0 %1623
        %1625 = vrot.lane.b32.xlu0 %v1578, 16
        %v1626 = vpop.permute.xlu0 %1625
        %1629 = vrot.lane.b32.xlu0 %v1573, 16
        %v1630 = vpop.permute.xlu0 %1629
        %1631 = vrot.lane.b32.xlu0 %v1574, 16
        %v1632 = vpop.permute.xlu0 %1631
        %1633 = vrot.lane.b32.xlu0 %v1576, 16
        %v1634 = vpop.permute.xlu0 %1633
        %1635 = vrot.lane.b32.xlu0 %v1577, 16
        %v1636 = vpop.permute.xlu0 %1635
        %v1637 = vsel %vm527, %v1630, %v1632
        %v1638 = vsel %vm527, %v1632, %v1624
        %v1639 = vsel %vm527, %v1634, %v1636
        %v1640 = vsel %vm527, %v1636, %v1626
        %v1647 = vsel %vm527, %v1624, %v1630
        %v1648 = vsel %vm527, %v1626, %v1634
        %1649 = vst [vmem:[#allocation4 + $0x30] sm:$0xff] %v1647
        %1650 = vst [vmem:[#allocation4 + $0x38] sm:$0xff] %v1637
        %1651 = vst [vmem:[#allocation4 + $0x40] sm:$0xff] %v1638
        %1652 = vst [vmem:[#allocation4 + $0x48] sm:$0xff] %v1648
        %1653 = vst [vmem:[#allocation4 + $0x50] sm:$0xff] %v1639
        %1654 = vst [vmem:[#allocation4 + $0x58] sm:$0xff] %v1640
        %1655 = vrot.lane.b32.xlu0 %v1575, 15
        %v1656 = vpop.permute.xlu0 %1655
        %1657 = vrot.lane.b32.xlu0 %v1578, 15
        %v1658 = vpop.permute.xlu0 %1657
        %1661 = vrot.lane.b32.xlu0 %v1573, 15
        %v1662 = vpop.permute.xlu0 %1661
        %1663 = vrot.lane.b32.xlu0 %v1574, 15
        %v1664 = vpop.permute.xlu0 %1663
        %1665 = vrot.lane.b32.xlu0 %v1576, 15
        %v1666 = vpop.permute.xlu0 %1665
        %1667 = vrot.lane.b32.xlu0 %v1577, 15
        %v1668 = vpop.permute.xlu0 %1667
        %v1669 = vsel %vm560, %v1662, %v1664
        %v1670 = vsel %vm560, %v1664, %v1656
        %v1671 = vsel %vm560, %v1666, %v1668
        %v1672 = vsel %vm560, %v1668, %v1658
        %v1679 = vsel %vm560, %v1656, %v1662
        %v1680 = vsel %vm560, %v1658, %v1666
        %v1681 = vmul.f32 %v1679, %v574
        %v1682 = vmul.f32 %v1669, %v575
        %v1683 = vmul.f32 %v1670, %v576
        %v1684 = vmul.f32 %v1680, %v574
        %v1685 = vmul.f32 %v1671, %v575
        %v1686 = vmul.f32 %v1672, %v576
        %1687 = vst [vmem:[#allocation4 + $0x60] sm:$0xff] %v1681
        %1688 = vst [vmem:[#allocation4 + $0x68] sm:$0xff] %v1682
        %1689 = vst [vmem:[#allocation4 + $0x70] sm:$0xff] %v1683
        %1690 = vst [vmem:[#allocation4 + $0x78] sm:$0xff] %v1684
        %1691 = vst [vmem:[#allocation4 + $0x80] sm:$0xff] %v1685
        %1692 = vst [vmem:[#allocation4 + $0x88] sm:$0xff] %v1686
        %1693 = vrot.lane.b32.xlu0 %v1575, 1
        %v1694 = vpop.permute.xlu0 %1693
        %1695 = vrot.lane.b32.xlu0 %v1578, 1
        %v1696 = vpop.permute.xlu0 %1695
        %1699 = vrot.lane.b32.xlu0 %v1573, 1
        %v1700 = vpop.permute.xlu0 %1699
        %1701 = vrot.lane.b32.xlu0 %v1574, 1
        %v1702 = vpop.permute.xlu0 %1701
        %1703 = vrot.lane.b32.xlu0 %v1576, 1
        %v1704 = vpop.permute.xlu0 %1703
        %1705 = vrot.lane.b32.xlu0 %v1577, 1
        %v1706 = vpop.permute.xlu0 %1705
        %v1707 = vsel %vm606, %v1700, %v1702
        %v1708 = vsel %vm606, %v1702, %v1694
        %v1709 = vsel %vm606, %v1704, %v1706
        %v1710 = vsel %vm606, %v1706, %v1696
        %v1717 = vsel %vm606, %v1694, %v1700
        %v1718 = vsel %vm606, %v1696, %v1704
        %v1719 = vmul.f32 %v1717, %v495
        %v1720 = vmul.f32 %v1707, %v496
        %v1721 = vmul.f32 %v1708, %v497
        %v1722 = vmul.f32 %v1718, %v495
        %v1723 = vmul.f32 %v1709, %v496
        %v1724 = vmul.f32 %v1710, %v497
        %1725 = vst [vmem:[#allocation4 + $0x90] sm:$0xff] %v1719
        %1726 = vst [vmem:[#allocation4 + $0x98] sm:$0xff] %v1720
        %1727 = vst [vmem:[#allocation4 + $0xa0] sm:$0xff] %v1721
        %1728 = vst [vmem:[#allocation4 + $0xa8] sm:$0xff] %v1722
        %1729 = vst [vmem:[#allocation4 + $0xb0] sm:$0xff] %v1723
        %1730 = vst [vmem:[#allocation4 + $0xb8] sm:$0xff] %v1724
        %1731 = vst [vmem:[#allocation4 + $0xc0] sm:$0xff] %v1573
        %1732 = vst [vmem:[#allocation4 + $0xc8] sm:$0xff] %v1574
        %1733 = vst [vmem:[#allocation4 + $0xd0] sm:$0xff] %v1575
        %1734 = vst [vmem:[#allocation4 + $0xd8] sm:$0xff] %v1576
        %1735 = vst [vmem:[#allocation4 + $0xe0] sm:$0xff] %v1577
        %1736 = vst [vmem:[#allocation4 + $0xe8] sm:$0xff] %v1578
        %1737 = vrot.lane.b32.xlu0 %v1573, 127
        %v1738 = vpop.permute.xlu0 %1737
        %1739 = vrot.lane.b32.xlu0 %v1574, 127
        %v1740 = vpop.permute.xlu0 %1739
        %1741 = vrot.lane.b32.xlu0 %v1575, 127
        %v1742 = vpop.permute.xlu0 %1741
        %1743 = vrot.lane.b32.xlu0 %v1576, 127
        %v1744 = vpop.permute.xlu0 %1743
        %1745 = vrot.lane.b32.xlu0 %v1577, 127
        %v1746 = vpop.permute.xlu0 %1745
        %1747 = vrot.lane.b32.xlu0 %v1578, 127
        %v1748 = vpop.permute.xlu0 %1747
        %v1749 = vsel %vm649, %v1738, %v1740
        %v1750 = vsel %vm649, %v1740, %v1742
        %v1751 = vsel %vm649, %v1744, %v1746
        %v1752 = vsel %vm649, %v1746, %v1748
        %v1761 = vsel %vm649, %v1742, %v1738
        %v1762 = vsel %vm649, %v1748, %v1744
        %v1763 = vmul.f32 %v1749, %v574
        %v1764 = vmul.f32 %v1750, %v575
        %v1765 = vmul.f32 %v1761, %v576
        %v1766 = vmul.f32 %v1751, %v574
        %v1767 = vmul.f32 %v1752, %v575
        %v1768 = vmul.f32 %v1762, %v576
        %1769 = vst [vmem:[#allocation4 + $0xf0] sm:$0xff] %v1763
        %1770 = vst [vmem:[#allocation4 + $0xf8] sm:$0xff] %v1764
        %1771 = vst [vmem:[#allocation4 + $0x100] sm:$0xff] %v1765
        %1772 = vst [vmem:[#allocation4 + $0x108] sm:$0xff] %v1766
        %1773 = vst [vmem:[#allocation4 + $0x110] sm:$0xff] %v1767
        %1774 = vst [vmem:[#allocation4 + $0x118] sm:$0xff] %v1768
        %1775 = vrot.lane.b32.xlu0 %v1573, 113
        %v1776 = vpop.permute.xlu0 %1775
        %1777 = vrot.lane.b32.xlu0 %v1574, 113
        %v1778 = vpop.permute.xlu0 %1777
        %1779 = vrot.lane.b32.xlu0 %v1575, 113
        %v1780 = vpop.permute.xlu0 %1779
        %1781 = vrot.lane.b32.xlu0 %v1576, 113
        %v1782 = vpop.permute.xlu0 %1781
        %1783 = vrot.lane.b32.xlu0 %v1577, 113
        %v1784 = vpop.permute.xlu0 %1783
        %1785 = vrot.lane.b32.xlu0 %v1578, 113
        %v1786 = vpop.permute.xlu0 %1785
        %v1787 = vsel %vm688, %v1776, %v1778
        %v1788 = vsel %vm688, %v1778, %v1780
        %v1789 = vsel %vm688, %v1782, %v1784
        %v1790 = vsel %vm688, %v1784, %v1786
        %v1799 = vsel %vm688, %v1780, %v1776
        %v1800 = vsel %vm688, %v1786, %v1782
        %v1801 = vmul.f32 %v1787, %v495
        %v1802 = vmul.f32 %v1788, %v496
        %v1803 = vmul.f32 %v1799, %v497
        %v1804 = vmul.f32 %v1789, %v495
        %v1805 = vmul.f32 %v1790, %v496
        %v1806 = vmul.f32 %v1800, %v497
        %1807 = vst [vmem:[#allocation4 + $0x120] sm:$0xff] %v1801
        %1808 = vst [vmem:[#allocation4 + $0x128] sm:$0xff] %v1802
        %1809 = vst [vmem:[#allocation4 + $0x130] sm:$0xff] %v1803
        %1810 = vst [vmem:[#allocation4 + $0x138] sm:$0xff] %v1804
        %1811 = vst [vmem:[#allocation4 + $0x140] sm:$0xff] %v1805
        %1812 = vst [vmem:[#allocation4 + $0x148] sm:$0xff] %v1806
        %1813 = vrot.lane.b32.xlu0 %v1573, 112
        %v1814 = vpop.permute.xlu0 %1813
        %1815 = vrot.lane.b32.xlu0 %v1574, 112
        %v1816 = vpop.permute.xlu0 %1815
        %1817 = vrot.lane.b32.xlu0 %v1575, 112
        %v1818 = vpop.permute.xlu0 %1817
        %1819 = vrot.lane.b32.xlu0 %v1576, 112
        %v1820 = vpop.permute.xlu0 %1819
        %1821 = vrot.lane.b32.xlu0 %v1577, 112
        %v1822 = vpop.permute.xlu0 %1821
        %1823 = vrot.lane.b32.xlu0 %v1578, 112
        %v1824 = vpop.permute.xlu0 %1823
        %v1825 = vsel %vm727, %v1814, %v1816
        %v1826 = vsel %vm727, %v1816, %v1818
        %v1827 = vsel %vm727, %v1820, %v1822
        %v1828 = vsel %vm727, %v1822, %v1824
        %v1837 = vsel %vm727, %v1818, %v1814
        %v1838 = vsel %vm727, %v1824, %v1820
        %1839 = vst [vmem:[#allocation4 + $0x150] sm:$0xff] %v1825
        %1840 = vst [vmem:[#allocation4 + $0x158] sm:$0xff] %v1826
        %1841 = vst [vmem:[#allocation4 + $0x160] sm:$0xff] %v1837
        %1842 = vst [vmem:[#allocation4 + $0x168] sm:$0xff] %v1827
        %1843 = vst [vmem:[#allocation4 + $0x170] sm:$0xff] %v1828
        %1844 = vst [vmem:[#allocation4 + $0x178] sm:$0xff] %v1838
        %1845 = vrot.lane.b32.xlu0 %v1573, 111
        %v1846 = vpop.permute.xlu0 %1845
        %1847 = vrot.lane.b32.xlu0 %v1574, 111
        %v1848 = vpop.permute.xlu0 %1847
        %1849 = vrot.lane.b32.xlu0 %v1575, 111
        %v1850 = vpop.permute.xlu0 %1849
        %1851 = vrot.lane.b32.xlu0 %v1576, 111
        %v1852 = vpop.permute.xlu0 %1851
        %1853 = vrot.lane.b32.xlu0 %v1577, 111
        %v1854 = vpop.permute.xlu0 %1853
        %1855 = vrot.lane.b32.xlu0 %v1578, 111
        %v1856 = vpop.permute.xlu0 %1855
        %v1857 = vsel %vm760, %v1846, %v1848
        %v1858 = vsel %vm760, %v1848, %v1850
        %v1859 = vsel %vm760, %v1852, %v1854
        %v1860 = vsel %vm760, %v1854, %v1856
        %v1869 = vsel %vm760, %v1850, %v1846
        %v1870 = vsel %vm760, %v1856, %v1852
        %v1871 = vmul.f32 %v1857, %v574
        %v1872 = vmul.f32 %v1858, %v575
        %v1873 = vmul.f32 %v1869, %v576
        %v1874 = vmul.f32 %v1859, %v574
        %v1875 = vmul.f32 %v1860, %v575
        %v1876 = vmul.f32 %v1870, %v576
        %1877 = vst [vmem:[#allocation4 + $0x180] sm:$0xff] %v1871
        %1878 = vst [vmem:[#allocation4 + $0x188] sm:$0xff] %v1872
        %1879 = vst [vmem:[#allocation4 + $0x190] sm:$0xff] %v1873
        %1880 = vst [vmem:[#allocation4 + $0x198] sm:$0xff] %v1874
        %1881 = vst [vmem:[#allocation4 + $0x1a0] sm:$0xff] %v1875
        %1882 = vst [vmem:[#allocation4 + $0x1a8] sm:$0xff] %v1876
        %v1883 = vld [vmem:[%s3 + $0x40] sm:$0xff]
        %v1884 = vld [vmem:[%s3 + $0x48] sm:$0xff]
        %v1885 = vld [vmem:[%s3 + $0x50] sm:$0xff]
        %v1886 = vld [vmem:[%s3 + $0x58] sm:$0xff]
        %v1887 = vld [vmem:[#allocation4] sm:$0xff]
        %v1888 = vld [vmem:[#allocation4 + $0x8] sm:$0xff]
        %v1889 = vld [vmem:[#allocation4 + $0x10] sm:$0xff]
        %v1890 = vld [vmem:[#allocation4 + $0x18] sm:$0xff]
        %v1891 = vld [vmem:[#allocation4 + $0x20] sm:$0xff]
        %v1892 = vld [vmem:[#allocation4 + $0x28] sm:$0xff]
        %v1893 = vld [vmem:[#allocation4 + $0x30] sm:$0xff]
        %v1894 = vld [vmem:[#allocation4 + $0x38] sm:$0xff]
        %v1895 = vld [vmem:[#allocation4 + $0x40] sm:$0xff]
        %v1896 = vld [vmem:[#allocation4 + $0x48] sm:$0xff]
        %v1897 = vld [vmem:[#allocation4 + $0x50] sm:$0xff]
        %v1898 = vld [vmem:[#allocation4 + $0x58] sm:$0xff]
        %v1899 = vld [vmem:[#allocation4 + $0x60] sm:$0xff]
        %v1900 = vld [vmem:[#allocation4 + $0x68] sm:$0xff]
        %v1901 = vld [vmem:[#allocation4 + $0x70] sm:$0xff]
        %v1902 = vld [vmem:[#allocation4 + $0x78] sm:$0xff]
        %v1903 = vld [vmem:[#allocation4 + $0x80] sm:$0xff]
        %v1904 = vld [vmem:[#allocation4 + $0x88] sm:$0xff]
        %v1905 = vld [vmem:[#allocation4 + $0x90] sm:$0xff]
        %v1906 = vld [vmem:[#allocation4 + $0x98] sm:$0xff]
        %v1907 = vld [vmem:[#allocation4 + $0xa0] sm:$0xff]
        %v1908 = vld [vmem:[#allocation4 + $0xa8] sm:$0xff]
        %v1909 = vld [vmem:[#allocation4 + $0xb0] sm:$0xff]
        %v1910 = vld [vmem:[#allocation4 + $0xb8] sm:$0xff]
        %v1911 = vld [vmem:[#allocation4 + $0xc0] sm:$0xff]
        %v1912 = vld [vmem:[#allocation4 + $0xc8] sm:$0xff]
        %v1913 = vld [vmem:[#allocation4 + $0xd0] sm:$0xff]
        %v1914 = vld [vmem:[#allocation4 + $0xd8] sm:$0xff]
        %v1915 = vld [vmem:[#allocation4 + $0xe0] sm:$0xff]
        %v1916 = vld [vmem:[#allocation4 + $0xe8] sm:$0xff]
        %v1917 = vld [vmem:[#allocation4 + $0xf0] sm:$0xff]
        %v1918 = vld [vmem:[#allocation4 + $0xf8] sm:$0xff]
        %v1919 = vld [vmem:[#allocation4 + $0x100] sm:$0xff]
        %v1920 = vld [vmem:[#allocation4 + $0x108] sm:$0xff]
        %v1921 = vld [vmem:[#allocation4 + $0x110] sm:$0xff]
        %v1922 = vld [vmem:[#allocation4 + $0x118] sm:$0xff]
        %v1923 = vld [vmem:[#allocation4 + $0x120] sm:$0xff]
        %v1924 = vld [vmem:[#allocation4 + $0x128] sm:$0xff]
        %v1925 = vld [vmem:[#allocation4 + $0x130] sm:$0xff]
        %v1926 = vld [vmem:[#allocation4 + $0x138] sm:$0xff]
        %v1927 = vld [vmem:[#allocation4 + $0x140] sm:$0xff]
        %v1928 = vld [vmem:[#allocation4 + $0x148] sm:$0xff]
        %v1929 = vld [vmem:[#allocation4 + $0x150] sm:$0xff]
        %v1930 = vld [vmem:[#allocation4 + $0x158] sm:$0xff]
        %v1931 = vld [vmem:[#allocation4 + $0x160] sm:$0xff]
        %v1932 = vld [vmem:[#allocation4 + $0x168] sm:$0xff]
        %v1933 = vld [vmem:[#allocation4 + $0x170] sm:$0xff]
        %v1934 = vld [vmem:[#allocation4 + $0x178] sm:$0xff]
        %v1935 = vld [vmem:[#allocation4 + $0x180] sm:$0xff]
        %v1936 = vld [vmem:[#allocation4 + $0x188] sm:$0xff]
        %v1937 = vld [vmem:[#allocation4 + $0x190] sm:$0xff]
        %v1938 = vld [vmem:[#allocation4 + $0x198] sm:$0xff]
        %v1939 = vld [vmem:[#allocation4 + $0x1a0] sm:$0xff]
        %v1940 = vld [vmem:[#allocation4 + $0x1a8] sm:$0xff]
        %v1941 = vld [vmem:[%s4 + $0x20] sm:$0xff]
        %v1942 = vld [vmem:[%s4 + $0x28] sm:$0xff]
        %1944 = vset.pattern.permute.xlu0 0
        %1945 = vperm.xlu0 %1944, %v1941
        %v1946 = vpop.permute.xlu0 %1945
        %1949 = vset.pattern.permute.xlu0 0
        %1950 = vperm.xlu0 %1949, %v1942
        %v1951 = vpop.permute.xlu0 %1950
        %v1954 = vsel %vm527, %v1884, 0
        %v1957 = vsel %vm527, %v1886, 0
        %1959 = vmatpush.msra.mxu0 %v1932
        %1960 = vmatpush.msra.mxu0 %v1929
        %1961 = vmatpush.msra.mxu0 %v1926
        %1962 = vmatpush.msra.mxu0 %v1923
        %1963 = vmatpush.msra.mxu0 %v1920
        %1964 = vmatpush.msra.mxu0 %v1917
        %1965 = vmatpush.msra.mxu0 %v1914
        %1966 = vmatpush.msra.mxu0 %v1911
        %1967 = vmatpush.msra.mxu0 %v1908
        %1968 = vmatpush.msra.mxu0 %v1905
        %1969 = vmatpush.msra.mxu0 %v1902
        %1970 = vmatpush.msra.mxu0 %v1899
        %1971 = vmatpush.msra.mxu0 %v1896
        %1972 = vmatpush.msra.mxu0 %v1893
        %1973 = vmatpush.msra.mxu0 %v1890
        %1974 = vmatpush.msra.mxu0 %v1887
        %1975 = vmatmul.f32.gmra.mxu0 %v1883
        %v1976 = vpop.f32.mrf.mxu0
        %v1977 = vadd.f32 %v1946, %v1976
        %1978 = vmatmul.f32.gmra.mxu0 %v1885
        %v1979 = vpop.f32.mrf.mxu0
        %v1980 = vadd.f32 %v1951, %v1979
        %1981 = vdwg.mxu0
        %1982 = vmatpush.msra.mxu0 0.0
        %1983 = vmatpush.msra.mxu0 0.0
        %1984 = vmatpush.msra.mxu0 0.0
        %1985 = vmatpush.msra.mxu0 0.0
        %1986 = vmatpush.msra.mxu0 0.0
        %1987 = vmatpush.msra.mxu0 0.0
        %1988 = vmatpush.msra.mxu0 0.0
        %1989 = vmatpush.msra.mxu0 0.0
        %1990 = vmatpush.msra.mxu0 0.0
        %1991 = vmatpush.msra.mxu0 0.0
        %1992 = vmatpush.msra.mxu0 0.0
        %1993 = vmatpush.msra.mxu0 0.0
        %1994 = vmatpush.msra.mxu0 0.0
        %1995 = vmatpush.msra.mxu0 0.0
        %1996 = vmatpush.msra.mxu0 %v1938
        %1997 = vmatpush.msra.mxu0 %v1935
        %1998 = vmatmul.f32.gmra.mxu0 %v1954
        %v1999 = vpop.f32.mrf.mxu0
        %v2000 = vadd.f32 %v1977, %v1999
        %2001 = vmatmul.f32.gmra.mxu0 %v1957
        %v2002 = vpop.f32.mrf.mxu0
        %v2003 = vadd.f32 %v1980, %v2002
        %2004 = vdwg.mxu0
        %2005 = vmatpush.msra.mxu0 %v1933
        %2006 = vmatpush.msra.mxu0 %v1930
        %2007 = vmatpush.msra.mxu0 %v1927
        %2008 = vmatpush.msra.mxu0 %v1924
        %2009 = vmatpush.msra.mxu0 %v1921
        %2010 = vmatpush.msra.mxu0 %v1918
        %2011 = vmatpush.msra.mxu0 %v1915
        %2012 = vmatpush.msra.mxu0 %v1912
        %2013 = vmatpush.msra.mxu0 %v1909
        %2014 = vmatpush.msra.mxu0 %v1906
        %2015 = vmatpush.msra.mxu0 %v1903
        %2016 = vmatpush.msra.mxu0 %v1900
        %2017 = vmatpush.msra.mxu0 %v1897
        %2018 = vmatpush.msra.mxu0 %v1894
        %2019 = vmatpush.msra.mxu0 %v1891
        %2020 = vmatpush.msra.mxu0 %v1888
        %2021 = vmatmul.f32.gmra.mxu0 %v1883
        %v2022 = vpop.f32.mrf.mxu0
        %v2023 = vadd.f32 %v1946, %v2022
        %2024 = vmatmul.f32.gmra.mxu0 %v1885
        %v2025 = vpop.f32.mrf.mxu0
        %v2026 = vadd.f32 %v1951, %v2025
        %2027 = vdwg.mxu0
        %2028 = vmatpush.msra.mxu0 0.0
        %2029 = vmatpush.msra.mxu0 0.0
        %2030 = vmatpush.msra.mxu0 0.0
        %2031 = vmatpush.msra.mxu0 0.0
        %2032 = vmatpush.msra.mxu0 0.0
        %2033 = vmatpush.msra.mxu0 0.0
        %2034 = vmatpush.msra.mxu0 0.0
        %2035 = vmatpush.msra.mxu0 0.0
        %2036 = vmatpush.msra.mxu0 0.0
        %2037 = vmatpush.msra.mxu0 0.0
        %2038 = vmatpush.msra.mxu0 0.0
        %2039 = vmatpush.msra.mxu0 0.0
        %2040 = vmatpush.msra.mxu0 0.0
        %2041 = vmatpush.msra.mxu0 0.0
        %2042 = vmatpush.msra.mxu0 %v1939
        %2043 = vmatpush.msra.mxu0 %v1936
        %2044 = vmatmul.f32.gmra.mxu0 %v1954
        %v2045 = vpop.f32.mrf.mxu0
        %v2046 = vadd.f32 %v2023, %v2045
        %2047 = vmatmul.f32.gmra.mxu0 %v1957
        %v2048 = vpop.f32.mrf.mxu0
        %v2049 = vadd.f32 %v2026, %v2048
        %2050 = vdwg.mxu0
        %2051 = vmatpush.msra.mxu0 %v1934
        %2052 = vmatpush.msra.mxu0 %v1931
        %2053 = vmatpush.msra.mxu0 %v1928
        %2054 = vmatpush.msra.mxu0 %v1925
        %2055 = vmatpush.msra.mxu0 %v1922
        %2056 = vmatpush.msra.mxu0 %v1919
        %2057 = vmatpush.msra.mxu0 %v1916
        %2058 = vmatpush.msra.mxu0 %v1913
        %2059 = vmatpush.msra.mxu0 %v1910
        %2060 = vmatpush.msra.mxu0 %v1907
        %2061 = vmatpush.msra.mxu0 %v1904
        %2062 = vmatpush.msra.mxu0 %v1901
        %2063 = vmatpush.msra.mxu0 %v1898
        %2064 = vmatpush.msra.mxu0 %v1895
        %2065 = vmatpush.msra.mxu0 %v1892
        %2066 = vmatpush.msra.mxu0 %v1889
        %2067 = vmatmul.f32.gmra.mxu0 %v1883
        %v2068 = vpop.f32.mrf.mxu0
        %v2069 = vadd.f32 %v1946, %v2068
        %2070 = vmatmul.f32.gmra.mxu0 %v1885
        %v2071 = vpop.f32.mrf.mxu0
        %v2072 = vadd.f32 %v1951, %v2071
        %2073 = vdwg.mxu0
        %2074 = vmatpush.msra.mxu0 0.0
        %2075 = vmatpush.msra.mxu0 0.0
        %2076 = vmatpush.msra.mxu0 0.0
        %2077 = vmatpush.msra.mxu0 0.0
        %2078 = vmatpush.msra.mxu0 0.0
        %2079 = vmatpush.msra.mxu0 0.0
        %2080 = vmatpush.msra.mxu0 0.0
        %2081 = vmatpush.msra.mxu0 0.0
        %2082 = vmatpush.msra.mxu0 0.0
        %2083 = vmatpush.msra.mxu0 0.0
        %2084 = vmatpush.msra.mxu0 0.0
        %2085 = vmatpush.msra.mxu0 0.0
        %2086 = vmatpush.msra.mxu0 0.0
        %2087 = vmatpush.msra.mxu0 0.0
        %2088 = vmatpush.msra.mxu0 %v1940
        %2089 = vmatpush.msra.mxu0 %v1937
        %2090 = vmatmul.f32.gmra.mxu0 %v1954
        %v2091 = vpop.f32.mrf.mxu0
        %v2092 = vadd.f32 %v2069, %v2091
        %2093 = vmatmul.f32.gmra.mxu0 %v1957
        %v2094 = vpop.f32.mrf.mxu0
        %v2095 = vadd.f32 %v2072, %v2094
        %2096 = vdwg.mxu0
        %vm2097 = vcmp.ge.f32.partialorder %v2000, 0.0
        %vm2098 = vcmp.ge.f32.partialorder %v2046, 0.0
        %vm2099 = vcmp.ge.f32.partialorder %v2092, 0.0
        %vm2100 = vcmp.ge.f32.partialorder %v2003, 0.0
        %vm2101 = vcmp.ge.f32.partialorder %v2049, 0.0
        %vm2102 = vcmp.ge.f32.partialorder %v2095, 0.0
        %v2103 = vmul.f32 %v2000, 0.2
        %v2104 = vmul.f32 %v2046, 0.2
        %v2105 = vmul.f32 %v2092, 0.2
        %v2106 = vmul.f32 %v2003, 0.2
        %v2107 = vmul.f32 %v2049, 0.2
        %v2108 = vmul.f32 %v2095, 0.2
        %v2109 = vsel %vm2097, %v2000, %v2103
        %v2110 = vsel %vm2098, %v2046, %v2104
        %v2111 = vsel %vm2099, %v2092, %v2105
        %v2112 = vsel %vm2100, %v2003, %v2106
        %v2113 = vsel %vm2101, %v2049, %v2107
        %v2114 = vsel %vm2102, %v2095, %v2108
        %2115 = vst [vmem:[#allocation3 + $0x60] sm:$0xff] %v2109
        %2116 = vst [vmem:[#allocation3 + $0x68] sm:$0xff] %v2110
        %2117 = vst [vmem:[#allocation3 + $0x70] sm:$0xff] %v2111
        %2118 = vst [vmem:[#allocation3 + $0x78] sm:$0xff] %v2112
        %2119 = vst [vmem:[#allocation3 + $0x80] sm:$0xff] %v2113
        %2120 = vst [vmem:[#allocation3 + $0x88] sm:$0xff] %v2114
        %v2121 = vld [vmem:[%s5] sm:$0xff]
        %v2122 = vld [vmem:[%s5 + $0x8] sm:$0xff]
        %v2123 = vld [vmem:[#allocation3] sm:$0xff]
        %v2124 = vld [vmem:[#allocation3 + $0x8] sm:$0xff]
        %v2125 = vld [vmem:[#allocation3 + $0x10] sm:$0xff]
        %v2126 = vld [vmem:[#allocation3 + $0x18] sm:$0xff]
        %v2127 = vld [vmem:[#allocation3 + $0x20] sm:$0xff]
        %v2128 = vld [vmem:[#allocation3 + $0x28] sm:$0xff]
        %v2129 = vld [vmem:[#allocation3 + $0x30] sm:$0xff]
        %v2130 = vld [vmem:[#allocation3 + $0x38] sm:$0xff]
        %v2131 = vld [vmem:[#allocation3 + $0x40] sm:$0xff]
        %v2132 = vld [vmem:[#allocation3 + $0x48] sm:$0xff]
        %v2133 = vld [vmem:[#allocation3 + $0x50] sm:$0xff]
        %v2134 = vld [vmem:[#allocation3 + $0x58] sm:$0xff]
        %v2135 = vld [vmem:[#allocation3 + $0x60] sm:$0xff]
        %v2136 = vld [vmem:[#allocation3 + $0x68] sm:$0xff]
        %v2137 = vld [vmem:[#allocation3 + $0x70] sm:$0xff]
        %v2138 = vld [vmem:[#allocation3 + $0x78] sm:$0xff]
        %v2139 = vld [vmem:[#allocation3 + $0x80] sm:$0xff]
        %v2140 = vld [vmem:[#allocation3 + $0x88] sm:$0xff]
        %v2141 = vld [vmem:[%s6] sm:$0xff]
        %v2142 = vld [vmem:[%s6 + $0x8] sm:$0xff]
        %2144 = vset.pattern.permute.xlu0 0
        %2145 = vperm.xlu0 %2144, %v2141
        %v2146 = vpop.permute.xlu0 %2145
        %2149 = vset.pattern.permute.xlu0 0
        %2150 = vperm.xlu0 %2149, %v2142
        %v2151 = vpop.permute.xlu0 %2150
        %vm2153 = vcmask 392192
        %v2155 = vsel %vm2153, %v2121, 0
        %v2158 = vsel %vm2153, %v2122, 0
        %2160 = vmatpush.msra.mxu0 0.0
        %2161 = vmatpush.msra.mxu0 0.0
        %2162 = vmatpush.msra.mxu0 0.0
        %2163 = vmatpush.msra.mxu0 0.0
        %2164 = vmatpush.msra.mxu0 0.0
        %2165 = vmatpush.msra.mxu0 0.0
        %2166 = vmatpush.msra.mxu0 0.0
        %2167 = vmatpush.msra.mxu0 0.0
        %2168 = vmatpush.msra.mxu0 0.0
        %2169 = vmatpush.msra.mxu0 0.0
        %2170 = vmatpush.msra.mxu0 %v2138
        %2171 = vmatpush.msra.mxu0 %v2135
        %2172 = vmatpush.msra.mxu0 %v2132
        %2173 = vmatpush.msra.mxu0 %v2129
        %2174 = vmatpush.msra.mxu0 %v2126
        %2175 = vmatpush.msra.mxu0 %v2123
        %2176 = vmatmul.f32.gmra.mxu0 %v2155
        %v2177 = vpop.f32.mrf.mxu0
        %v2178 = vadd.f32 %v2146, %v2177
        %2179 = vmatmul.f32.gmra.mxu0 %v2158
        %v2180 = vpop.f32.mrf.mxu0
        %v2181 = vadd.f32 %v2151, %v2180
        %2182 = vdwg.mxu0
        %2183 = vmatpush.msra.mxu0 0.0
        %2184 = vmatpush.msra.mxu0 0.0
        %2185 = vmatpush.msra.mxu0 0.0
        %2186 = vmatpush.msra.mxu0 0.0
        %2187 = vmatpush.msra.mxu0 0.0
        %2188 = vmatpush.msra.mxu0 0.0
        %2189 = vmatpush.msra.mxu0 0.0
        %2190 = vmatpush.msra.mxu0 0.0
        %2191 = vmatpush.msra.mxu0 0.0
        %2192 = vmatpush.msra.mxu0 0.0
        %2193 = vmatpush.msra.mxu0 %v2139
        %2194 = vmatpush.msra.mxu0 %v2136
        %2195 = vmatpush.msra.mxu0 %v2133
        %2196 = vmatpush.msra.mxu0 %v2130
        %2197 = vmatpush.msra.mxu0 %v2127
        %2198 = vmatpush.msra.mxu0 %v2124
        %2199 = vmatmul.f32.gmra.mxu0 %v2155
        %v2200 = vpop.f32.mrf.mxu0
        %v2201 = vadd.f32 %v2146, %v2200
        %2202 = vmatmul.f32.gmra.mxu0 %v2158
        %v2203 = vpop.f32.mrf.mxu0
        %v2204 = vadd.f32 %v2151, %v2203
        %2205 = vdwg.mxu0
        %2206 = vmatpush.msra.mxu0 0.0
        %2207 = vmatpush.msra.mxu0 0.0
        %2208 = vmatpush.msra.mxu0 0.0
        %2209 = vmatpush.msra.mxu0 0.0
        %2210 = vmatpush.msra.mxu0 0.0
        %2211 = vmatpush.msra.mxu0 0.0
        %2212 = vmatpush.msra.mxu0 0.0
        %2213 = vmatpush.msra.mxu0 0.0
        %2214 = vmatpush.msra.mxu0 0.0
        %2215 = vmatpush.msra.mxu0 0.0
        %2216 = vmatpush.msra.mxu0 %v2140
        %2217 = vmatpush.msra.mxu0 %v2137
        %2218 = vmatpush.msra.mxu0 %v2134
        %2219 = vmatpush.msra.mxu0 %v2131
        %2220 = vmatpush.msra.mxu0 %v2128
        %2221 = vmatpush.msra.mxu0 %v2125
        %2222 = vmatmul.f32.gmra.mxu0 %v2155
        %v2223 = vpop.f32.mrf.mxu0
        %v2224 = vadd.f32 %v2146, %v2223
        %2225 = vmatmul.f32.gmra.mxu0 %v2158
        %v2226 = vpop.f32.mrf.mxu0
        %v2227 = vadd.f32 %v2151, %v2226
        %2228 = vdwg.mxu0
        %vm2229 = vcmp.ge.f32.partialorder %v2178, 0.0
        %vm2230 = vcmp.ge.f32.partialorder %v2201, 0.0
        %vm2231 = vcmp.ge.f32.partialorder %v2224, 0.0
        %vm2232 = vcmp.ge.f32.partialorder %v2181, 0.0
        %vm2233 = vcmp.ge.f32.partialorder %v2204, 0.0
        %vm2234 = vcmp.ge.f32.partialorder %v2227, 0.0
        %v2235 = vmul.f32 %v2178, 0.2
        %v2236 = vmul.f32 %v2201, 0.2
        %v2237 = vmul.f32 %v2224, 0.2
        %v2238 = vmul.f32 %v2181, 0.2
        %v2239 = vmul.f32 %v2204, 0.2
        %v2240 = vmul.f32 %v2227, 0.2
        %v2241 = vsel %vm2229, %v2178, %v2235
        %v2242 = vsel %vm2230, %v2201, %v2236
        %v2243 = vsel %vm2231, %v2224, %v2237
        %v2244 = vsel %vm2232, %v2181, %v2238
        %v2245 = vsel %vm2233, %v2204, %v2239
        %v2246 = vsel %vm2234, %v2227, %v2240
        %2251 = vrot.lane.b32.xlu0 %v2241, 17
        %v2252 = vpop.permute.xlu0 %2251
        %2253 = vrot.lane.b32.xlu0 %v2242, 17
        %v2254 = vpop.permute.xlu0 %2253
        %2255 = vrot.lane.b32.xlu0 %v2244, 17
        %v2256 = vpop.permute.xlu0 %2255
        %2257 = vrot.lane.b32.xlu0 %v2245, 17
        %v2258 = vpop.permute.xlu0 %2257
        %v2259 = vsel %vm481, %v2252, %v2254
        %v2260 = vsel %vm481, %v2256, %v2258
        %v2264 = vperm.slane %v435, 0
        %v2266 = vmul.f32 %v2259, %v2264
        %v2267 = vmul.f32 %v2260, %v2264
        %2268 = vst [vmem:[#allocation5] sm:$0xff] %v2266
        %2269 = vst [vmem:[#allocation5 + $0x8] sm:$0xff] %v2267
        %2270 = vrot.lane.b32.xlu0 %v2241, 16
        %v2271 = vpop.permute.xlu0 %2270
        %2272 = vrot.lane.b32.xlu0 %v2242, 16
        %v2273 = vpop.permute.xlu0 %2272
        %2274 = vrot.lane.b32.xlu0 %v2244, 16
        %v2275 = vpop.permute.xlu0 %2274
        %2276 = vrot.lane.b32.xlu0 %v2245, 16
        %v2277 = vpop.permute.xlu0 %2276
        %v2278 = vsel %vm527, %v2271, %v2273
        %v2279 = vsel %vm527, %v2275, %v2277
        %v2283 = vperm.slane %v434, 0
        %v2285 = vmul.f32 %v2278, %v2283
        %v2286 = vmul.f32 %v2279, %v2283
        %2287 = vst [vmem:[#allocation5 + $0x10] sm:$0xff] %v2285
        %2288 = vst [vmem:[#allocation5 + $0x18] sm:$0xff] %v2286
        %2289 = vrot.lane.b32.xlu0 %v2241, 15
        %v2290 = vpop.permute.xlu0 %2289
        %2291 = vrot.lane.b32.xlu0 %v2242, 15
        %v2292 = vpop.permute.xlu0 %2291
        %2293 = vrot.lane.b32.xlu0 %v2244, 15
        %v2294 = vpop.permute.xlu0 %2293
        %2295 = vrot.lane.b32.xlu0 %v2245, 15
        %v2296 = vpop.permute.xlu0 %2295
        %v2297 = vsel %vm560, %v2290, %v2292
        %v2298 = vsel %vm560, %v2294, %v2296
        %v2302 = vperm.slane %v442, 0
        %v2304 = vmul.f32 %v2297, %v2302
        %v2305 = vmul.f32 %v2298, %v2302
        %2306 = vst [vmem:[#allocation5 + $0x20] sm:$0xff] %v2304
        %2307 = vst [vmem:[#allocation5 + $0x28] sm:$0xff] %v2305
        %2308 = vrot.lane.b32.xlu0 %v2241, 1
        %v2309 = vpop.permute.xlu0 %2308
        %2310 = vrot.lane.b32.xlu0 %v2242, 1
        %v2311 = vpop.permute.xlu0 %2310
        %2312 = vrot.lane.b32.xlu0 %v2244, 1
        %v2313 = vpop.permute.xlu0 %2312
        %2314 = vrot.lane.b32.xlu0 %v2245, 1
        %v2315 = vpop.permute.xlu0 %2314
        %v2316 = vsel %vm606, %v2309, %v2311
        %v2317 = vsel %vm606, %v2313, %v2315
        %v2321 = vperm.slane %v428, 0
        %v2323 = vmul.f32 %v2316, %v2321
        %v2324 = vmul.f32 %v2317, %v2321
        %2325 = vst [vmem:[#allocation5 + $0x30] sm:$0xff] %v2323
        %2326 = vst [vmem:[#allocation5 + $0x38] sm:$0xff] %v2324
        %2327 = vst [vmem:[#allocation5 + $0x40] sm:$0xff] %v2242
        %2328 = vst [vmem:[#allocation5 + $0x48] sm:$0xff] %v2245
        %2331 = vrot.lane.b32.xlu0 %v2242, 127
        %v2332 = vpop.permute.xlu0 %2331
        %2333 = vrot.lane.b32.xlu0 %v2243, 127
        %v2334 = vpop.permute.xlu0 %2333
        %2335 = vrot.lane.b32.xlu0 %v2245, 127
        %v2336 = vpop.permute.xlu0 %2335
        %2337 = vrot.lane.b32.xlu0 %v2246, 127
        %v2338 = vpop.permute.xlu0 %2337
        %v2339 = vsel %vm649, %v2332, %v2334
        %v2340 = vsel %vm649, %v2336, %v2338
        %v2344 = vperm.slane %v441, 0
        %v2346 = vmul.f32 %v2339, %v2344
        %v2347 = vmul.f32 %v2340, %v2344
        %2348 = vst [vmem:[#allocation5 + $0x50] sm:$0xff] %v2346
        %2349 = vst [vmem:[#allocation5 + $0x58] sm:$0xff] %v2347
        %2350 = vrot.lane.b32.xlu0 %v2242, 113
        %v2351 = vpop.permute.xlu0 %2350
        %2352 = vrot.lane.b32.xlu0 %v2243, 113
        %v2353 = vpop.permute.xlu0 %2352
        %2354 = vrot.lane.b32.xlu0 %v2245, 113
        %v2355 = vpop.permute.xlu0 %2354
        %2356 = vrot.lane.b32.xlu0 %v2246, 113
        %v2357 = vpop.permute.xlu0 %2356
        %v2358 = vsel %vm688, %v2351, %v2353
        %v2359 = vsel %vm688, %v2355, %v2357
        %v2363 = vperm.slane %v449, 0
        %v2365 = vmul.f32 %v2358, %v2363
        %v2366 = vmul.f32 %v2359, %v2363
        %2367 = vst [vmem:[#allocation5 + $0x60] sm:$0xff] %v2365
        %2368 = vst [vmem:[#allocation5 + $0x68] sm:$0xff] %v2366
        %2369 = vrot.lane.b32.xlu0 %v2242, 112
        %v2370 = vpop.permute.xlu0 %2369
        %2371 = vrot.lane.b32.xlu0 %v2243, 112
        %v2372 = vpop.permute.xlu0 %2371
        %2373 = vrot.lane.b32.xlu0 %v2245, 112
        %v2374 = vpop.permute.xlu0 %2373
        %2375 = vrot.lane.b32.xlu0 %v2246, 112
        %v2376 = vpop.permute.xlu0 %2375
        %v2377 = vsel %vm727, %v2370, %v2372
        %v2378 = vsel %vm727, %v2374, %v2376
        %v2382 = vperm.slane %v448, 0
        %v2384 = vmul.f32 %v2377, %v2382
        %v2385 = vmul.f32 %v2378, %v2382
        %2386 = vst [vmem:[#allocation5 + $0x70] sm:$0xff] %v2384
        %2387 = vst [vmem:[#allocation5 + $0x78] sm:$0xff] %v2385
        %2388 = vrot.lane.b32.xlu0 %v2242, 111
        %v2389 = vpop.permute.xlu0 %2388
        %2390 = vrot.lane.b32.xlu0 %v2243, 111
        %v2391 = vpop.permute.xlu0 %2390
        %2392 = vrot.lane.b32.xlu0 %v2245, 111
        %v2393 = vpop.permute.xlu0 %2392
        %2394 = vrot.lane.b32.xlu0 %v2246, 111
        %v2395 = vpop.permute.xlu0 %2394
        %v2396 = vsel %vm760, %v2389, %v2391
        %v2397 = vsel %vm760, %v2393, %v2395
        %v2401 = vperm.slane %v450, 0
        %v2403 = vmul.f32 %v2396, %v2401
        %v2404 = vmul.f32 %v2397, %v2401
        %2405 = vst [vmem:[#allocation5 + $0x80] sm:$0xff] %v2403
        %2406 = vst [vmem:[#allocation5 + $0x88] sm:$0xff] %v2404
        %v2407 = vld [vmem:[#allocation12] sm:$0xff]
        %v2408 = vld [vmem:[#allocation12 + $0x8] sm:$0xff]
        %v2409 = vld [vmem:[#allocation12 + $0x10] sm:$0xff]
        %v2410 = vld [vmem:[#allocation12 + $0x18] sm:$0xff]
        %v2411 = vld [vmem:[#allocation12 + $0x20] sm:$0xff]
        %v2412 = vld [vmem:[#allocation12 + $0x28] sm:$0xff]
        %v2413 = vld [vmem:[#allocation12 + $0x30] sm:$0xff]
        %v2414 = vld [vmem:[#allocation12 + $0x38] sm:$0xff]
        %v2415 = vld [vmem:[#allocation12 + $0x40] sm:$0xff]
        %v2416 = vld [vmem:[#allocation12 + $0x48] sm:$0xff]
        %v2417 = vld [vmem:[#allocation12 + $0x50] sm:$0xff]
        %v2418 = vld [vmem:[#allocation12 + $0x58] sm:$0xff]
        %v2419 = vld [vmem:[#allocation5] sm:$0xff]
        %v2420 = vld [vmem:[#allocation5 + $0x8] sm:$0xff]
        %v2421 = vld [vmem:[#allocation5 + $0x10] sm:$0xff]
        %v2422 = vld [vmem:[#allocation5 + $0x18] sm:$0xff]
        %v2423 = vld [vmem:[#allocation5 + $0x20] sm:$0xff]
        %v2424 = vld [vmem:[#allocation5 + $0x28] sm:$0xff]
        %v2425 = vld [vmem:[#allocation5 + $0x30] sm:$0xff]
        %v2426 = vld [vmem:[#allocation5 + $0x38] sm:$0xff]
        %v2427 = vld [vmem:[#allocation5 + $0x40] sm:$0xff]
        %v2428 = vld [vmem:[#allocation5 + $0x48] sm:$0xff]
        %v2429 = vld [vmem:[#allocation5 + $0x50] sm:$0xff]
        %v2430 = vld [vmem:[#allocation5 + $0x58] sm:$0xff]
        %v2431 = vld [vmem:[#allocation5 + $0x60] sm:$0xff]
        %v2432 = vld [vmem:[#allocation5 + $0x68] sm:$0xff]
        %v2433 = vld [vmem:[#allocation5 + $0x70] sm:$0xff]
        %v2434 = vld [vmem:[#allocation5 + $0x78] sm:$0xff]
        %v2435 = vld [vmem:[#allocation5 + $0x80] sm:$0xff]
        %v2436 = vld [vmem:[#allocation5 + $0x88] sm:$0xff]
        %v2438 = vsel %vm527, %v2408, 0
        %v2441 = vsel %vm527, %v2410, 0
        %v2444 = vsel %vm527, %v2412, 0
        %v2447 = vsel %vm527, %v2414, 0
        %v2450 = vsel %vm527, %v2416, 0
        %v2453 = vsel %vm527, %v2418, 0
        %2455 = vmatpush.msra.mxu0 %v2434
        %2456 = vmatpush.msra.mxu0 %v2433
        %2457 = vmatpush.msra.mxu0 %v2432
        %2458 = vmatpush.msra.mxu0 %v2431
        %2459 = vmatpush.msra.mxu0 %v2430
        %2460 = vmatpush.msra.mxu0 %v2429
        %2461 = vmatpush.msra.mxu0 %v2428
        %2462 = vmatpush.msra.mxu0 %v2427
        %2463 = vmatpush.msra.mxu0 %v2426
        %2464 = vmatpush.msra.mxu0 %v2425
        %2465 = vmatpush.msra.mxu0 %v2424
        %2466 = vmatpush.msra.mxu0 %v2423
        %2467 = vmatpush.msra.mxu0 %v2422
        %2468 = vmatpush.msra.mxu0 %v2421
        %2469 = vmatpush.msra.mxu0 %v2420
        %2470 = vmatpush.msra.mxu0 %v2419
        %2471 = vmatmul.f32.gmra.mxu0 %v2407
        %v2472 = vpop.f32.mrf.mxu0
        %v2473 = vadd.f32 0.0, %v2472
        %2474 = vmatmul.f32.gmra.mxu0 %v2409
        %v2475 = vpop.f32.mrf.mxu0
        %v2476 = vadd.f32 0.0, %v2475
        %2477 = vmatmul.f32.gmra.mxu0 %v2411
        %v2478 = vpop.f32.mrf.mxu0
        %v2479 = vadd.f32 0.0, %v2478
        %2480 = vmatmul.f32.gmra.mxu0 %v2413
        %v2481 = vpop.f32.mrf.mxu0
        %v2482 = vadd.f32 0.0, %v2481
        %2483 = vmatmul.f32.gmra.mxu0 %v2415
        %v2484 = vpop.f32.mrf.mxu0
        %v2485 = vadd.f32 0.0, %v2484
        %2486 = vmatmul.f32.gmra.mxu0 %v2417
        %v2487 = vpop.f32.mrf.mxu0
        %v2488 = vadd.f32 0.0, %v2487
        %2489 = vdwg.mxu0
        %2490 = vmatpush.msra.mxu0 0.0
        %2491 = vmatpush.msra.mxu0 0.0
        %2492 = vmatpush.msra.mxu0 0.0
        %2493 = vmatpush.msra.mxu0 0.0
        %2494 = vmatpush.msra.mxu0 0.0
        %2495 = vmatpush.msra.mxu0 0.0
        %2496 = vmatpush.msra.mxu0 0.0
        %2497 = vmatpush.msra.mxu0 0.0
        %2498 = vmatpush.msra.mxu0 0.0
        %2499 = vmatpush.msra.mxu0 0.0
        %2500 = vmatpush.msra.mxu0 0.0
        %2501 = vmatpush.msra.mxu0 0.0
        %2502 = vmatpush.msra.mxu0 0.0
        %2503 = vmatpush.msra.mxu0 0.0
        %2504 = vmatpush.msra.mxu0 %v2436
        %2505 = vmatpush.msra.mxu0 %v2435
        %2506 = vmatmul.f32.gmra.mxu0 %v2438
        %v2507 = vpop.f32.mrf.mxu0
        %v2508 = vadd.f32 %v2473, %v2507
        %2509 = vmatmul.f32.gmra.mxu0 %v2441
        %v2510 = vpop.f32.mrf.mxu0
        %v2511 = vadd.f32 %v2476, %v2510
        %2512 = vmatmul.f32.gmra.mxu0 %v2444
        %v2513 = vpop.f32.mrf.mxu0
        %v2514 = vadd.f32 %v2479, %v2513
        %2515 = vmatmul.f32.gmra.mxu0 %v2447
        %v2516 = vpop.f32.mrf.mxu0
        %v2517 = vadd.f32 %v2482, %v2516
        %2518 = vmatmul.f32.gmra.mxu0 %v2450
        %v2519 = vpop.f32.mrf.mxu0
        %v2520 = vadd.f32 %v2485, %v2519
        %2521 = vmatmul.f32.gmra.mxu0 %v2453
        %v2522 = vpop.f32.mrf.mxu0
        %v2523 = vadd.f32 %v2488, %v2522
        %2524 = vdwg.mxu0
        %v2525 = vld [vmem:[#allocation3] sm:$0xff]
        %v2526 = vld [vmem:[#allocation3 + $0x8] sm:$0xff]
        %v2527 = vld [vmem:[#allocation3 + $0x10] sm:$0xff]
        %v2528 = vld [vmem:[#allocation3 + $0x18] sm:$0xff]
        %v2529 = vld [vmem:[#allocation3 + $0x20] sm:$0xff]
        %v2530 = vld [vmem:[#allocation3 + $0x28] sm:$0xff]
        %2535 = vrot.lane.b32.xlu0 %v2525, 17
        %v2536 = vpop.permute.xlu0 %2535
        %2537 = vrot.lane.b32.xlu0 %v2526, 17
        %v2538 = vpop.permute.xlu0 %2537
        %2539 = vrot.lane.b32.xlu0 %v2528, 17
        %v2540 = vpop.permute.xlu0 %2539
        %2541 = vrot.lane.b32.xlu0 %v2529, 17
        %v2542 = vpop.permute.xlu0 %2541
        %v2543 = vsel %vm481, %v2536, %v2538
        %v2544 = vsel %vm481, %v2540, %v2542
        %v2547 = vmul.f32 %v2543, %v2264
        %v2548 = vmul.f32 %v2544, %v2264
        %2549 = vst [vmem:[#allocation5] sm:$0xff] %v2547
        %2550 = vst [vmem:[#allocation5 + $0x8] sm:$0xff] %v2548
        %2551 = vrot.lane.b32.xlu0 %v2525, 16
        %v2552 = vpop.permute.xlu0 %2551
        %2553 = vrot.lane.b32.xlu0 %v2526, 16
        %v2554 = vpop.permute.xlu0 %2553
        %2555 = vrot.lane.b32.xlu0 %v2528, 16
        %v2556 = vpop.permute.xlu0 %2555
        %2557 = vrot.lane.b32.xlu0 %v2529, 16
        %v2558 = vpop.permute.xlu0 %2557
        %v2559 = vsel %vm527, %v2552, %v2554
        %v2560 = vsel %vm527, %v2556, %v2558
        %v2563 = vmul.f32 %v2559, %v2283
        %v2564 = vmul.f32 %v2560, %v2283
        %2565 = vst [vmem:[#allocation5 + $0x10] sm:$0xff] %v2563
        %2566 = vst [vmem:[#allocation5 + $0x18] sm:$0xff] %v2564
        %2567 = vrot.lane.b32.xlu0 %v2525, 15
        %v2568 = vpop.permute.xlu0 %2567
        %2569 = vrot.lane.b32.xlu0 %v2526, 15
        %v2570 = vpop.permute.xlu0 %2569
        %2571 = vrot.lane.b32.xlu0 %v2528, 15
        %v2572 = vpop.permute.xlu0 %2571
        %2573 = vrot.lane.b32.xlu0 %v2529, 15
        %v2574 = vpop.permute.xlu0 %2573
        %v2575 = vsel %vm560, %v2568, %v2570
        %v2576 = vsel %vm560, %v2572, %v2574
        %v2579 = vmul.f32 %v2575, %v2302
        %v2580 = vmul.f32 %v2576, %v2302
        %2581 = vst [vmem:[#allocation5 + $0x20] sm:$0xff] %v2579
        %2582 = vst [vmem:[#allocation5 + $0x28] sm:$0xff] %v2580
        %2583 = vrot.lane.b32.xlu0 %v2525, 1
        %v2584 = vpop.permute.xlu0 %2583
        %2585 = vrot.lane.b32.xlu0 %v2526, 1
        %v2586 = vpop.permute.xlu0 %2585
        %2587 = vrot.lane.b32.xlu0 %v2528, 1
        %v2588 = vpop.permute.xlu0 %2587
        %2589 = vrot.lane.b32.xlu0 %v2529, 1
        %v2590 = vpop.permute.xlu0 %2589
        %v2591 = vsel %vm606, %v2584, %v2586
        %v2592 = vsel %vm606, %v2588, %v2590
        %v2595 = vmul.f32 %v2591, %v2321
        %v2596 = vmul.f32 %v2592, %v2321
        %2597 = vst [vmem:[#allocation5 + $0x30] sm:$0xff] %v2595
        %2598 = vst [vmem:[#allocation5 + $0x38] sm:$0xff] %v2596
        %2599 = vst [vmem:[#allocation5 + $0x40] sm:$0xff] %v2526
        %2600 = vst [vmem:[#allocation5 + $0x48] sm:$0xff] %v2529
        %2603 = vrot.lane.b32.xlu0 %v2526, 127
        %v2604 = vpop.permute.xlu0 %2603
        %2605 = vrot.lane.b32.xlu0 %v2527, 127
        %v2606 = vpop.permute.xlu0 %2605
        %2607 = vrot.lane.b32.xlu0 %v2529, 127
        %v2608 = vpop.permute.xlu0 %2607
        %2609 = vrot.lane.b32.xlu0 %v2530, 127
        %v2610 = vpop.permute.xlu0 %2609
        %v2611 = vsel %vm649, %v2604, %v2606
        %v2612 = vsel %vm649, %v2608, %v2610
        %v2615 = vmul.f32 %v2611, %v2344
        %v2616 = vmul.f32 %v2612, %v2344
        %2617 = vst [vmem:[#allocation5 + $0x50] sm:$0xff] %v2615
        %2618 = vst [vmem:[#allocation5 + $0x58] sm:$0xff] %v2616
        %2619 = vrot.lane.b32.xlu0 %v2526, 113
        %v2620 = vpop.permute.xlu0 %2619
        %2621 = vrot.lane.b32.xlu0 %v2527, 113
        %v2622 = vpop.permute.xlu0 %2621
        %2623 = vrot.lane.b32.xlu0 %v2529, 113
        %v2624 = vpop.permute.xlu0 %2623
        %2625 = vrot.lane.b32.xlu0 %v2530, 113
        %v2626 = vpop.permute.xlu0 %2625
        %v2627 = vsel %vm688, %v2620, %v2622
        %v2628 = vsel %vm688, %v2624, %v2626
        %v2631 = vmul.f32 %v2627, %v2363
        %v2632 = vmul.f32 %v2628, %v2363
        %2633 = vst [vmem:[#allocation5 + $0x60] sm:$0xff] %v2631
        %2634 = vst [vmem:[#allocation5 + $0x68] sm:$0xff] %v2632
        %2635 = vrot.lane.b32.xlu0 %v2526, 112
        %v2636 = vpop.permute.xlu0 %2635
        %2637 = vrot.lane.b32.xlu0 %v2527, 112
        %v2638 = vpop.permute.xlu0 %2637
        %2639 = vrot.lane.b32.xlu0 %v2529, 112
        %v2640 = vpop.permute.xlu0 %2639
        %2641 = vrot.lane.b32.xlu0 %v2530, 112
        %v2642 = vpop.permute.xlu0 %2641
        %v2643 = vsel %vm727, %v2636, %v2638
        %v2644 = vsel %vm727, %v2640, %v2642
        %v2647 = vmul.f32 %v2643, %v2382
        %v2648 = vmul.f32 %v2644, %v2382
        %2649 = vst [vmem:[#allocation5 + $0x70] sm:$0xff] %v2647
        %2650 = vst [vmem:[#allocation5 + $0x78] sm:$0xff] %v2648
        %2651 = vrot.lane.b32.xlu0 %v2526, 111
        %v2652 = vpop.permute.xlu0 %2651
        %2653 = vrot.lane.b32.xlu0 %v2527, 111
        %v2654 = vpop.permute.xlu0 %2653
        %2655 = vrot.lane.b32.xlu0 %v2529, 111
        %v2656 = vpop.permute.xlu0 %2655
        %2657 = vrot.lane.b32.xlu0 %v2530, 111
        %v2658 = vpop.permute.xlu0 %2657
        %v2659 = vsel %vm760, %v2652, %v2654
        %v2660 = vsel %vm760, %v2656, %v2658
        %v2663 = vmul.f32 %v2659, %v2401
        %v2664 = vmul.f32 %v2660, %v2401
        %2665 = vst [vmem:[#allocation5 + $0x80] sm:$0xff] %v2663
        %2666 = vst [vmem:[#allocation5 + $0x88] sm:$0xff] %v2664
        %v2667 = vld [vmem:[#allocation13] sm:$0xff]
        %v2668 = vld [vmem:[#allocation13 + $0x8] sm:$0xff]
        %v2669 = vld [vmem:[#allocation13 + $0x10] sm:$0xff]
        %v2670 = vld [vmem:[#allocation13 + $0x18] sm:$0xff]
        %v2671 = vld [vmem:[#allocation5] sm:$0xff]
        %v2672 = vld [vmem:[#allocation5 + $0x8] sm:$0xff]
        %v2673 = vld [vmem:[#allocation5 + $0x10] sm:$0xff]
        %v2674 = vld [vmem:[#allocation5 + $0x18] sm:$0xff]
        %v2675 = vld [vmem:[#allocation5 + $0x20] sm:$0xff]
        %v2676 = vld [vmem:[#allocation5 + $0x28] sm:$0xff]
        %v2677 = vld [vmem:[#allocation5 + $0x30] sm:$0xff]
        %v2678 = vld [vmem:[#allocation5 + $0x38] sm:$0xff]
        %v2679 = vld [vmem:[#allocation5 + $0x40] sm:$0xff]
        %v2680 = vld [vmem:[#allocation5 + $0x48] sm:$0xff]
        %v2681 = vld [vmem:[#allocation5 + $0x50] sm:$0xff]
        %v2682 = vld [vmem:[#allocation5 + $0x58] sm:$0xff]
        %v2683 = vld [vmem:[#allocation5 + $0x60] sm:$0xff]
        %v2684 = vld [vmem:[#allocation5 + $0x68] sm:$0xff]
        %v2685 = vld [vmem:[#allocation5 + $0x70] sm:$0xff]
        %v2686 = vld [vmem:[#allocation5 + $0x78] sm:$0xff]
        %v2687 = vld [vmem:[#allocation5 + $0x80] sm:$0xff]
        %v2688 = vld [vmem:[#allocation5 + $0x88] sm:$0xff]
        %v2690 = vsel %vm527, %v2668, 0
        %v2693 = vsel %vm527, %v2670, 0
        %2695 = vmatpush.msra.mxu0 %v2686
        %2696 = vmatpush.msra.mxu0 %v2685
        %2697 = vmatpush.msra.mxu0 %v2684
        %2698 = vmatpush.msra.mxu0 %v2683
        %2699 = vmatpush.msra.mxu0 %v2682
        %2700 = vmatpush.msra.mxu0 %v2681
        %2701 = vmatpush.msra.mxu0 %v2680
        %2702 = vmatpush.msra.mxu0 %v2679
        %2703 = vmatpush.msra.mxu0 %v2678
        %2704 = vmatpush.msra.mxu0 %v2677
        %2705 = vmatpush.msra.mxu0 %v2676
        %2706 = vmatpush.msra.mxu0 %v2675
        %2707 = vmatpush.msra.mxu0 %v2674
        %2708 = vmatpush.msra.mxu0 %v2673
        %2709 = vmatpush.msra.mxu0 %v2672
        %2710 = vmatpush.msra.mxu0 %v2671
        %2711 = vmatmul.f32.gmra.mxu0 %v2667
        %v2712 = vpop.f32.mrf.mxu0
        %v2713 = vadd.f32 0.0, %v2712
        %2714 = vmatmul.f32.gmra.mxu0 %v2669
        %v2715 = vpop.f32.mrf.mxu0
        %v2716 = vadd.f32 0.0, %v2715
        %2717 = vdwg.mxu0
        %2718 = vmatpush.msra.mxu0 0.0
        %2719 = vmatpush.msra.mxu0 0.0
        %2720 = vmatpush.msra.mxu0 0.0
        %2721 = vmatpush.msra.mxu0 0.0
        %2722 = vmatpush.msra.mxu0 0.0
        %2723 = vmatpush.msra.mxu0 0.0
        %2724 = vmatpush.msra.mxu0 0.0
        %2725 = vmatpush.msra.mxu0 0.0
        %2726 = vmatpush.msra.mxu0 0.0
        %2727 = vmatpush.msra.mxu0 0.0
        %2728 = vmatpush.msra.mxu0 0.0
        %2729 = vmatpush.msra.mxu0 0.0
        %2730 = vmatpush.msra.mxu0 0.0
        %2731 = vmatpush.msra.mxu0 0.0
        %2732 = vmatpush.msra.mxu0 %v2688
        %2733 = vmatpush.msra.mxu0 %v2687
        %2734 = vmatmul.f32.gmra.mxu0 %v2690
        %v2735 = vpop.f32.mrf.mxu0
        %v2736 = vadd.f32 %v2713, %v2735
        %2737 = vmatmul.f32.gmra.mxu0 %v2693
        %v2738 = vpop.f32.mrf.mxu0
        %v2739 = vadd.f32 %v2716, %v2738
        %2740 = vdwg.mxu0
        %v2741 = vadd.f32 %v2508, %v2736
        %v2742 = vadd.f32 %v2511, %v2739
        %v2743 = vld [vmem:[%s9] sm:$0xff]
        %v2744 = vld [vmem:[%s9 + $0x8] sm:$0xff]
        %2746 = vset.pattern.permute.xlu0 0
        %2747 = vperm.xlu0 %2746, %v2743
        %v2748 = vpop.permute.xlu0 %2747
        %2751 = vset.pattern.permute.xlu0 0
        %2752 = vperm.xlu0 %2751, %v2744
        %v2753 = vpop.permute.xlu0 %2752
        %v2755 = vadd.f32 %v2741, %v2748
        %v2756 = vadd.f32 %v2742, %v2753
        %vm2757 = vcmp.ge.f32.partialorder %v2755, 0.0
        %vm2758 = vcmp.ge.f32.partialorder %v2756, 0.0
        %v2759 = vmul.f32 %v2755, 0.2
        %v2760 = vmul.f32 %v2756, 0.2
        %v2761 = vsel %vm2757, %v2755, %v2759
        %v2762 = vsel %vm2758, %v2756, %v2760
        %v2763 = vld [vmem:[#allocation2 + $0x8] sm:$0xff]
        %v2764 = vld [vmem:[#allocation2 + $0x20] sm:$0xff]
        %v2765 = vadd.f32 %v2763, %v2761
        %v2766 = vadd.f32 %v2764, %v2762
        %2767 = vst [vmem:[%s388] sm:$0xff] %v2765
        %2768 = vst [vmem:[%s388 + $0x8] sm:$0xff] %v2766
        %v2769 = vld [vmem:[#allocation3 + $0x30] sm:$0xff]
        %v2770 = vld [vmem:[#allocation3 + $0x38] sm:$0xff]
        %v2771 = vld [vmem:[#allocation3 + $0x40] sm:$0xff]
        %v2772 = vld [vmem:[#allocation3 + $0x48] sm:$0xff]
        %v2773 = vld [vmem:[#allocation3 + $0x50] sm:$0xff]
        %v2774 = vld [vmem:[#allocation3 + $0x58] sm:$0xff]
        %2779 = vrot.lane.b32.xlu0 %v2769, 17
        %v2780 = vpop.permute.xlu0 %2779
        %2781 = vrot.lane.b32.xlu0 %v2770, 17
        %v2782 = vpop.permute.xlu0 %2781
        %2783 = vrot.lane.b32.xlu0 %v2772, 17
        %v2784 = vpop.permute.xlu0 %2783
        %2785 = vrot.lane.b32.xlu0 %v2773, 17
        %v2786 = vpop.permute.xlu0 %2785
        %v2787 = vsel %vm481, %v2780, %v2782
        %v2788 = vsel %vm481, %v2784, %v2786
        %v2791 = vmul.f32 %v2787, %v2264
        %v2792 = vmul.f32 %v2788, %v2264
        %2793 = vst [vmem:[#allocation5] sm:$0xff] %v2791
        %2794 = vst [vmem:[#allocation5 + $0x8] sm:$0xff] %v2792
        %2795 = vrot.lane.b32.xlu0 %v2769, 16
        %v2796 = vpop.permute.xlu0 %2795
        %2797 = vrot.lane.b32.xlu0 %v2770, 16
        %v2798 = vpop.permute.xlu0 %2797
        %2799 = vrot.lane.b32.xlu0 %v2772, 16
        %v2800 = vpop.permute.xlu0 %2799
        %2801 = vrot.lane.b32.xlu0 %v2773, 16
        %v2802 = vpop.permute.xlu0 %2801
        %v2803 = vsel %vm527, %v2796, %v2798
        %v2804 = vsel %vm527, %v2800, %v2802
        %v2807 = vmul.f32 %v2803, %v2283
        %v2808 = vmul.f32 %v2804, %v2283
        %2809 = vst [vmem:[#allocation5 + $0x10] sm:$0xff] %v2807
        %2810 = vst [vmem:[#allocation5 + $0x18] sm:$0xff] %v2808
        %2811 = vrot.lane.b32.xlu0 %v2769, 15
        %v2812 = vpop.permute.xlu0 %2811
        %2813 = vrot.lane.b32.xlu0 %v2770, 15
        %v2814 = vpop.permute.xlu0 %2813
        %2815 = vrot.lane.b32.xlu0 %v2772, 15
        %v2816 = vpop.permute.xlu0 %2815
        %2817 = vrot.lane.b32.xlu0 %v2773, 15
        %v2818 = vpop.permute.xlu0 %2817
        %v2819 = vsel %vm560, %v2812, %v2814
        %v2820 = vsel %vm560, %v2816, %v2818
        %v2823 = vmul.f32 %v2819, %v2302
        %v2824 = vmul.f32 %v2820, %v2302
        %2825 = vst [vmem:[#allocation5 + $0x20] sm:$0xff] %v2823
        %2826 = vst [vmem:[#allocation5 + $0x28] sm:$0xff] %v2824
        %2827 = vrot.lane.b32.xlu0 %v2769, 1
        %v2828 = vpop.permute.xlu0 %2827
        %2829 = vrot.lane.b32.xlu0 %v2770, 1
        %v2830 = vpop.permute.xlu0 %2829
        %2831 = vrot.lane.b32.xlu0 %v2772, 1
        %v2832 = vpop.permute.xlu0 %2831
        %2833 = vrot.lane.b32.xlu0 %v2773, 1
        %v2834 = vpop.permute.xlu0 %2833
        %v2835 = vsel %vm606, %v2828, %v2830
        %v2836 = vsel %vm606, %v2832, %v2834
        %v2839 = vmul.f32 %v2835, %v2321
        %v2840 = vmul.f32 %v2836, %v2321
        %2841 = vst [vmem:[#allocation5 + $0x30] sm:$0xff] %v2839
        %2842 = vst [vmem:[#allocation5 + $0x38] sm:$0xff] %v2840
        %2843 = vst [vmem:[#allocation5 + $0x40] sm:$0xff] %v2770
        %2844 = vst [vmem:[#allocation5 + $0x48] sm:$0xff] %v2773
        %2847 = vrot.lane.b32.xlu0 %v2770, 127
        %v2848 = vpop.permute.xlu0 %2847
        %2849 = vrot.lane.b32.xlu0 %v2771, 127
        %v2850 = vpop.permute.xlu0 %2849
        %2851 = vrot.lane.b32.xlu0 %v2773, 127
        %v2852 = vpop.permute.xlu0 %2851
        %2853 = vrot.lane.b32.xlu0 %v2774, 127
        %v2854 = vpop.permute.xlu0 %2853
        %v2855 = vsel %vm649, %v2848, %v2850
        %v2856 = vsel %vm649, %v2852, %v2854
        %v2859 = vmul.f32 %v2855, %v2344
        %v2860 = vmul.f32 %v2856, %v2344
        %2861 = vst [vmem:[#allocation5 + $0x50] sm:$0xff] %v2859
        %2862 = vst [vmem:[#allocation5 + $0x58] sm:$0xff] %v2860
        %2863 = vrot.lane.b32.xlu0 %v2770, 113
        %v2864 = vpop.permute.xlu0 %2863
        %2865 = vrot.lane.b32.xlu0 %v2771, 113
        %v2866 = vpop.permute.xlu0 %2865
        %2867 = vrot.lane.b32.xlu0 %v2773, 113
        %v2868 = vpop.permute.xlu0 %2867
        %2869 = vrot.lane.b32.xlu0 %v2774, 113
        %v2870 = vpop.permute.xlu0 %2869
        %v2871 = vsel %vm688, %v2864, %v2866
        %v2872 = vsel %vm688, %v2868, %v2870
        %v2875 = vmul.f32 %v2871, %v2363
        %v2876 = vmul.f32 %v2872, %v2363
        %2877 = vst [vmem:[#allocation5 + $0x60] sm:$0xff] %v2875
        %2878 = vst [vmem:[#allocation5 + $0x68] sm:$0xff] %v2876
        %2879 = vrot.lane.b32.xlu0 %v2770, 112
        %v2880 = vpop.permute.xlu0 %2879
        %2881 = vrot.lane.b32.xlu0 %v2771, 112
        %v2882 = vpop.permute.xlu0 %2881
        %2883 = vrot.lane.b32.xlu0 %v2773, 112
        %v2884 = vpop.permute.xlu0 %2883
        %2885 = vrot.lane.b32.xlu0 %v2774, 112
        %v2886 = vpop.permute.xlu0 %2885
        %v2887 = vsel %vm727, %v2880, %v2882
        %v2888 = vsel %vm727, %v2884, %v2886
        %v2891 = vmul.f32 %v2887, %v2382
        %v2892 = vmul.f32 %v2888, %v2382
        %2893 = vst [vmem:[#allocation5 + $0x70] sm:$0xff] %v2891
        %2894 = vst [vmem:[#allocation5 + $0x78] sm:$0xff] %v2892
        %2895 = vrot.lane.b32.xlu0 %v2770, 111
        %v2896 = vpop.permute.xlu0 %2895
        %2897 = vrot.lane.b32.xlu0 %v2771, 111
        %v2898 = vpop.permute.xlu0 %2897
        %2899 = vrot.lane.b32.xlu0 %v2773, 111
        %v2900 = vpop.permute.xlu0 %2899
        %2901 = vrot.lane.b32.xlu0 %v2774, 111
        %v2902 = vpop.permute.xlu0 %2901
        %v2903 = vsel %vm760, %v2896, %v2898
        %v2904 = vsel %vm760, %v2900, %v2902
        %v2907 = vmul.f32 %v2903, %v2401
        %v2908 = vmul.f32 %v2904, %v2401
        %2909 = vst [vmem:[#allocation5 + $0x80] sm:$0xff] %v2907
        %2910 = vst [vmem:[#allocation5 + $0x88] sm:$0xff] %v2908
        %v2911 = vld [vmem:[#allocation13 + $0x20] sm:$0xff]
        %v2912 = vld [vmem:[#allocation13 + $0x28] sm:$0xff]
        %v2913 = vld [vmem:[#allocation13 + $0x30] sm:$0xff]
        %v2914 = vld [vmem:[#allocation13 + $0x38] sm:$0xff]
        %v2915 = vld [vmem:[#allocation5] sm:$0xff]
        %v2916 = vld [vmem:[#allocation5 + $0x8] sm:$0xff]
        %v2917 = vld [vmem:[#allocation5 + $0x10] sm:$0xff]
        %v2918 = vld [vmem:[#allocation5 + $0x18] sm:$0xff]
        %v2919 = vld [vmem:[#allocation5 + $0x20] sm:$0xff]
        %v2920 = vld [vmem:[#allocation5 + $0x28] sm:$0xff]
        %v2921 = vld [vmem:[#allocation5 + $0x30] sm:$0xff]
        %v2922 = vld [vmem:[#allocation5 + $0x38] sm:$0xff]
        %v2923 = vld [vmem:[#allocation5 + $0x40] sm:$0xff]
        %v2924 = vld [vmem:[#allocation5 + $0x48] sm:$0xff]
        %v2925 = vld [vmem:[#allocation5 + $0x50] sm:$0xff]
        %v2926 = vld [vmem:[#allocation5 + $0x58] sm:$0xff]
        %v2927 = vld [vmem:[#allocation5 + $0x60] sm:$0xff]
        %v2928 = vld [vmem:[#allocation5 + $0x68] sm:$0xff]
        %v2929 = vld [vmem:[#allocation5 + $0x70] sm:$0xff]
        %v2930 = vld [vmem:[#allocation5 + $0x78] sm:$0xff]
        %v2931 = vld [vmem:[#allocation5 + $0x80] sm:$0xff]
        %v2932 = vld [vmem:[#allocation5 + $0x88] sm:$0xff]
        %v2934 = vsel %vm527, %v2912, 0
        %v2937 = vsel %vm527, %v2914, 0
        %2939 = vmatpush.msra.mxu0 %v2930
        %2940 = vmatpush.msra.mxu0 %v2929
        %2941 = vmatpush.msra.mxu0 %v2928
        %2942 = vmatpush.msra.mxu0 %v2927
        %2943 = vmatpush.msra.mxu0 %v2926
        %2944 = vmatpush.msra.mxu0 %v2925
        %2945 = vmatpush.msra.mxu0 %v2924
        %2946 = vmatpush.msra.mxu0 %v2923
        %2947 = vmatpush.msra.mxu0 %v2922
        %2948 = vmatpush.msra.mxu0 %v2921
        %2949 = vmatpush.msra.mxu0 %v2920
        %2950 = vmatpush.msra.mxu0 %v2919
        %2951 = vmatpush.msra.mxu0 %v2918
        %2952 = vmatpush.msra.mxu0 %v2917
        %2953 = vmatpush.msra.mxu0 %v2916
        %2954 = vmatpush.msra.mxu0 %v2915
        %2955 = vmatmul.f32.gmra.mxu0 %v2911
        %v2956 = vpop.f32.mrf.mxu0
        %v2957 = vadd.f32 0.0, %v2956
        %2958 = vmatmul.f32.gmra.mxu0 %v2913
        %v2959 = vpop.f32.mrf.mxu0
        %v2960 = vadd.f32 0.0, %v2959
        %2961 = vdwg.mxu0
        %2962 = vmatpush.msra.mxu0 0.0
        %2963 = vmatpush.msra.mxu0 0.0
        %2964 = vmatpush.msra.mxu0 0.0
        %2965 = vmatpush.msra.mxu0 0.0
        %2966 = vmatpush.msra.mxu0 0.0
        %2967 = vmatpush.msra.mxu0 0.0
        %2968 = vmatpush.msra.mxu0 0.0
        %2969 = vmatpush.msra.mxu0 0.0
        %2970 = vmatpush.msra.mxu0 0.0
        %2971 = vmatpush.msra.mxu0 0.0
        %2972 = vmatpush.msra.mxu0 0.0
        %2973 = vmatpush.msra.mxu0 0.0
        %2974 = vmatpush.msra.mxu0 0.0
        %2975 = vmatpush.msra.mxu0 0.0
        %2976 = vmatpush.msra.mxu0 %v2932
        %2977 = vmatpush.msra.mxu0 %v2931
        %2978 = vmatmul.f32.gmra.mxu0 %v2934
        %v2979 = vpop.f32.mrf.mxu0
        %v2980 = vadd.f32 %v2957, %v2979
        %2981 = vmatmul.f32.gmra.mxu0 %v2937
        %v2982 = vpop.f32.mrf.mxu0
        %v2983 = vadd.f32 %v2960, %v2982
        %2984 = vdwg.mxu0
        %v2985 = vadd.f32 %v2514, %v2980
        %v2986 = vadd.f32 %v2517, %v2983
        %v2987 = vld [vmem:[%s9 + $0x10] sm:$0xff]
        %v2988 = vld [vmem:[%s9 + $0x18] sm:$0xff]
        %2990 = vset.pattern.permute.xlu0 0
        %2991 = vperm.xlu0 %2990, %v2987
        %v2992 = vpop.permute.xlu0 %2991
        %2995 = vset.pattern.permute.xlu0 0
        %2996 = vperm.xlu0 %2995, %v2988
        %v2997 = vpop.permute.xlu0 %2996
        %v2999 = vadd.f32 %v2985, %v2992
        %v3000 = vadd.f32 %v2986, %v2997
        %vm3001 = vcmp.ge.f32.partialorder %v2999, 0.0
        %vm3002 = vcmp.ge.f32.partialorder %v3000, 0.0
        %v3003 = vmul.f32 %v2999, 0.2
        %v3004 = vmul.f32 %v3000, 0.2
        %v3005 = vsel %vm3001, %v2999, %v3003
        %v3006 = vsel %vm3002, %v3000, %v3004
        %v3007 = vld [vmem:[#allocation2 + $0x38] sm:$0xff]
        %v3008 = vld [vmem:[#allocation2 + $0x50] sm:$0xff]
        %v3009 = vadd.f32 %v3007, %v3005
        %v3010 = vadd.f32 %v3008, %v3006
        %3011 = vst [vmem:[%s388 + $0x10] sm:$0xff] %v3009
        %3012 = vst [vmem:[%s388 + $0x18] sm:$0xff] %v3010
        %v3013 = vld [vmem:[#allocation3 + $0x60] sm:$0xff]
        %v3014 = vld [vmem:[#allocation3 + $0x68] sm:$0xff]
        %v3015 = vld [vmem:[#allocation3 + $0x70] sm:$0xff]
        %v3016 = vld [vmem:[#allocation3 + $0x78] sm:$0xff]
        %v3017 = vld [vmem:[#allocation3 + $0x80] sm:$0xff]
        %v3018 = vld [vmem:[#allocation3 + $0x88] sm:$0xff]
        %3023 = vrot.lane.b32.xlu0 %v3013, 17
        %v3024 = vpop.permute.xlu0 %3023
        %3025 = vrot.lane.b32.xlu0 %v3014, 17
        %v3026 = vpop.permute.xlu0 %3025
        %3027 = vrot.lane.b32.xlu0 %v3016, 17
        %v3028 = vpop.permute.xlu0 %3027
        %3029 = vrot.lane.b32.xlu0 %v3017, 17
        %v3030 = vpop.permute.xlu0 %3029
        %v3031 = vsel %vm481, %v3024, %v3026
        %v3032 = vsel %vm481, %v3028, %v3030
        %v3035 = vmul.f32 %v3031, %v2264
        %v3036 = vmul.f32 %v3032, %v2264
        %3037 = vst [vmem:[#allocation5] sm:$0xff] %v3035
        %3038 = vst [vmem:[#allocation5 + $0x8] sm:$0xff] %v3036
        %3039 = vrot.lane.b32.xlu0 %v3013, 16
        %v3040 = vpop.permute.xlu0 %3039
        %3041 = vrot.lane.b32.xlu0 %v3014, 16
        %v3042 = vpop.permute.xlu0 %3041
        %3043 = vrot.lane.b32.xlu0 %v3016, 16
        %v3044 = vpop.permute.xlu0 %3043
        %3045 = vrot.lane.b32.xlu0 %v3017, 16
        %v3046 = vpop.permute.xlu0 %3045
        %v3047 = vsel %vm527, %v3040, %v3042
        %v3048 = vsel %vm527, %v3044, %v3046
        %v3051 = vmul.f32 %v3047, %v2283
        %v3052 = vmul.f32 %v3048, %v2283
        %3053 = vst [vmem:[#allocation5 + $0x10] sm:$0xff] %v3051
        %3054 = vst [vmem:[#allocation5 + $0x18] sm:$0xff] %v3052
        %3055 = vrot.lane.b32.xlu0 %v3013, 15
        %v3056 = vpop.permute.xlu0 %3055
        %3057 = vrot.lane.b32.xlu0 %v3014, 15
        %v3058 = vpop.permute.xlu0 %3057
        %3059 = vrot.lane.b32.xlu0 %v3016, 15
        %v3060 = vpop.permute.xlu0 %3059
        %3061 = vrot.lane.b32.xlu0 %v3017, 15
        %v3062 = vpop.permute.xlu0 %3061
        %v3063 = vsel %vm560, %v3056, %v3058
        %v3064 = vsel %vm560, %v3060, %v3062
        %v3067 = vmul.f32 %v3063, %v2302
        %v3068 = vmul.f32 %v3064, %v2302
        %3069 = vst [vmem:[#allocation5 + $0x20] sm:$0xff] %v3067
        %3070 = vst [vmem:[#allocation5 + $0x28] sm:$0xff] %v3068
        %3071 = vrot.lane.b32.xlu0 %v3013, 1
        %v3072 = vpop.permute.xlu0 %3071
        %3073 = vrot.lane.b32.xlu0 %v3014, 1
        %v3074 = vpop.permute.xlu0 %3073
        %3075 = vrot.lane.b32.xlu0 %v3016, 1
        %v3076 = vpop.permute.xlu0 %3075
        %3077 = vrot.lane.b32.xlu0 %v3017, 1
        %v3078 = vpop.permute.xlu0 %3077
        %v3079 = vsel %vm606, %v3072, %v3074
        %v3080 = vsel %vm606, %v3076, %v3078
        %v3083 = vmul.f32 %v3079, %v2321
        %v3084 = vmul.f32 %v3080, %v2321
        %3085 = vst [vmem:[#allocation5 + $0x30] sm:$0xff] %v3083
        %3086 = vst [vmem:[#allocation5 + $0x38] sm:$0xff] %v3084
        %3087 = vst [vmem:[#allocation5 + $0x40] sm:$0xff] %v3014
        %3088 = vst [vmem:[#allocation5 + $0x48] sm:$0xff] %v3017
        %3091 = vrot.lane.b32.xlu0 %v3014, 127
        %v3092 = vpop.permute.xlu0 %3091
        %3093 = vrot.lane.b32.xlu0 %v3015, 127
        %v3094 = vpop.permute.xlu0 %3093
        %3095 = vrot.lane.b32.xlu0 %v3017, 127
        %v3096 = vpop.permute.xlu0 %3095
        %3097 = vrot.lane.b32.xlu0 %v3018, 127
        %v3098 = vpop.permute.xlu0 %3097
        %v3099 = vsel %vm649, %v3092, %v3094
        %v3100 = vsel %vm649, %v3096, %v3098
        %v3103 = vmul.f32 %v3099, %v2344
        %v3104 = vmul.f32 %v3100, %v2344
        %3105 = vst [vmem:[#allocation5 + $0x50] sm:$0xff] %v3103
        %3106 = vst [vmem:[#allocation5 + $0x58] sm:$0xff] %v3104
        %3107 = vrot.lane.b32.xlu0 %v3014, 113
        %v3108 = vpop.permute.xlu0 %3107
        %3109 = vrot.lane.b32.xlu0 %v3015, 113
        %v3110 = vpop.permute.xlu0 %3109
        %3111 = vrot.lane.b32.xlu0 %v3017, 113
        %v3112 = vpop.permute.xlu0 %3111
        %3113 = vrot.lane.b32.xlu0 %v3018, 113
        %v3114 = vpop.permute.xlu0 %3113
        %v3115 = vsel %vm688, %v3108, %v3110
        %v3116 = vsel %vm688, %v3112, %v3114
        %v3119 = vmul.f32 %v3115, %v2363
        %v3120 = vmul.f32 %v3116, %v2363
        %3121 = vst [vmem:[#allocation5 + $0x60] sm:$0xff] %v3119
        %3122 = vst [vmem:[#allocation5 + $0x68] sm:$0xff] %v3120
        %3123 = vrot.lane.b32.xlu0 %v3014, 112
        %v3124 = vpop.permute.xlu0 %3123
        %3125 = vrot.lane.b32.xlu0 %v3015, 112
        %v3126 = vpop.permute.xlu0 %3125
        %3127 = vrot.lane.b32.xlu0 %v3017, 112
        %v3128 = vpop.permute.xlu0 %3127
        %3129 = vrot.lane.b32.xlu0 %v3018, 112
        %v3130 = vpop.permute.xlu0 %3129
        %v3131 = vsel %vm727, %v3124, %v3126
        %v3132 = vsel %vm727, %v3128, %v3130
        %v3135 = vmul.f32 %v3131, %v2382
        %v3136 = vmul.f32 %v3132, %v2382
        %3137 = vst [vmem:[#allocation5 + $0x70] sm:$0xff] %v3135
        %3138 = vst [vmem:[#allocation5 + $0x78] sm:$0xff] %v3136
        %3139 = vrot.lane.b32.xlu0 %v3014, 111
        %v3140 = vpop.permute.xlu0 %3139
        %3141 = vrot.lane.b32.xlu0 %v3015, 111
        %v3142 = vpop.permute.xlu0 %3141
        %3143 = vrot.lane.b32.xlu0 %v3017, 111
        %v3144 = vpop.permute.xlu0 %3143
        %3145 = vrot.lane.b32.xlu0 %v3018, 111
        %v3146 = vpop.permute.xlu0 %3145
        %v3147 = vsel %vm760, %v3140, %v3142
        %v3148 = vsel %vm760, %v3144, %v3146
        %v3151 = vmul.f32 %v3147, %v2401
        %v3152 = vmul.f32 %v3148, %v2401
        %3153 = vst [vmem:[#allocation5 + $0x80] sm:$0xff] %v3151
        %3154 = vst [vmem:[#allocation5 + $0x88] sm:$0xff] %v3152
        %v3155 = vld [vmem:[#allocation13 + $0x40] sm:$0xff]
        %v3156 = vld [vmem:[#allocation13 + $0x48] sm:$0xff]
        %v3157 = vld [vmem:[#allocation13 + $0x50] sm:$0xff]
        %v3158 = vld [vmem:[#allocation13 + $0x58] sm:$0xff]
        %v3159 = vld [vmem:[#allocation5] sm:$0xff]
        %v3160 = vld [vmem:[#allocation5 + $0x8] sm:$0xff]
        %v3161 = vld [vmem:[#allocation5 + $0x10] sm:$0xff]
        %v3162 = vld [vmem:[#allocation5 + $0x18] sm:$0xff]
        %v3163 = vld [vmem:[#allocation5 + $0x20] sm:$0xff]
        %v3164 = vld [vmem:[#allocation5 + $0x28] sm:$0xff]
        %v3165 = vld [vmem:[#allocation5 + $0x30] sm:$0xff]
        %v3166 = vld [vmem:[#allocation5 + $0x38] sm:$0xff]
        %v3167 = vld [vmem:[#allocation5 + $0x40] sm:$0xff]
        %v3168 = vld [vmem:[#allocation5 + $0x48] sm:$0xff]
        %v3169 = vld [vmem:[#allocation5 + $0x50] sm:$0xff]
        %v3170 = vld [vmem:[#allocation5 + $0x58] sm:$0xff]
        %v3171 = vld [vmem:[#allocation5 + $0x60] sm:$0xff]
        %v3172 = vld [vmem:[#allocation5 + $0x68] sm:$0xff]
        %v3173 = vld [vmem:[#allocation5 + $0x70] sm:$0xff]
        %v3174 = vld [vmem:[#allocation5 + $0x78] sm:$0xff]
        %v3175 = vld [vmem:[#allocation5 + $0x80] sm:$0xff]
        %v3176 = vld [vmem:[#allocation5 + $0x88] sm:$0xff]
        %v3178 = vsel %vm527, %v3156, 0
        %v3181 = vsel %vm527, %v3158, 0
        %3183 = vmatpush.msra.mxu0 %v3174
        %3184 = vmatpush.msra.mxu0 %v3173
        %3185 = vmatpush.msra.mxu0 %v3172
        %3186 = vmatpush.msra.mxu0 %v3171
        %3187 = vmatpush.msra.mxu0 %v3170
        %3188 = vmatpush.msra.mxu0 %v3169
        %3189 = vmatpush.msra.mxu0 %v3168
        %3190 = vmatpush.msra.mxu0 %v3167
        %3191 = vmatpush.msra.mxu0 %v3166
        %3192 = vmatpush.msra.mxu0 %v3165
        %3193 = vmatpush.msra.mxu0 %v3164
        %3194 = vmatpush.msra.mxu0 %v3163
        %3195 = vmatpush.msra.mxu0 %v3162
        %3196 = vmatpush.msra.mxu0 %v3161
        %3197 = vmatpush.msra.mxu0 %v3160
        %3198 = vmatpush.msra.mxu0 %v3159
        %3199 = vmatmul.f32.gmra.mxu0 %v3155
        %v3200 = vpop.f32.mrf.mxu0
        %v3201 = vadd.f32 0.0, %v3200
        %3202 = vmatmul.f32.gmra.mxu0 %v3157
        %v3203 = vpop.f32.mrf.mxu0
        %v3204 = vadd.f32 0.0, %v3203
        %3205 = vdwg.mxu0
        %3206 = vmatpush.msra.mxu0 0.0
        %3207 = vmatpush.msra.mxu0 0.0
        %3208 = vmatpush.msra.mxu0 0.0
        %3209 = vmatpush.msra.mxu0 0.0
        %3210 = vmatpush.msra.mxu0 0.0
        %3211 = vmatpush.msra.mxu0 0.0
        %3212 = vmatpush.msra.mxu0 0.0
        %3213 = vmatpush.msra.mxu0 0.0
        %3214 = vmatpush.msra.mxu0 0.0
        %3215 = vmatpush.msra.mxu0 0.0
        %3216 = vmatpush.msra.mxu0 0.0
        %3217 = vmatpush.msra.mxu0 0.0
        %3218 = vmatpush.msra.mxu0 0.0
        %3219 = vmatpush.msra.mxu0 0.0
        %3220 = vmatpush.msra.mxu0 %v3176
        %3221 = vmatpush.msra.mxu0 %v3175
        %3222 = vmatmul.f32.gmra.mxu0 %v3178
        %v3223 = vpop.f32.mrf.mxu0
        %v3224 = vadd.f32 %v3201, %v3223
        %3225 = vmatmul.f32.gmra.mxu0 %v3181
        %v3226 = vpop.f32.mrf.mxu0
        %v3227 = vadd.f32 %v3204, %v3226
        %3228 = vdwg.mxu0
        %v3229 = vadd.f32 %v2520, %v3224
        %v3230 = vadd.f32 %v2523, %v3227
        %v3231 = vld [vmem:[%s9 + $0x20] sm:$0xff]
        %v3232 = vld [vmem:[%s9 + $0x28] sm:$0xff]
        %3234 = vset.pattern.permute.xlu0 0
        %3235 = vperm.xlu0 %3234, %v3231
        %v3236 = vpop.permute.xlu0 %3235
        %3239 = vset.pattern.permute.xlu0 0
        %3240 = vperm.xlu0 %3239, %v3232
        %v3241 = vpop.permute.xlu0 %3240
        %v3243 = vadd.f32 %v3229, %v3236
        %v3244 = vadd.f32 %v3230, %v3241
        %vm3245 = vcmp.ge.f32.partialorder %v3243, 0.0
        %vm3246 = vcmp.ge.f32.partialorder %v3244, 0.0
        %v3247 = vmul.f32 %v3243, 0.2
        %v3248 = vmul.f32 %v3244, 0.2
        %v3249 = vsel %vm3245, %v3243, %v3247
        %v3250 = vsel %vm3246, %v3244, %v3248
        %v3251 = vld [vmem:[#allocation2 + $0x68] sm:$0xff]
        %v3252 = vld [vmem:[#allocation2 + $0x80] sm:$0xff]
        %v3253 = vadd.f32 %v3251, %v3249
        %v3254 = vadd.f32 %v3252, %v3250
        %3255 = vst [vmem:[%s388 + $0x20] sm:$0xff] %v3253
        %3256 = vst [vmem:[%s388 + $0x28] sm:$0xff] %v3254
        %s3257 = sand.u32 %s238, 1
        %s3258 = scalar_lea.sflag [#allocation9], %s3257
        %s3259 = sand.u32 %s238, 1
        %s3260 = smul.addr %s3259, 48
        %s3261 = scalar_lea.vmem [#allocation15], %s3260
        // Predicated region
        $region73: #{tpu_custom_call.1} parent=55 // pred_check
          %p3262 = pneg %p248
        $region74: #{tpu_custom_call.1} parent=55 // pred_check_branch
          %3264 = sbr.rel (%p3262) target = $region76
        $region75: #{tpu_custom_call.1} parent=55 // pred_region
          %3266 = vsyncadd %s3258, 0
          %s3267 = smul.addr %s31, 12
          %s3268 = sadd.s32 %s32, %s3267
          %s3269 = smul.addr %s3268, 8
          %s3270 = scalar_lea.hbm %s10, %s3269
          %s3271 = sshll.u32 %s3261, 4
          %s3272 = int_to_ptr.vmem [resolvable:$true] %s3271
          %s3273 = sshll.u32 %s3270, 4
          %s3274 = int_to_ptr.hbm [resolvable:$true] %s3273
          %3279 = dma.vmem_to_hbm [thread:$0]  %s3272, 768, %s3274, %s3258, 128, 256, 8
        $region76: #{tpu_custom_call.1} parent=55 // pred_fallthru
          _
      $region56: #{tpu_custom_call.1} parent=5 // pred_fallthru
        _
      %p3280 = scmp.le.s32.totalorder 2, %s22
      // Predicated region
      $region77: #{tpu_custom_call.1} parent=5 // pred_check
        %p3281 = pneg %p3280
      $region78: #{tpu_custom_call.1} parent=5 // pred_check_branch
        %3283 = sbr.rel (%p3281) target = $region80
      $region79: #{tpu_custom_call.1} parent=5 // pred_region
        %s3284 = ssub.s32 %s22, 2
        // Predicated region
        $region81: #{tpu_custom_call.1} parent=79 // pred_check
          %p3285 = pneg %p254
        $region82: #{tpu_custom_call.1} parent=79 // pred_check_branch
          %3287 = sbr.rel (%p3285) target = $region84
        $region83: #{tpu_custom_call.1} parent=79 // pred_region
          %s3288 = sand.u32 %s239, 1
          %s3289 = scalar_lea.sflag [#allocation9], %s3288
          %s3290 = sand.u32 %s239, 1
          %s3291 = smul.addr %s3290, 48
          %s3292 = scalar_lea.vmem [#allocation15], %s3291
          %3294 = dma.done %s3289, 768
        $region84: #{tpu_custom_call.1} parent=79 // pred_fallthru
          _
      $region80: #{tpu_custom_call.1} parent=5 // pred_fallthru
        _
    $region6: #{tpu_custom_call.1} parent=1 // loop_footer
      %s26 = sadd.s32 1, %s22
    $region7: #{tpu_custom_call.1} parent=1 // loop_footer_branch
      %21 = sbr.rel target = $region3
    $region8: #{tpu_custom_call.1} parent=1 // loop_exit
      _
    %3295 = vsyncpa [#allocation8], 1
    %s3296 = scalar_lea.sflag [#allocation8], 1
    %3297 = vsyncpa %s3296, 1
    %3298 = vsyncpa [#allocation11], 1
    %3299 = vsyncpa [#allocation14], 1
    %3300 = vsyncpa [#allocation9], 1
    %s3301 = scalar_lea.sflag [#allocation9], 1
    %3302 = vsyncpa %s3301, 1
  %3303 = vsyncmov [#allocation6]
  %s3304 = vpop.sfrf %3303
  %p3305 = scmp.eq.s32.totalorder %s3304, 0
  %p3306 = pneg %p3305
  %3308 = shalt.err (%p3306)

</llo_original>
